<compile_context>
chip_gen: v7x
topology: tpu7x:2x2x1
jax: 0.10.0
libtpu: 0.0.40
codegen_flags: <defaults>
</compile_context>

<pallas_src>
import functools
from typing import NamedTuple, Optional

import numpy as np
import jax
import jax.numpy as jnp
from jax.experimental import pallas as pl
from jax.experimental.pallas import tpu as pltpu


# ------------------------------ small helpers --------------------------------

def _round_up(n, m):
    return ((n + m - 1) // m) * m


def _cdiv(a, b):
    return -(-a // b)


def _default_lane_target():
    """256-lane output packing for the 256x256 MXUs (v6e/v7x), 128 for v5e/older."""
    try:
        kind = jax.devices()[0].device_kind.lower()
    except Exception:
        return 128
    if any(t in kind for t in ("v2", "v3", "v4", "v5")):
        return 128
    return 256


def _choose_groups_per_block(groups, cout_g, cin_g, lane):
    """Smallest divisor of `groups` whose packed output width fills >= `lane`
    output lanes and whose packed contraction width is 128-aligned."""
    if groups == 1:
        return 1
    for d in range(1, groups + 1):
        if groups % d:
            continue
        if d == groups:
            return d
        if d * cout_g >= lane and (d * cin_g) % 128 == 0:
            return d
    return groups


# ----------------------------- Pallas kernel ----------------------------------

def _conv_tap_kernel(x_ref, w_ref, b_ref, o_ref, *, taps, stride, t_rows,
                     negative_slope):
    """One (t_rows, c_tile) output tile of a (grouped) Conv1d.

    x_ref : (win, cin_blk)            overlapping window, win = (t_rows-1)*stride + taps
    w_ref : (taps, cin_blk, c_tile)   packed weight column (VMEM-resident over the N sweep)
    b_ref : (1, c_tile)               float32 bias
    o_ref : (t_rows, c_tile)          written exactly once, in the compute dtype
    """
    acc = None
    for k in range(taps):                              # static unroll of the K taps
        if stride == 1:
            xk = x_ref[pl.ds(k, t_rows), :]
        else:
            xk = x_ref[pl.ds(k, t_rows, stride=stride), :]
        part = jnp.dot(xk, w_ref[k], preferred_element_type=jnp.float32)
        acc = part if acc is None else acc + part
    y = acc + b_ref[...]                               # fused epilogue
    if negative_slope is not None:
        y = jnp.where(y >= 0, y, negative_slope * y)
    o_ref[...] = y.astype(o_ref.dtype)


def pallas_conv(x_win, w_col, b_col, *, taps, stride, t_rows, c_tile,
                negative_slope, out_dtype):
    """x_win: (SG, BN, win, cin_blk); w_col: (SG, taps, cin_blk, cb_p);
    b_col: (SG, 1, cb_p)  ->  (SG, BN*t_rows, cb_p) in out_dtype."""
    SG, BN, win, cin_blk = x_win.shape
    cb_p = w_col.shape[-1]
    # n innermost: the weight/bias block index is constant over n, so the packed
    # weight column stays VMEM-resident for the whole N sweep (no re-streaming).
    grid = (SG, cb_p // c_tile, BN)
    kernel = functools.partial(_conv_tap_kernel, taps=taps, stride=stride,
                               t_rows=t_rows, negative_slope=negative_slope)
    return pl.pallas_call(
        kernel,
        out_shape=jax.ShapeDtypeStruct((SG, BN * t_rows, cb_p), out_dtype),
        grid_spec=pltpu.PrefetchScalarGridSpec(
            num_scalar_prefetch=0,
            grid=grid,
            in_specs=[
                pl.BlockSpec((None, None, win, cin_blk),
                             lambda s, c, n: (s, n, 0, 0)),
                pl.BlockSpec((None, taps, cin_blk, c_tile),
                             lambda s, c, n: (s, 0, 0, c)),
                pl.BlockSpec((None, 1, c_tile),
                             lambda s, c, n: (s, 0, c)),
            ],
            out_specs=pl.BlockSpec((None, t_rows, c_tile),
                                   lambda s, c, n: (s, n, c)),
        ),
        compiler_params=pltpu.CompilerParams(
            dimension_semantics=("parallel", "parallel", "parallel"),
            vmem_limit_bytes=48 * 1024 * 1024),
    )(x_win, w_col, b_col)


# ------------------------------- model config ---------------------------------

class ConvSpec(NamedTuple):
    in_ch: int
    out_ch: int
    kernel: int
    stride: int
    pad: int
    groups: int
    reflect_pad: int   # ReflectionPad1d amount applied before the conv (layer_0)
    leaky: bool        # followed by LeakyReLU(0.2)?


class LayerPlan(NamedTuple):
    fold: bool      # True: K taps folded into the contraction in the wrapper (tiny layers)
    groups: int
    cin_g: int
    cout_g: int
    gb: int         # groups packed per super-group block
    sg: int         # number of super-group blocks
    cin_blk: int    # contraction width fed to the kernel (per super-group, per tap)
    cb: int         # true output width per super-group block
    cb_p: int       # output width padded to a multiple of c_tile
    c_tile: int


def make_plan(spec: ConvSpec, lane: int) -> LayerPlan:
    g = spec.groups
    cin_g = spec.in_ch // g
    cout_g = spec.out_ch // g
    fold = (g == 1 and spec.in_ch * spec.kernel <= 256)
    if fold:
        gb, sg = 1, 1
        cin_blk = _round_up(spec.in_ch * spec.kernel, 128)
        cb = spec.out_ch
    else:
        gb = _choose_groups_per_block(g, cout_g, cin_g, lane)
        sg = g // gb
        cin_blk = gb * cin_g
        cb = gb * cout_g
    c_tile = min(512, _round_up(cb, 128))
    cb_p = _round_up(cb, c_tile)
    return LayerPlan(fold, g, cin_g, cout_g, gb, sg, cin_blk, cb, cb_p, c_tile)


def build_specs(ndf, n_layers, downsampling_factor):
    """Mirror of NLayerDiscriminator.__init__ (conditioning_channels=0)."""
    specs = [ConvSpec(1, ndf, 15, 1, 0, 1, 7, True)]          # layer_0
    nf = ndf
    stride = downsampling_factor
    nf_prev = nf
    for _ in range(1, n_layers + 1):
        nf_prev = nf
        nf = min(nf * stride, 1024)
        specs.append(ConvSpec(nf_prev, nf, stride * 10 + 1, stride,
                              stride * 5, nf_prev // 4, 0, True))
    nf_out = min(nf * 2, 1024)
    # NOTE: the PyTorch module reuses nf_prev here (not updated before the *2),
    # so the module only runs when nf_prev == nf.  Replicated exactly.
    specs.append(ConvSpec(nf_prev, nf_out, 5, 1, 2, 1, 0, True))
    specs.append(ConvSpec(nf_out, 1, 3, 1, 1, 1, 0, False))   # final layer, no act
    return specs


def init_params(specs, key):
    """Deterministic weight_norm-style params: v, g=||v|| -> w = g * v/||v||."""
    params = []
    for s in specs:
        key, k1, k2 = jax.random.split(key, 3)
        in_pg = s.in_ch // s.groups
        v = jax.random.normal(k1, (s.out_ch, in_pg, s.kernel), jnp.float32) * 0.1
        norm = jnp.sqrt(jnp.sum(v * v, axis=(1, 2), keepdims=True))
        g = norm[:, 0, 0]
        w = g[:, None, None] * v / norm
        b = jax.random.normal(k2, (s.out_ch,), jnp.float32) * 0.1
        params.append((w, b))
    return params


# ----------------- weight preprocessing (hoisted out of forward) ---------------

def pack_params(specs, params, compute_dtype, lane):
    """Pack (Cout, Cin/g, K) grouped weights into (SG, taps, cin_blk, cb_p) columns
    (block-diagonal only within a lane-filling super-group).  Done ONCE."""
    packed = []
    for s, (w, b) in zip(specs, params):
        plan = make_plan(s, lane)
        K = s.kernel
        if plan.fold:
            # (O, I, K) -> (K*I, O): tap-major contraction, zero-padded to 128-aligned.
            wf = jnp.transpose(w, (2, 1, 0)).reshape(K * s.in_ch, s.out_ch)
            wf = jnp.pad(wf, ((0, plan.cin_blk - K * s.in_ch),
                              (0, plan.cb_p - plan.cb)))
            w_col = wf.reshape(1, 1, plan.cin_blk, plan.cb_p).astype(compute_dtype)
        else:
            wg = w.reshape(plan.sg, plan.gb, plan.cout_g, plan.cin_g, K)
            eye = jnp.eye(plan.gb, dtype=w.dtype)
            # blk[s,k,h,i,g,o] = w[(s*gb+g), o, i, k] * (g == h)
            blk = jnp.einsum('sgoik,gh->skhigo', wg, eye)
            w_col = blk.reshape(plan.sg, K, plan.cin_blk, plan.cb)
            w_col = jnp.pad(w_col, ((0, 0), (0, 0), (0, 0),
                                    (0, plan.cb_p - plan.cb))).astype(compute_dtype)
        b_col = b.reshape(plan.sg, plan.cb)
        b_col = jnp.pad(b_col, ((0, 0), (0, plan.cb_p - plan.cb)))
        b_col = b_col.reshape(plan.sg, 1, plan.cb_p).astype(jnp.float32)
        packed.append((w_col, b_col))
    return packed


# -------------------------------- forward pass ---------------------------------

def make_forward(specs, compute_dtype=jnp.bfloat16, lane=None, t_cap=1024):
    """Build a jitted forward: (packed_params, x_ncl, feat_ncl) -> [layer outputs (NCL)]."""
    specs = tuple(specs)
    lane = _default_lane_target() if lane is None else lane
    plans = tuple(make_plan(s, lane) for s in specs)

    def forward(packed_params, x_ncl, feat_ncl):
        del feat_ncl  # conditioning_channels=0 (module default) -> feat never touched.
        # TODO(synk): the 'layer_cond' branch (avg_pool1d + channel concat + 3 convs)
        # only exists when conditioning_channels > 0; not built for this config.
        results = []
        h = jnp.transpose(x_ncl, (0, 2, 1))             # internal (B, T, C) layout
        for spec, plan, (w_col, b_col) in zip(specs, plans, packed_params):
            B, T, C = h.shape
            assert C == spec.in_ch
            if spec.reflect_pad:
                h_pad = jnp.pad(h, ((0, 0), (spec.reflect_pad, spec.reflect_pad), (0, 0)),
                                mode='reflect')
            else:
                h_pad = jnp.pad(h, ((0, 0), (spec.pad, spec.pad), (0, 0)))
            K, stride = spec.kernel, spec.stride
            T_out = (h_pad.shape[1] - K) // stride + 1

            if plan.fold:
                # Tiny layers (in_ch*K <= 256, e.g. layer_0 with Cin=1): fold the K
                # taps into the contraction; duplication is negligible here.
                taps = [h_pad[:, k: k + stride * (T_out - 1) + 1: stride, :]
                        for k in range(K)]
                src = jnp.stack(taps, axis=2).reshape(B, T_out, K * C)
                src = jnp.pad(src, ((0, 0), (0, 0), (0, plan.cin_blk - K * C)))
                taps_eff, stride_eff = 1, 1
            else:
                # Big layers: NO im2col duplication — the kernel does the K taps as
                # shifted sub-matmuls over a (slightly overlapping) input window.
                src = h_pad
                taps_eff, stride_eff = K, stride

            # split channels into super-group blocks (leading dim); free when sg == 1
            T_src = src.shape[1]
            if plan.sg > 1:
                src = src.reshape(B, T_src, plan.sg, plan.cin_blk)
                src = jnp.transpose(src, (2, 0, 1, 3))
            else:
                src = src.reshape(1, B, T_src, plan.cin_blk)

            ov = taps_eff - stride_eff                  # overlap rows between tiles
            t_rows = _round_up(min(T_out, t_cap), 16)   # 16: bf16 sublane-pack friendly
            t_rows = max(t_rows, _round_up(max(ov, 1), 16))
            num_tiles = _cdiv(T_out, t_rows)
            tts = t_rows * stride_eff
            src = jnp.pad(src, ((0, 0), (0, 0),
                                (0, (num_tiles + 1) * tts - T_src), (0, 0)))
            main = src[:, :, :num_tiles * tts, :].reshape(
                plan.sg, B, num_tiles, tts, plan.cin_blk)
            if ov > 0:
                shift = src[:, :, tts:(num_tiles + 1) * tts, :].reshape(
                    plan.sg, B, num_tiles, tts, plan.cin_blk)
                x_win = jnp.concatenate([main, shift[:, :, :, :ov, :]], axis=3)
            else:
                x_win = main
            win = tts + ov
            x_win = x_win.reshape(plan.sg, B * num_tiles, win,
                                  plan.cin_blk).astype(compute_dtype)

            out = pallas_conv(
                x_win, w_col, b_col,
                taps=taps_eff, stride=stride_eff, t_rows=t_rows,
                c_tile=plan.c_tile,
                negative_slope=0.2 if spec.leaky else None,
                out_dtype=compute_dtype)

            out = out.reshape(plan.sg, B, num_tiles * t_rows, plan.cb_p)
            out = out[:, :, :T_out, :plan.cb]           # strip row / lane padding
            if plan.sg > 1:
                out = jnp.transpose(out, (1, 2, 0, 3)).reshape(B, T_out, spec.out_ch)
            else:
                out = out.reshape(B, T_out, spec.out_ch)
            # Module semantics: the feature list is returned in (N, C, L) like PyTorch.
            results.append(jnp.transpose(out, (0, 2, 1)))
            h = out                                      # next layer consumes (B,T,C), no cast
        return results

    return jax.jit(forward)


# --------------------------- pure-JAX reference check ---------------------------

def reference_forward(x_ncl, specs, params):
    results = []
    h = x_ncl
    for s, (w, b) in zip(specs, params):
        if s.reflect_pad:
            h = jnp.pad(h, ((0, 0), (0, 0), (s.reflect_pad, s.reflect_pad)),
                        mode='reflect')
            pad = 0
        else:
            pad = s.pad
        out = jax.lax.conv_general_dilated(
            h, w, window_strides=(s.stride,), padding=[(pad, pad)],
            dimension_numbers=('NCH', 'OIH', 'NCH'),
            feature_group_count=s.groups)
        out = out + b[None, :, None]
        if s.leaky:
            out = jnp.where(out >= 0, out, 0.2 * out)
        h = out
        results.append(h)
    return results


# ------------------------------------ main --------------------------------------

if __name__ == "__main__":
    # Small config.  Because the reference __init__ forgets to update nf_prev before
    # the penultimate conv, the module only runs when nf_prev == nf; with
    # downsampling_factor=1 the channel counts stay consistent at small sizes.
    ndf, n_layers, downsampling_factor = 16, 3, 1
    specs = build_specs(ndf, n_layers, downsampling_factor)
    for a, nxt in zip(specs[:-1], specs[1:]):
        assert a.out_ch == nxt.in_ch

    key = jax.random.PRNGKey(0)
    key, kx, kf = jax.random.split(key, 3)
    x = jax.random.normal(kx, (2, 1, 64), jnp.float32)       # (B, 1, T) raw audio
    feat = jax.random.normal(kf, (2, 8, 128), jnp.float32)   # unused (cond_ch = 0)
    params = init_params(specs, key)

    refs = reference_forward(x, specs, params)
    lane = _default_lane_target()

    # --- f32 path: tight numerical validation of the kernel/tiling itself -------
    packed_f32 = pack_params(specs, params, jnp.float32, lane)
    fwd_f32 = make_forward(specs, compute_dtype=jnp.float32, lane=lane)
    outs_f32 = jax.block_until_ready(fwd_f32(packed_f32, x, feat))
    for o, r in zip(outs_f32, refs):
        assert o.shape == r.shape, (o.shape, r.shape)
        np.testing.assert_allclose(np.asarray(o), np.asarray(r),
                                   rtol=5e-4, atol=5e-4)

    # --- bf16 path: performance configuration (bf16 MXU inputs, f32 accumulate) -
    packed_bf16 = pack_params(specs, params, jnp.bfloat16, lane)
    fwd_bf16 = make_forward(specs, compute_dtype=jnp.bfloat16, lane=lane)
    outs_bf16 = jax.block_until_ready(fwd_bf16(packed_bf16, x, feat))
    for o, r in zip(outs_bf16, refs):
        assert o.shape == r.shape, (o.shape, r.shape)
        np.testing.assert_allclose(np.asarray(o.astype(jnp.float32)), np.asarray(r),
                                   rtol=1e-1, atol=5e-2)

    print("KERNEL_OK")
</pallas_src>

<mosaic_0001>
module attributes {stable_mosaic.version = 11 : i64} {
  func.func @_conv_tap_kernel(%arg0: i32, %arg1: i32, %arg2: i32, %arg3: memref<1x1x74x16xf32, #tpu.memory_space<vmem>>, %arg4: memref<1x11x16x128xf32, #tpu.memory_space<vmem>>, %arg5: memref<1x1x128xf32, #tpu.memory_space<vmem>>, %arg6: memref<1x64x128xf32, #tpu.memory_space<vmem>>) attributes {dimension_semantics = [#tpu.dimension_semantics<parallel>, #tpu.dimension_semantics<parallel>, #tpu.dimension_semantics<parallel>], iteration_bounds = array<i64: 1, 1, 2>, scalar_prefetch = 0 : i64, scratch_operands = 0 : i64, tpu.core_type = #tpu.core_type<tc>, window_params = [{transform_indices = @transform_0, window_bounds = array<i64: 1, 1, 74, 16>}, {transform_indices = @transform_1, window_bounds = array<i64: 1, 11, 16, 128>}, {transform_indices = @transform_2, window_bounds = array<i64: 1, 1, 128>}, {transform_indices = @transform_3, window_bounds = array<i64: 1, 64, 128>}]} {
    %c0 = arith.constant 0 : index
    %c0_0 = arith.constant 0 : index
    %c0_1 = arith.constant 0 : index
    %c0_2 = arith.constant 0 : index
    %0 = vector.load %arg3[%c0, %c0_0, %c0_1, %c0_2] : memref<1x1x74x16xf32, #tpu.memory_space<vmem>>, vector<1x1x64x16xf32>
    %1 = vector.shape_cast %0 : vector<1x1x64x16xf32> to vector<64x16xf32>
    %c0_3 = arith.constant 0 : index
    %c0_4 = arith.constant 0 : index
    %c0_5 = arith.constant 0 : index
    %c0_6 = arith.constant 0 : index
    %2 = vector.load %arg4[%c0_3, %c0_4, %c0_5, %c0_6] : memref<1x11x16x128xf32, #tpu.memory_space<vmem>>, vector<1x1x16x128xf32>
    %3 = vector.shape_cast %2 : vector<1x1x16x128xf32> to vector<16x128xf32>
    %cst = arith.constant dense<0.000000e+00> : vector<64x128xf32>
    %4 = tpu.matmul %1, %3, %cst {dimension_numbers = #tpu.dot_dimension_numbers<[1], [0], [0], [1], [0, 0, 1, 1], [], []>} : vector<64x16xf32>, vector<16x128xf32>, vector<64x128xf32> -> vector<64x128xf32>
    %c0_7 = arith.constant 0 : index
    %c0_8 = arith.constant 0 : index
    %c1 = arith.constant 1 : index
    %c0_9 = arith.constant 0 : index
    %5 = vector.load %arg3[%c0_7, %c0_8, %c1, %c0_9] : memref<1x1x74x16xf32, #tpu.memory_space<vmem>>, vector<1x1x64x16xf32>
    %6 = vector.shape_cast %5 : vector<1x1x64x16xf32> to vector<64x16xf32>
    %c0_10 = arith.constant 0 : index
    %c1_11 = arith.constant 1 : index
    %c0_12 = arith.constant 0 : index
    %c0_13 = arith.constant 0 : index
    %7 = vector.load %arg4[%c0_10, %c1_11, %c0_12, %c0_13] : memref<1x11x16x128xf32, #tpu.memory_space<vmem>>, vector<1x1x16x128xf32>
    %8 = vector.shape_cast %7 : vector<1x1x16x128xf32> to vector<16x128xf32>
    %cst_14 = arith.constant dense<0.000000e+00> : vector<64x128xf32>
    %9 = tpu.matmul %6, %8, %cst_14 {dimension_numbers = #tpu.dot_dimension_numbers<[1], [0], [0], [1], [0, 0, 1, 1], [], []>} : vector<64x16xf32>, vector<16x128xf32>, vector<64x128xf32> -> vector<64x128xf32>
    %10 = arith.addf %4, %9 : vector<64x128xf32>
    %c0_15 = arith.constant 0 : index
    %c0_16 = arith.constant 0 : index
    %c2 = arith.constant 2 : index
    %c0_17 = arith.constant 0 : index
    %11 = vector.load %arg3[%c0_15, %c0_16, %c2, %c0_17] : memref<1x1x74x16xf32, #tpu.memory_space<vmem>>, vector<1x1x64x16xf32>
    %12 = vector.shape_cast %11 : vector<1x1x64x16xf32> to vector<64x16xf32>
    %c0_18 = arith.constant 0 : index
    %c2_19 = arith.constant 2 : index
    %c0_20 = arith.constant 0 : index
    %c0_21 = arith.constant 0 : index
    %13 = vector.load %arg4[%c0_18, %c2_19, %c0_20, %c0_21] : memref<1x11x16x128xf32, #tpu.memory_space<vmem>>, vector<1x1x16x128xf32>
    %14 = vector.shape_cast %13 : vector<1x1x16x128xf32> to vector<16x128xf32>
    %cst_22 = arith.constant dense<0.000000e+00> : vector<64x128xf32>
    %15 = tpu.matmul %12, %14, %cst_22 {dimension_numbers = #tpu.dot_dimension_numbers<[1], [0], [0], [1], [0, 0, 1, 1], [], []>} : vector<64x16xf32>, vector<16x128xf32>, vector<64x128xf32> -> vector<64x128xf32>
    %16 = arith.addf %10, %15 : vector<64x128xf32>
    %c0_23 = arith.constant 0 : index
    %c0_24 = arith.constant 0 : index
    %c3 = arith.constant 3 : index
    %c0_25 = arith.constant 0 : index
    %17 = vector.load %arg3[%c0_23, %c0_24, %c3, %c0_25] : memref<1x1x74x16xf32, #tpu.memory_space<vmem>>, vector<1x1x64x16xf32>
    %18 = vector.shape_cast %17 : vector<1x1x64x16xf32> to vector<64x16xf32>
    %c0_26 = arith.constant 0 : index
    %c3_27 = arith.constant 3 : index
    %c0_28 = arith.constant 0 : index
    %c0_29 = arith.constant 0 : index
    %19 = vector.load %arg4[%c0_26, %c3_27, %c0_28, %c0_29] : memref<1x11x16x128xf32, #tpu.memory_space<vmem>>, vector<1x1x16x128xf32>
    %20 = vector.shape_cast %19 : vector<1x1x16x128xf32> to vector<16x128xf32>
    %cst_30 = arith.constant dense<0.000000e+00> : vector<64x128xf32>
    %21 = tpu.matmul %18, %20, %cst_30 {dimension_numbers = #tpu.dot_dimension_numbers<[1], [0], [0], [1], [0, 0, 1, 1], [], []>} : vector<64x16xf32>, vector<16x128xf32>, vector<64x128xf32> -> vector<64x128xf32>
    %22 = arith.addf %16, %21 : vector<64x128xf32>
    %c0_31 = arith.constant 0 : index
    %c0_32 = arith.constant 0 : index
    %c4 = arith.constant 4 : index
    %c0_33 = arith.constant 0 : index
    %23 = vector.load %arg3[%c0_31, %c0_32, %c4, %c0_33] : memref<1x1x74x16xf32, #tpu.memory_space<vmem>>, vector<1x1x64x16xf32>
    %24 = vector.shape_cast %23 : vector<1x1x64x16xf32> to vector<64x16xf32>
    %c0_34 = arith.constant 0 : index
    %c4_35 = arith.constant 4 : index
    %c0_36 = arith.constant 0 : index
    %c0_37 = arith.constant 0 : index
    %25 = vector.load %arg4[%c0_34, %c4_35, %c0_36, %c0_37] : memref<1x11x16x128xf32, #tpu.memory_space<vmem>>, vector<1x1x16x128xf32>
    %26 = vector.shape_cast %25 : vector<1x1x16x128xf32> to vector<16x128xf32>
    %cst_38 = arith.constant dense<0.000000e+00> : vector<64x128xf32>
    %27 = tpu.matmul %24, %26, %cst_38 {dimension_numbers = #tpu.dot_dimension_numbers<[1], [0], [0], [1], [0, 0, 1, 1], [], []>} : vector<64x16xf32>, vector<16x128xf32>, vector<64x128xf32> -> vector<64x128xf32>
    %28 = arith.addf %22, %27 : vector<64x128xf32>
    %c0_39 = arith.constant 0 : index
    %c0_40 = arith.constant 0 : index
    %c5 = arith.constant 5 : index
    %c0_41 = arith.constant 0 : index
    %29 = vector.load %arg3[%c0_39, %c0_40, %c5, %c0_41] : memref<1x1x74x16xf32, #tpu.memory_space<vmem>>, vector<1x1x64x16xf32>
    %30 = vector.shape_cast %29 : vector<1x1x64x16xf32> to vector<64x16xf32>
    %c0_42 = arith.constant 0 : index
    %c5_43 = arith.constant 5 : index
    %c0_44 = arith.constant 0 : index
    %c0_45 = arith.constant 0 : index
    %31 = vector.load %arg4[%c0_42, %c5_43, %c0_44, %c0_45] : memref<1x11x16x128xf32, #tpu.memory_space<vmem>>, vector<1x1x16x128xf32>
    %32 = vector.shape_cast %31 : vector<1x1x16x128xf32> to vector<16x128xf32>
    %cst_46 = arith.constant dense<0.000000e+00> : vector<64x128xf32>
    %33 = tpu.matmul %30, %32, %cst_46 {dimension_numbers = #tpu.dot_dimension_numbers<[1], [0], [0], [1], [0, 0, 1, 1], [], []>} : vector<64x16xf32>, vector<16x128xf32>, vector<64x128xf32> -> vector<64x128xf32>
    %34 = arith.addf %28, %33 : vector<64x128xf32>
    %c0_47 = arith.constant 0 : index
    %c0_48 = arith.constant 0 : index
    %c6 = arith.constant 6 : index
    %c0_49 = arith.constant 0 : index
    %35 = vector.load %arg3[%c0_47, %c0_48, %c6, %c0_49] : memref<1x1x74x16xf32, #tpu.memory_space<vmem>>, vector<1x1x64x16xf32>
    %36 = vector.shape_cast %35 : vector<1x1x64x16xf32> to vector<64x16xf32>
    %c0_50 = arith.constant 0 : index
    %c6_51 = arith.constant 6 : index
    %c0_52 = arith.constant 0 : index
    %c0_53 = arith.constant 0 : index
    %37 = vector.load %arg4[%c0_50, %c6_51, %c0_52, %c0_53] : memref<1x11x16x128xf32, #tpu.memory_space<vmem>>, vector<1x1x16x128xf32>
    %38 = vector.shape_cast %37 : vector<1x1x16x128xf32> to vector<16x128xf32>
    %cst_54 = arith.constant dense<0.000000e+00> : vector<64x128xf32>
    %39 = tpu.matmul %36, %38, %cst_54 {dimension_numbers = #tpu.dot_dimension_numbers<[1], [0], [0], [1], [0, 0, 1, 1], [], []>} : vector<64x16xf32>, vector<16x128xf32>, vector<64x128xf32> -> vector<64x128xf32>
    %40 = arith.addf %34, %39 : vector<64x128xf32>
    %c0_55 = arith.constant 0 : index
    %c0_56 = arith.constant 0 : index
    %c7 = arith.constant 7 : index
    %c0_57 = arith.constant 0 : index
    %41 = vector.load %arg3[%c0_55, %c0_56, %c7, %c0_57] : memref<1x1x74x16xf32, #tpu.memory_space<vmem>>, vector<1x1x64x16xf32>
    %42 = vector.shape_cast %41 : vector<1x1x64x16xf32> to vector<64x16xf32>
    %c0_58 = arith.constant 0 : index
    %c7_59 = arith.constant 7 : index
    %c0_60 = arith.constant 0 : index
    %c0_61 = arith.constant 0 : index
    %43 = vector.load %arg4[%c0_58, %c7_59, %c0_60, %c0_61] : memref<1x11x16x128xf32, #tpu.memory_space<vmem>>, vector<1x1x16x128xf32>
    %44 = vector.shape_cast %43 : vector<1x1x16x128xf32> to vector<16x128xf32>
    %cst_62 = arith.constant dense<0.000000e+00> : vector<64x128xf32>
    %45 = tpu.matmul %42, %44, %cst_62 {dimension_numbers = #tpu.dot_dimension_numbers<[1], [0], [0], [1], [0, 0, 1, 1], [], []>} : vector<64x16xf32>, vector<16x128xf32>, vector<64x128xf32> -> vector<64x128xf32>
    %46 = arith.addf %40, %45 : vector<64x128xf32>
    %c0_63 = arith.constant 0 : index
    %c0_64 = arith.constant 0 : index
    %c8 = arith.constant 8 : index
    %c0_65 = arith.constant 0 : index
    %47 = vector.load %arg3[%c0_63, %c0_64, %c8, %c0_65] : memref<1x1x74x16xf32, #tpu.memory_space<vmem>>, vector<1x1x64x16xf32>
    %48 = vector.shape_cast %47 : vector<1x1x64x16xf32> to vector<64x16xf32>
    %c0_66 = arith.constant 0 : index
    %c8_67 = arith.constant 8 : index
    %c0_68 = arith.constant 0 : index
    %c0_69 = arith.constant 0 : index
    %49 = vector.load %arg4[%c0_66, %c8_67, %c0_68, %c0_69] : memref<1x11x16x128xf32, #tpu.memory_space<vmem>>, vector<1x1x16x128xf32>
    %50 = vector.shape_cast %49 : vector<1x1x16x128xf32> to vector<16x128xf32>
    %cst_70 = arith.constant dense<0.000000e+00> : vector<64x128xf32>
    %51 = tpu.matmul %48, %50, %cst_70 {dimension_numbers = #tpu.dot_dimension_numbers<[1], [0], [0], [1], [0, 0, 1, 1], [], []>} : vector<64x16xf32>, vector<16x128xf32>, vector<64x128xf32> -> vector<64x128xf32>
    %52 = arith.addf %46, %51 : vector<64x128xf32>
    %c0_71 = arith.constant 0 : index
    %c0_72 = arith.constant 0 : index
    %c9 = arith.constant 9 : index
    %c0_73 = arith.constant 0 : index
    %53 = vector.load %arg3[%c0_71, %c0_72, %c9, %c0_73] : memref<1x1x74x16xf32, #tpu.memory_space<vmem>>, vector<1x1x64x16xf32>
    %54 = vector.shape_cast %53 : vector<1x1x64x16xf32> to vector<64x16xf32>
    %c0_74 = arith.constant 0 : index
    %c9_75 = arith.constant 9 : index
    %c0_76 = arith.constant 0 : index
    %c0_77 = arith.constant 0 : index
    %55 = vector.load %arg4[%c0_74, %c9_75, %c0_76, %c0_77] : memref<1x11x16x128xf32, #tpu.memory_space<vmem>>, vector<1x1x16x128xf32>
    %56 = vector.shape_cast %55 : vector<1x1x16x128xf32> to vector<16x128xf32>
    %cst_78 = arith.constant dense<0.000000e+00> : vector<64x128xf32>
    %57 = tpu.matmul %54, %56, %cst_78 {dimension_numbers = #tpu.dot_dimension_numbers<[1], [0], [0], [1], [0, 0, 1, 1], [], []>} : vector<64x16xf32>, vector<16x128xf32>, vector<64x128xf32> -> vector<64x128xf32>
    %58 = arith.addf %52, %57 : vector<64x128xf32>
    %c0_79 = arith.constant 0 : index
    %c0_80 = arith.constant 0 : index
    %c10 = arith.constant 10 : index
    %c0_81 = arith.constant 0 : index
    %59 = vector.load %arg3[%c0_79, %c0_80, %c10, %c0_81] : memref<1x1x74x16xf32, #tpu.memory_space<vmem>>, vector<1x1x64x16xf32>
    %60 = vector.shape_cast %59 : vector<1x1x64x16xf32> to vector<64x16xf32>
    %c0_82 = arith.constant 0 : index
    %c10_83 = arith.constant 10 : index
    %c0_84 = arith.constant 0 : index
    %c0_85 = arith.constant 0 : index
    %61 = vector.load %arg4[%c0_82, %c10_83, %c0_84, %c0_85] : memref<1x11x16x128xf32, #tpu.memory_space<vmem>>, vector<1x1x16x128xf32>
    %62 = vector.shape_cast %61 : vector<1x1x16x128xf32> to vector<16x128xf32>
    %cst_86 = arith.constant dense<0.000000e+00> : vector<64x128xf32>
    %63 = tpu.matmul %60, %62, %cst_86 {dimension_numbers = #tpu.dot_dimension_numbers<[1], [0], [0], [1], [0, 0, 1, 1], [], []>} : vector<64x16xf32>, vector<16x128xf32>, vector<64x128xf32> -> vector<64x128xf32>
    %64 = arith.addf %58, %63 : vector<64x128xf32>
    %c0_87 = arith.constant 0 : index
    %c0_88 = arith.constant 0 : index
    %c0_89 = arith.constant 0 : index
    %65 = vector.load %arg5[%c0_87, %c0_88, %c0_89] : memref<1x1x128xf32, #tpu.memory_space<vmem>>, vector<1x1x128xf32>
    %66 = vector.shape_cast %65 : vector<1x1x128xf32> to vector<1x128xf32>
    %67 = vector.broadcast %66 : vector<1x128xf32> to vector<64x128xf32>
    %68 = arith.addf %64, %67 : vector<64x128xf32>
    %cst_90 = arith.constant 0.000000e+00 : f32
    %69 = vector.broadcast %cst_90 : f32 to vector<64x128xf32>
    %70 = arith.cmpf oge, %68, %69 : vector<64x128xf32>
    %cst_91 = arith.constant 2.000000e-01 : f32
    %71 = vector.broadcast %cst_91 : f32 to vector<64x128xf32>
    %72 = arith.mulf %71, %68 : vector<64x128xf32>
    %73 = arith.select %70, %68, %72 : vector<64x128xi1>, vector<64x128xf32>
    %c0_92 = arith.constant 0 : index
    %c0_93 = arith.constant 0 : index
    %c0_94 = arith.constant 0 : index
    %74 = vector.load %arg6[%c0_92, %c0_93, %c0_94] : memref<1x64x128xf32, #tpu.memory_space<vmem>>, vector<1x64x128xf32>
    %75 = vector.shape_cast %74 : vector<1x64x128xf32> to vector<64x128xf32>
    %76 = vector.shape_cast %73 : vector<64x128xf32> to vector<1x64x128xf32>
    tpu.vector_store %arg6[%c0_92, %c0_93, %c0_94], %76 {strides = array<i32>} : memref<1x64x128xf32, #tpu.memory_space<vmem>>, vector<1x64x128xf32>,
    return
  }
  func.func @transform_0(%arg0: i32, %arg1: i32, %arg2: i32) -> (i32, i32, i32, i32) {
    %c0_i32 = arith.constant 0 : i32
    %c0_i32_0 = arith.constant 0 : i32
    %c0_i32_1 = arith.constant 0 : i32
    return %arg0, %arg2, %c0_i32, %c0_i32_0 : i32, i32, i32, i32
  }
  func.func @transform_1(%arg0: i32, %arg1: i32, %arg2: i32) -> (i32, i32, i32, i32) {
    %c0_i32 = arith.constant 0 : i32
    %c0_i32_0 = arith.constant 0 : i32
    %c0_i32_1 = arith.constant 0 : i32
    return %arg0, %c0_i32, %c0_i32_0, %arg1 : i32, i32, i32, i32
  }
  func.func @transform_2(%arg0: i32, %arg1: i32, %arg2: i32) -> (i32, i32, i32) {
    %c0_i32 = arith.constant 0 : i32
    %c0_i32_0 = arith.constant 0 : i32
    return %arg0, %c0_i32, %arg1 : i32, i32, i32
  }
  func.func @transform_3(%arg0: i32, %arg1: i32, %arg2: i32) -> (i32, i32, i32) {
    %c0_i32 = arith.constant 0 : i32
    return %arg0, %arg2, %arg1 : i32, i32, i32
  }
}

module attributes {stable_mosaic.version = 11 : i64} {
  func.func @_conv_tap_kernel(%arg0: i32, %arg1: i32, %arg2: i32, %arg3: memref<1x1x64x128xf32, #tpu.memory_space<vmem>>, %arg4: memref<1x1x128x128xf32, #tpu.memory_space<vmem>>, %arg5: memref<1x1x128xf32, #tpu.memory_space<vmem>>, %arg6: memref<1x64x128xf32, #tpu.memory_space<vmem>>) attributes {dimension_semantics = [#tpu.dimension_semantics<parallel>, #tpu.dimension_semantics<parallel>, #tpu.dimension_semantics<parallel>], iteration_bounds = array<i64: 1, 1, 2>, scalar_prefetch = 0 : i64, scratch_operands = 0 : i64, tpu.core_type = #tpu.core_type<tc>, window_params = [{transform_indices = @transform_0, window_bounds = array<i64: 1, 1, 64, 128>}, {transform_indices = @transform_1, window_bounds = array<i64: 1, 1, 128, 128>}, {transform_indices = @transform_2, window_bounds = array<i64: 1, 1, 128>}, {transform_indices = @transform_3, window_bounds = array<i64: 1, 64, 128>}]} {
    %c0 = arith.constant 0 : index
    %c0_0 = arith.constant 0 : index
    %c0_1 = arith.constant 0 : index
    %c0_2 = arith.constant 0 : index
    %0 = vector.load %arg3[%c0, %c0_0, %c0_1, %c0_2] : memref<1x1x64x128xf32, #tpu.memory_space<vmem>>, vector<1x1x64x128xf32>
    %1 = vector.shape_cast %0 : vector<1x1x64x128xf32> to vector<64x128xf32>
    %c0_3 = arith.constant 0 : index
    %c0_4 = arith.constant 0 : index
    %c0_5 = arith.constant 0 : index
    %c0_6 = arith.constant 0 : index
    %2 = vector.load %arg4[%c0_3, %c0_4, %c0_5, %c0_6] : memref<1x1x128x128xf32, #tpu.memory_space<vmem>>, vector<1x1x128x128xf32>
    %3 = vector.shape_cast %2 : vector<1x1x128x128xf32> to vector<128x128xf32>
    %cst = arith.constant dense<0.000000e+00> : vector<64x128xf32>
    %4 = tpu.matmul %1, %3, %cst {dimension_numbers = #tpu.dot_dimension_numbers<[1], [0], [0], [1], [0, 0, 1, 1], [], []>} : vector<64x128xf32>, vector<128x128xf32>, vector<64x128xf32> -> vector<64x128xf32>
    %c0_7 = arith.constant 0 : index
    %c0_8 = arith.constant 0 : index
    %c0_9 = arith.constant 0 : index
    %5 = vector.load %arg5[%c0_7, %c0_8, %c0_9] : memref<1x1x128xf32, #tpu.memory_space<vmem>>, vector<1x1x128xf32>
    %6 = vector.shape_cast %5 : vector<1x1x128xf32> to vector<1x128xf32>
    %7 = vector.broadcast %6 : vector<1x128xf32> to vector<64x128xf32>
    %8 = arith.addf %4, %7 : vector<64x128xf32>
    %cst_10 = arith.constant 0.000000e+00 : f32
    %9 = vector.broadcast %cst_10 : f32 to vector<64x128xf32>
    %10 = arith.cmpf oge, %8, %9 : vector<64x128xf32>
    %cst_11 = arith.constant 2.000000e-01 : f32
    %11 = vector.broadcast %cst_11 : f32 to vector<64x128xf32>
    %12 = arith.mulf %11, %8 : vector<64x128xf32>
    %13 = arith.select %10, %8, %12 : vector<64x128xi1>, vector<64x128xf32>
    %c0_12 = arith.constant 0 : index
    %c0_13 = arith.constant 0 : index
    %c0_14 = arith.constant 0 : index
    %14 = vector.load %arg6[%c0_12, %c0_13, %c0_14] : memref<1x64x128xf32, #tpu.memory_space<vmem>>, vector<1x64x128xf32>
    %15 = vector.shape_cast %14 : vector<1x64x128xf32> to vector<64x128xf32>
    %16 = vector.shape_cast %13 : vector<64x128xf32> to vector<1x64x128xf32>
    tpu.vector_store %arg6[%c0_12, %c0_13, %c0_14], %16 {strides = array<i32>} : memref<1x64x128xf32, #tpu.memory_space<vmem>>, vector<1x64x128xf32>,
    return
  }
  func.func @transform_0(%arg0: i32, %arg1: i32, %arg2: i32) -> (i32, i32, i32, i32) {
    %c0_i32 = arith.constant 0 : i32
    %c0_i32_0 = arith.constant 0 : i32
    %c0_i32_1 = arith.constant 0 : i32
    return %arg0, %arg2, %c0_i32, %c0_i32_0 : i32, i32, i32, i32
  }
  func.func @transform_1(%arg0: i32, %arg1: i32, %arg2: i32) -> (i32, i32, i32, i32) {
    %c0_i32 = arith.constant 0 : i32
    %c0_i32_0 = arith.constant 0 : i32
    %c0_i32_1 = arith.constant 0 : i32
    return %arg0, %c0_i32, %c0_i32_0, %arg1 : i32, i32, i32, i32
  }
  func.func @transform_2(%arg0: i32, %arg1: i32, %arg2: i32) -> (i32, i32, i32) {
    %c0_i32 = arith.constant 0 : i32
    %c0_i32_0 = arith.constant 0 : i32
    return %arg0, %c0_i32, %arg1 : i32, i32, i32
  }
  func.func @transform_3(%arg0: i32, %arg1: i32, %arg2: i32) -> (i32, i32, i32) {
    %c0_i32 = arith.constant 0 : i32
    return %arg0, %arg2, %arg1 : i32, i32, i32
  }
}

module attributes {stable_mosaic.version = 11 : i64} {
  func.func @_conv_tap_kernel(%arg0: i32, %arg1: i32, %arg2: i32, %arg3: memref<1x1x64x128xf32, #tpu.memory_space<vmem>>, %arg4: memref<1x1x128x128xf32, #tpu.memory_space<vmem>>, %arg5: memref<1x1x128xf32, #tpu.memory_space<vmem>>, %arg6: memref<1x64x128xf32, #tpu.memory_space<vmem>>) attributes {dimension_semantics = [#tpu.dimension_semantics<parallel>, #tpu.dimension_semantics<parallel>, #tpu.dimension_semantics<parallel>], iteration_bounds = array<i64: 1, 1, 2>, scalar_prefetch = 0 : i64, scratch_operands = 0 : i64, tpu.core_type = #tpu.core_type<tc>, window_params = [{transform_indices = @transform_0, window_bounds = array<i64: 1, 1, 64, 128>}, {transform_indices = @transform_1, window_bounds = array<i64: 1, 1, 128, 128>}, {transform_indices = @transform_2, window_bounds = array<i64: 1, 1, 128>}, {transform_indices = @transform_3, window_bounds = array<i64: 1, 64, 128>}]} {
    %c0 = arith.constant 0 : index
    %c0_0 = arith.constant 0 : index
    %c0_1 = arith.constant 0 : index
    %c0_2 = arith.constant 0 : index
    %0 = vector.load %arg3[%c0, %c0_0, %c0_1, %c0_2] : memref<1x1x64x128xf32, #tpu.memory_space<vmem>>, vector<1x1x64x128xf32>
    %1 = vector.shape_cast %0 : vector<1x1x64x128xf32> to vector<64x128xf32>
    %c0_3 = arith.constant 0 : index
    %c0_4 = arith.constant 0 : index
    %c0_5 = arith.constant 0 : index
    %c0_6 = arith.constant 0 : index
    %2 = vector.load %arg4[%c0_3, %c0_4, %c0_5, %c0_6] : memref<1x1x128x128xf32, #tpu.memory_space<vmem>>, vector<1x1x128x128xf32>
    %3 = vector.shape_cast %2 : vector<1x1x128x128xf32> to vector<128x128xf32>
    %cst = arith.constant dense<0.000000e+00> : vector<64x128xf32>
    %4 = tpu.matmul %1, %3, %cst {dimension_numbers = #tpu.dot_dimension_numbers<[1], [0], [0], [1], [0, 0, 1, 1], [], []>} : vector<64x128xf32>, vector<128x128xf32>, vector<64x128xf32> -> vector<64x128xf32>
    %c0_7 = arith.constant 0 : index
    %c0_8 = arith.constant 0 : index
    %c0_9 = arith.constant 0 : index
    %5 = vector.load %arg5[%c0_7, %c0_8, %c0_9] : memref<1x1x128xf32, #tpu.memory_space<vmem>>, vector<1x1x128xf32>
    %6 = vector.shape_cast %5 : vector<1x1x128xf32> to vector<1x128xf32>
    %7 = vector.broadcast %6 : vector<1x128xf32> to vector<64x128xf32>
    %8 = arith.addf %4, %7 : vector<64x128xf32>
    %c0_10 = arith.constant 0 : index
    %c0_11 = arith.constant 0 : index
    %c0_12 = arith.constant 0 : index
    %9 = vector.load %arg6[%c0_10, %c0_11, %c0_12] : memref<1x64x128xf32, #tpu.memory_space<vmem>>, vector<1x64x128xf32>
    %10 = vector.shape_cast %9 : vector<1x64x128xf32> to vector<64x128xf32>
    %11 = vector.shape_cast %8 : vector<64x128xf32> to vector<1x64x128xf32>
    tpu.vector_store %arg6[%c0_10, %c0_11, %c0_12], %11 {strides = array<i32>} : memref<1x64x128xf32, #tpu.memory_space<vmem>>, vector<1x64x128xf32>,
    return
  }
  func.func @transform_0(%arg0: i32, %arg1: i32, %arg2: i32) -> (i32, i32, i32, i32) {
    %c0_i32 = arith.constant 0 : i32
    %c0_i32_0 = arith.constant 0 : i32
    %c0_i32_1 = arith.constant 0 : i32
    return %arg0, %arg2, %c0_i32, %c0_i32_0 : i32, i32, i32, i32
  }
  func.func @transform_1(%arg0: i32, %arg1: i32, %arg2: i32) -> (i32, i32, i32, i32) {
    %c0_i32 = arith.constant 0 : i32
    %c0_i32_0 = arith.constant 0 : i32
    %c0_i32_1 = arith.constant 0 : i32
    return %arg0, %c0_i32, %c0_i32_0, %arg1 : i32, i32, i32, i32
  }
  func.func @transform_2(%arg0: i32, %arg1: i32, %arg2: i32) -> (i32, i32, i32) {
    %c0_i32 = arith.constant 0 : i32
    %c0_i32_0 = arith.constant 0 : i32
    return %arg0, %c0_i32, %arg1 : i32, i32, i32
  }
  func.func @transform_3(%arg0: i32, %arg1: i32, %arg2: i32) -> (i32, i32, i32) {
    %c0_i32 = arith.constant 0 : i32
    return %arg0, %arg2, %arg1 : i32, i32, i32
  }
}

</mosaic_0001>

<llo_original>
// kernel: forward.6
$region0: #{forward.6}
  #allocation0 [shape = 'u32[]', space=smem, size = 0x4, offset = 0x4, fixed_abs, tag = 'smem constant byte address 0x4 - core index']
  #allocation1 [shape = 'u32[144,128]{1,0:T(1,128)}', space=vmem, size = 0x12000, scoped, tag = 'internal scratch']
  %s0 = inlined_call_operand.vmem [shape: f32[1,2,64,128], index: 0, kind: input, shape index: {}]
  %s1 = inlined_call_operand.vmem [shape: f32[1,1,128,128], index: 1, kind: input, shape index: {}]
  %s2 = inlined_call_operand.vmem [shape: f32[1,1,128], index: 2, kind: input, shape index: {}]
  %s3 = inlined_call_operand.vmem [shape: f32[1,128,128], index: 3, kind: output, shape index: {}]
  %s4 = sld [smem:[#allocation0]]
  $region45: #{forward.6} parent=0
    _
  %s6 = ssub.s32 1, %s4
  %s7 = scalar_select 0, %s6, %s4
  loop: start=0, step=1, limit=4
  $region2: #{forward.6} parent=0 // loop_pre_header
    _
  $region3: #{forward.6} parent=0 // loop_header
    %s9 = sphi 0, %s13
    %p10 = scmp.ge.s32.totalorder %s9, 4
    %s16 = sphi 0, %s35
    %s17 = sphi 0, %s31
    %s18 = sphi 0, %s27
    %s19 = sphi 0, %s16
    %s20 = sphi 0, %s17
    %s21 = sphi 0, %s18
    %s22 = sphi 0, %s19
    %s23 = sphi 0, %s20
    %s24 = sphi 0, %s21
    %s40 = sphi 0, %s42
    %s43 = sphi 0, %s40
    %s44 = sphi 0, %s43
    %s60 = sphi 0, %s44
    %s68 = sphi 0, %s70
    %s71 = sphi 0, %s68
    %s72 = sphi 0, %s71
    %s88 = sphi 0, %s72
    %s96 = sphi 0, %s98
    %s99 = sphi 0, %s96
    %s100 = sphi 0, %s99
    %s116 = sphi 0, %s100
    %s126 = sphi 0, %s128
    %s129 = sphi 0, %s126
    %s130 = sphi 0, %s129
    %s146 = sphi 0, %s130
  $region4: #{forward.6} parent=0 // loop_header_branch
    %12 = sbr.rel (%p10) target = $region8
  $region5: #{forward.6} parent=0 // loop_body
    %s14 = ssub.s32 %s9, 1
    %s15 = ssub.s32 %s9, 2
    %s25 = sadd.s32 1, %s18
    %p26 = scmp.ge.s32.totalorder %s25, 2
    %s27 = scalar_select %p26, 0, %s25
    %s28 = sadd.s32 1, %s17
    %s29 = scalar_select %p26, %s28, %s17
    %p30 = scmp.ge.s32.totalorder %s29, 1
    %s31 = scalar_select %p30, 0, %s29
    %s32 = sadd.s32 1, %s16
    %s33 = scalar_select %p30, %s32, %s16
    %p34 = scmp.ge.s32.totalorder %s33, 1
    %s35 = scalar_select %p34, 0, %s33
    %s36 = ssub.s32 %s16, %s35
    %s37 = ssub.s32 %s18, %s27
    %s38 = sor.u32 %s36, %s37
    %p39 = scmp.eq.s32.totalorder %s38, 0
    %s41 = sadd.s32 %s40, 1
    %s42 = scalar_select %p39, %s40, %s41
    %p45 = pneg %p39
    %p46 = scmp.eq.s32.totalorder %s9, 1
    %p47 = por %p45, %p46
    %p48 = scmp.ne.s32.totalorder %s40, %s43
    %p49 = scmp.eq.s32.totalorder %s9, 0
    %p50 = por %p48, %p49
    %p51 = scmp.ne.s32.totalorder %s40, %s43
    %p52 = scmp.eq.s32.totalorder %s14, 1
    %p53 = por %p51, %p52
    %p54 = scmp.ne.s32.totalorder %s43, %s44
    %p55 = scmp.eq.s32.totalorder %s14, 0
    %p56 = por %p54, %p55
    %p57 = scmp.ne.s32.totalorder %s43, %s44
    %p58 = scmp.eq.s32.totalorder %s15, 1
    %p59 = por %p57, %p58
    %p61 = scmp.ne.s32.totalorder %s44, %s60
    %p62 = scmp.eq.s32.totalorder %s15, 0
    %p63 = por %p61, %p62
    %s64 = ssub.s32 %s16, %s35
    %s65 = ssub.s32 %s17, %s31
    %s66 = sor.u32 %s64, %s65
    %p67 = scmp.eq.s32.totalorder %s66, 0
    %s69 = sadd.s32 %s68, 1
    %s70 = scalar_select %p67, %s68, %s69
    %p73 = pneg %p67
    %p74 = scmp.eq.s32.totalorder %s9, 1
    %p75 = por %p73, %p74
    %p76 = scmp.ne.s32.totalorder %s68, %s71
    %p77 = scmp.eq.s32.totalorder %s9, 0
    %p78 = por %p76, %p77
    %p79 = scmp.ne.s32.totalorder %s68, %s71
    %p80 = scmp.eq.s32.totalorder %s14, 1
    %p81 = por %p79, %p80
    %p82 = scmp.ne.s32.totalorder %s71, %s72
    %p83 = scmp.eq.s32.totalorder %s14, 0
    %p84 = por %p82, %p83
    %p85 = scmp.ne.s32.totalorder %s71, %s72
    %p86 = scmp.eq.s32.totalorder %s15, 1
    %p87 = por %p85, %p86
    %p89 = scmp.ne.s32.totalorder %s72, %s88
    %p90 = scmp.eq.s32.totalorder %s15, 0
    %p91 = por %p89, %p90
    %s92 = ssub.s32 %s16, %s35
    %s93 = ssub.s32 %s17, %s31
    %s94 = sor.u32 %s92, %s93
    %p95 = scmp.eq.s32.totalorder %s94, 0
    %s97 = sadd.s32 %s96, 1
    %s98 = scalar_select %p95, %s96, %s97
    %p101 = pneg %p95
    %p102 = scmp.eq.s32.totalorder %s9, 1
    %p103 = por %p101, %p102
    %p104 = scmp.ne.s32.totalorder %s96, %s99
    %p105 = scmp.eq.s32.totalorder %s9, 0
    %p106 = por %p104, %p105
    %p107 = scmp.ne.s32.totalorder %s96, %s99
    %p108 = scmp.eq.s32.totalorder %s14, 1
    %p109 = por %p107, %p108
    %p110 = scmp.ne.s32.totalorder %s99, %s100
    %p111 = scmp.eq.s32.totalorder %s14, 0
    %p112 = por %p110, %p111
    %p113 = scmp.ne.s32.totalorder %s99, %s100
    %p114 = scmp.eq.s32.totalorder %s15, 1
    %p115 = por %p113, %p114
    %p117 = scmp.ne.s32.totalorder %s100, %s116
    %p118 = scmp.eq.s32.totalorder %s15, 0
    %p119 = por %p117, %p118
    %s120 = ssub.s32 %s16, %s35
    %s121 = ssub.s32 %s18, %s27
    %s122 = sor.u32 %s120, %s121
    %s123 = ssub.s32 %s17, %s31
    %s124 = sor.u32 %s122, %s123
    %p125 = scmp.eq.s32.totalorder %s124, 0
    %s127 = sadd.s32 %s126, 1
    %s128 = scalar_select %p125, %s126, %s127
    %p131 = pneg %p125
    %p132 = scmp.eq.s32.totalorder %s9, 1
    %p133 = por %p131, %p132
    %p134 = scmp.ne.s32.totalorder %s126, %s129
    %p135 = scmp.eq.s32.totalorder %s9, 0
    %p136 = por %p134, %p135
    %p137 = scmp.ne.s32.totalorder %s126, %s129
    %p138 = scmp.eq.s32.totalorder %s14, 1
    %p139 = por %p137, %p138
    %p140 = scmp.ne.s32.totalorder %s129, %s130
    %p141 = scmp.eq.s32.totalorder %s14, 0
    %p142 = por %p140, %p141
    %p143 = scmp.ne.s32.totalorder %s129, %s130
    %p144 = scmp.eq.s32.totalorder %s15, 1
    %p145 = por %p143, %p144
    %p147 = scmp.ne.s32.totalorder %s130, %s146
    %p148 = scmp.eq.s32.totalorder %s15, 0
    %p149 = por %p147, %p148
    %p150 = scmp.le.s32.totalorder 1, %s9
    %p151 = scmp.lt.s32.totalorder %s9, 3
    %p152 = pnand %p150, %p151
    %p153 = pneg %p152
    // Predicated region
    $region9: #{forward.6} parent=5 // pred_check
      _
    $region10: #{forward.6} parent=5 // pred_check_branch
      %155 = sbr.rel (%p152) target = $region12
    $region11: #{forward.6} parent=5 // pred_region
      %s156 = ssub.s32 %s9, 1
      // Predicated region
      $region13: #{forward.6} parent=11 // pred_check
        %p157 = pneg %p84
      $region14: #{forward.6} parent=11 // pred_check_branch
        %159 = sbr.rel (%p157) target = $region16
      $region15: #{forward.6} parent=11 // pred_region
        %p160 = scmp.lt.s32.totalorder %s19, 0
        %s161 = scalar_select %p160, %s19, 0
        %p162 = scmp.lt.s32.totalorder %s20, 0
        %s163 = scalar_select %p162, %s20, 0
        %s164 = smul.addr %s161, 16
        %s165 = sadd.s32 %s163, %s164
        %s166 = smul.addr %s165, 8
        %s167 = scalar_lea.vmem %s1, %s166
      $region16: #{forward.6} parent=11 // pred_fallthru
        _
      // Predicated region
      $region17: #{forward.6} parent=11 // pred_check
        %p168 = pneg %p112
      $region18: #{forward.6} parent=11 // pred_check_branch
        %170 = sbr.rel (%p168) target = $region20
      $region19: #{forward.6} parent=11 // pred_region
        %p171 = scmp.lt.s32.totalorder %s19, 0
        %s172 = scalar_select %p171, %s19, 0
        %p173 = scmp.lt.s32.totalorder %s20, 0
        %s174 = scalar_select %p173, %s20, 0
        %s175 = sadd.s32 %s174, %s172
        %s176 = scalar_lea.vmem %s2, %s175
      $region20: #{forward.6} parent=11 // pred_fallthru
        _
    $region12: #{forward.6} parent=5 // pred_fallthru
      _
    %p177 = scmp.lt.s32.totalorder %s9, 2
    // Predicated region
    $region21: #{forward.6} parent=5 // pred_check
      %p178 = pneg %p177
    $region22: #{forward.6} parent=5 // pred_check_branch
      %180 = sbr.rel (%p178) target = $region24
    $region23: #{forward.6} parent=5 // pred_region
      // Predicated region
      $region25: #{forward.6} parent=23 // pred_check
        %p181 = pneg %p50
      $region26: #{forward.6} parent=23 // pred_check_branch
        %183 = sbr.rel (%p181) target = $region28
      $region27: #{forward.6} parent=23 // pred_region
        %p184 = scmp.lt.s32.totalorder %s16, 0
        %s185 = scalar_select %p184, %s16, 0
        %p186 = scmp.lt.s32.totalorder %s18, 1
        %s187 = scalar_select %p186, %s18, 1
        %s188 = smul.addr %s187, 8
        %s189 = smul.addr %s185, 16
        %s190 = sadd.s32 %s188, %s189
        %s191 = smul.addr %s190, 8
        %s192 = scalar_lea.vmem %s0, %s191
      $region28: #{forward.6} parent=23 // pred_fallthru
        _
    $region24: #{forward.6} parent=5 // pred_fallthru
      _
    %p193 = scmp.le.s32.totalorder 1, %s9
    %p194 = scmp.lt.s32.totalorder %s9, 3
    %p195 = pnand %p193, %p194
    %p196 = pneg %p195
    // Predicated region
    $region29: #{forward.6} parent=5 // pred_check
      _
    $region30: #{forward.6} parent=5 // pred_check_branch
      %198 = sbr.rel (%p195) target = $region32
    $region31: #{forward.6} parent=5 // pred_region
      %s199 = ssub.s32 %s9, 1
      %p200 = scmp.lt.s32.totalorder %s19, 0
      %s201 = scalar_select %p200, %s19, 0
      %p202 = scmp.lt.s32.totalorder %s21, 1
      %s203 = scalar_select %p202, %s21, 1
      %s204 = smul.addr %s203, 8
      %s205 = smul.addr %s201, 16
      %s206 = sadd.s32 %s204, %s205
      %s207 = smul.addr %s206, 8
      %s208 = scalar_lea.vmem %s0, %s207
      %p209 = pneg %p56
      %p210 = pneg %p53
      %p211 = scmp.lt.s32.totalorder %s19, 0
      %s212 = scalar_select %p211, %s19, 0
      %p213 = scmp.lt.s32.totalorder %s20, 0
      %s214 = scalar_select %p213, %s20, 0
      %s215 = smul.addr %s212, 16
      %s216 = sadd.s32 %s214, %s215
      %s217 = smul.addr %s216, 8
      %s218 = scalar_lea.vmem %s1, %s217
      %p219 = pneg %p84
      %p220 = pneg %p81
      %p221 = scmp.lt.s32.totalorder %s19, 0
      %s222 = scalar_select %p221, %s19, 0
      %p223 = scmp.lt.s32.totalorder %s20, 0
      %s224 = scalar_select %p223, %s20, 0
      %s225 = sadd.s32 %s224, %s222
      %s226 = scalar_lea.vmem %s2, %s225
      %p227 = pneg %p112
      %p228 = pneg %p109
      %p229 = pneg %p142
      %p230 = pneg %p139
      %s231 = smul.u32 8, %s21
      %p232 = scmp.lt.s32.totalorder %s19, 0
      %s233 = scalar_select %p232, %s19, 0
      %p234 = scmp.lt.s32.totalorder %s231, 15
      %s235 = scalar_select %p234, %s231, 15
      %p236 = scmp.lt.s32.totalorder %s20, 0
      %s237 = scalar_select %p236, %s20, 0
      %s238 = sadd.s32 %s237, %s235
      %s239 = smul.addr %s233, 16
      %s240 = sadd.s32 %s238, %s239
      %s241 = smul.addr %s240, 8
      %s242 = scalar_lea.vmem %s3, %s241
      %p243 = scmp.lt.s32.totalorder %s19, 0
      %s244 = scalar_select %p243, %s19, 0
      %p245 = scmp.lt.s32.totalorder %s21, 1
      %s246 = scalar_select %p245, %s21, 1
      %s247 = smul.addr %s246, 8
      %s248 = smul.addr %s244, 16
      %s249 = sadd.s32 %s247, %s248
      %s250 = smul.addr %s249, 8
      %s251 = scalar_lea.vmem %s0, %s250
      %p252 = scmp.lt.s32.totalorder %s19, 0
      %s253 = scalar_select %p252, %s19, 0
      %p254 = scmp.lt.s32.totalorder %s20, 0
      %s255 = scalar_select %p254, %s20, 0
      %s256 = smul.addr %s253, 16
      %s257 = sadd.s32 %s255, %s256
      %s258 = smul.addr %s257, 8
      %s259 = scalar_lea.vmem %s1, %s258
      %p260 = scmp.lt.s32.totalorder %s19, 0
      %s261 = scalar_select %p260, %s19, 0
      %p262 = scmp.lt.s32.totalorder %s20, 0
      %s263 = scalar_select %p262, %s20, 0
      %s264 = sadd.s32 %s263, %s261
      %s265 = scalar_lea.vmem %s2, %s264
      %s266 = smul.u32 8, %s21
      %p267 = scmp.lt.s32.totalorder %s19, 0
      %s268 = scalar_select %p267, %s19, 0
      %p269 = scmp.lt.s32.totalorder %s266, 15
      %s270 = scalar_select %p269, %s266, 15
      %p271 = scmp.lt.s32.totalorder %s20, 0
      %s272 = scalar_select %p271, %s20, 0
      %s273 = sadd.s32 %s272, %s270
      %s274 = smul.addr %s268, 16
      %s275 = sadd.s32 %s273, %s274
      %s276 = smul.addr %s275, 8
      %s277 = scalar_lea.vmem %s3, %s276
      %s278 = smul.u32 8, %s21
      %v279 = vld [vmem:[%s251] sm:$0xff]
      %v280 = vld [vmem:[%s251 + $0x8] sm:$0xff]
      %v281 = vld [vmem:[%s251 + $0x10] sm:$0xff]
      %v282 = vld [vmem:[%s251 + $0x18] sm:$0xff]
      %v283 = vld [vmem:[%s251 + $0x20] sm:$0xff]
      %v284 = vld [vmem:[%s251 + $0x28] sm:$0xff]
      %v285 = vld [vmem:[%s251 + $0x30] sm:$0xff]
      %v286 = vld [vmem:[%s251 + $0x38] sm:$0xff]
      %v287 = vld [vmem:[%s259] sm:$0xff]
      %v288 = vld [vmem:[%s259 + $0x8] sm:$0xff]
      %v289 = vld [vmem:[%s259 + $0x10] sm:$0xff]
      %v290 = vld [vmem:[%s259 + $0x18] sm:$0xff]
      %v291 = vld [vmem:[%s259 + $0x20] sm:$0xff]
      %v292 = vld [vmem:[%s259 + $0x28] sm:$0xff]
      %v293 = vld [vmem:[%s259 + $0x30] sm:$0xff]
      %v294 = vld [vmem:[%s259 + $0x38] sm:$0xff]
      %v295 = vld [vmem:[%s259 + $0x40] sm:$0xff]
      %v296 = vld [vmem:[%s259 + $0x48] sm:$0xff]
      %v297 = vld [vmem:[%s259 + $0x50] sm:$0xff]
      %v298 = vld [vmem:[%s259 + $0x58] sm:$0xff]
      %v299 = vld [vmem:[%s259 + $0x60] sm:$0xff]
      %v300 = vld [vmem:[%s259 + $0x68] sm:$0xff]
      %v301 = vld [vmem:[%s259 + $0x70] sm:$0xff]
      %v302 = vld [vmem:[%s259 + $0x78] sm:$0xff]
      %v303 = vld [vmem:[%s265] sm:$0x1]
      %v305 = vlaneseq
      %v306 = vshrl.u32 %v305, 7
      %v307 = vsub.s32 0, %v306
      %v308 = vrot.slane %v303, %v307
      %310 = vmatprep.subr.mxu0 0.0
      %311 = vmatpush1.msra.mxu0 %v287
      %312 = vmatprep.subr.mxu0 0.0
      %313 = vmatpush1.msra.mxu0 %v288
      %314 = vmatprep.subr.mxu0 0.0
      %315 = vmatpush1.msra.mxu0 %v289
      %316 = vmatprep.subr.mxu0 0.0
      %317 = vmatpush1.msra.mxu0 %v290
      %318 = vmatprep.subr.mxu0 0.0
      %319 = vmatpush1.msra.mxu0 %v291
      %320 = vmatprep.subr.mxu0 0.0
      %321 = vmatpush1.msra.mxu0 %v292
      %322 = vmatprep.subr.mxu0 0.0
      %323 = vmatpush1.msra.mxu0 %v293
      %324 = vmatprep.subr.mxu0 0.0
      %325 = vmatpush1.msra.mxu0 %v294
      %326 = vmatprep.subr.mxu0 0.0
      %327 = vmatpush1.msra.mxu0 %v295
      %328 = vmatprep.subr.mxu0 0.0
      %329 = vmatpush1.msra.mxu0 %v296
      %330 = vmatprep.subr.mxu0 0.0
      %331 = vmatpush1.msra.mxu0 %v297
      %332 = vmatprep.subr.mxu0 0.0
      %333 = vmatpush1.msra.mxu0 %v298
      %334 = vmatprep.subr.mxu0 0.0
      %335 = vmatpush1.msra.mxu0 %v299
      %336 = vmatprep.subr.mxu0 0.0
      %337 = vmatpush1.msra.mxu0 %v300
      %338 = vmatprep.subr.mxu0 0.0
      %339 = vmatpush1.msra.mxu0 %v301
      %340 = vmatprep.subr.mxu0 0.0
      %341 = vmatpush1.msra.mxu0 %v302
      %342 = vmatprep.subr.mxu0 0.0
      %343 = vmatpush1.msra.mxu0 0.0
      %344 = vmatprep.subr.mxu0 0.0
      %345 = vmatpush1.msra.mxu0 0.0
      %346 = vmatprep.subr.mxu0 0.0
      %347 = vmatpush1.msra.mxu0 0.0
      %348 = vmatprep.subr.mxu0 0.0
      %349 = vmatpush1.msra.mxu0 0.0
      %350 = vmatprep.subr.mxu0 0.0
      %351 = vmatpush1.msra.mxu0 0.0
      %352 = vmatprep.subr.mxu0 0.0
      %353 = vmatpush1.msra.mxu0 0.0
      %354 = vmatprep.subr.mxu0 0.0
      %355 = vmatpush1.msra.mxu0 0.0
      %356 = vmatprep.subr.mxu0 0.0
      %357 = vmatpush1.msra.mxu0 0.0
      %358 = vmatprep.subr.mxu0 0.0
      %359 = vmatpush1.msra.mxu0 0.0
      %360 = vmatprep.subr.mxu0 0.0
      %361 = vmatpush1.msra.mxu0 0.0
      %362 = vmatprep.subr.mxu0 0.0
      %363 = vmatpush1.msra.mxu0 0.0
      %364 = vmatprep.subr.mxu0 0.0
      %365 = vmatpush1.msra.mxu0 0.0
      %366 = vmatprep.subr.mxu0 0.0
      %367 = vmatpush1.msra.mxu0 0.0
      %368 = vmatprep.subr.mxu0 0.0
      %369 = vmatpush1.msra.mxu0 0.0
      %370 = vmatprep.subr.mxu0 0.0
      %371 = vmatpush1.msra.mxu0 0.0
      %372 = vmatprep.subr.mxu0 0.0
      %373 = vmatpush1.msra.mxu0 0.0
      %374 = vmatprep.mubr.f32.mxu0 0.0
      %375 = vmatmul.mubr.f32.gmra.mrb[0].mxu0 %v279
      %v376 = vpop.f32.mrb[0].mxu0
      %v377 = vadd.f32 %v308, %v376
      %v378 = vpop.f32.mrb[0].mxu0
      %379 = vmatprep.mubr.f32.mxu0 0.0
      %380 = vmatmul.mubr.f32.gmra.mrb[0].mxu0 %v280
      %v381 = vpop.f32.mrb[0].mxu0
      %v382 = vadd.f32 %v308, %v381
      %v383 = vpop.f32.mrb[0].mxu0
      %384 = vmatprep.mubr.f32.mxu0 0.0
      %385 = vmatmul.mubr.f32.gmra.mrb[0].mxu0 %v281
      %v386 = vpop.f32.mrb[0].mxu0
      %v387 = vadd.f32 %v308, %v386
      %v388 = vpop.f32.mrb[0].mxu0
      %389 = vmatprep.mubr.f32.mxu0 0.0
      %390 = vmatmul.mubr.f32.gmra.mrb[0].mxu0 %v282
      %v391 = vpop.f32.mrb[0].mxu0
      %v392 = vadd.f32 %v308, %v391
      %v393 = vpop.f32.mrb[0].mxu0
      %394 = vmatprep.mubr.f32.mxu0 0.0
      %395 = vmatmul.mubr.f32.gmra.mrb[0].mxu0 %v283
      %v396 = vpop.f32.mrb[0].mxu0
      %v397 = vadd.f32 %v308, %v396
      %v398 = vpop.f32.mrb[0].mxu0
      %399 = vmatprep.mubr.f32.mxu0 0.0
      %400 = vmatmul.mubr.f32.gmra.mrb[0].mxu0 %v284
      %v401 = vpop.f32.mrb[0].mxu0
      %v402 = vadd.f32 %v308, %v401
      %v403 = vpop.f32.mrb[0].mxu0
      %404 = vmatprep.mubr.f32.mxu0 0.0
      %405 = vmatmul.mubr.f32.gmra.mrb[0].mxu0 %v285
      %v406 = vpop.f32.mrb[0].mxu0
      %v407 = vadd.f32 %v308, %v406
      %v408 = vpop.f32.mrb[0].mxu0
      %409 = vmatprep.mubr.f32.mxu0 0.0
      %410 = vmatmul.mubr.f32.gmra.mrb[0].mxu0 %v286
      %v411 = vpop.f32.mrb[0].mxu0
      %v412 = vadd.f32 %v308, %v411
      %v413 = vpop.f32.mrb[0].mxu0
      %414 = vdwg.mxu0
      %vm415 = vcmp.ge.f32.partialorder %v377, 0.0
      %vm416 = vcmp.ge.f32.partialorder %v382, 0.0
      %vm417 = vcmp.ge.f32.partialorder %v387, 0.0
      %vm418 = vcmp.ge.f32.partialorder %v392, 0.0
      %vm419 = vcmp.ge.f32.partialorder %v397, 0.0
      %vm420 = vcmp.ge.f32.partialorder %v402, 0.0
      %vm421 = vcmp.ge.f32.partialorder %v407, 0.0
      %vm422 = vcmp.ge.f32.partialorder %v412, 0.0
      %v423 = vmul.f32 %v377, 0.2
      %v424 = vmul.f32 %v382, 0.2
      %v425 = vmul.f32 %v387, 0.2
      %v426 = vmul.f32 %v392, 0.2
      %v427 = vmul.f32 %v397, 0.2
      %v428 = vmul.f32 %v402, 0.2
      %v429 = vmul.f32 %v407, 0.2
      %v430 = vmul.f32 %v412, 0.2
      %v431 = vsel %vm415, %v377, %v423
      %v432 = vsel %vm416, %v382, %v424
      %v433 = vsel %vm417, %v387, %v425
      %v434 = vsel %vm418, %v392, %v426
      %v435 = vsel %vm419, %v397, %v427
      %v436 = vsel %vm420, %v402, %v428
      %v437 = vsel %vm421, %v407, %v429
      %v438 = vsel %vm422, %v412, %v430
      %439 = vst [vmem:[%s277] sm:$0xff] %v431
      %440 = vst [vmem:[%s277 + $0x8] sm:$0xff] %v432
      %441 = vst [vmem:[%s277 + $0x10] sm:$0xff] %v433
      %442 = vst [vmem:[%s277 + $0x18] sm:$0xff] %v434
      %443 = vst [vmem:[%s277 + $0x20] sm:$0xff] %v435
      %444 = vst [vmem:[%s277 + $0x28] sm:$0xff] %v436
      %445 = vst [vmem:[%s277 + $0x30] sm:$0xff] %v437
      %446 = vst [vmem:[%s277 + $0x38] sm:$0xff] %v438
      %s447 = smul.u32 8, %s21
      %p448 = scmp.lt.s32.totalorder %s19, 0
      %s449 = scalar_select %p448, %s19, 0
      %p450 = scmp.lt.s32.totalorder %s447, 15
      %s451 = scalar_select %p450, %s447, 15
      %p452 = scmp.lt.s32.totalorder %s20, 0
      %s453 = scalar_select %p452, %s20, 0
      %s454 = sadd.s32 %s453, %s451
      %s455 = smul.addr %s449, 16
      %s456 = sadd.s32 %s454, %s455
      %s457 = smul.addr %s456, 8
      %s458 = scalar_lea.vmem %s3, %s457
      // Predicated region
      $region33: #{forward.6} parent=31 // pred_check
        %p459 = pneg %p139
      $region34: #{forward.6} parent=31 // pred_check_branch
        %461 = sbr.rel (%p459) target = $region36
      $region35: #{forward.6} parent=31 // pred_region
        %s462 = smul.u32 8, %s21
      $region36: #{forward.6} parent=31 // pred_fallthru
        _
    $region32: #{forward.6} parent=5 // pred_fallthru
      _
    %p463 = scmp.le.s32.totalorder 2, %s9
    // Predicated region
    $region37: #{forward.6} parent=5 // pred_check
      %p464 = pneg %p463
    $region38: #{forward.6} parent=5 // pred_check_branch
      %466 = sbr.rel (%p464) target = $region40
    $region39: #{forward.6} parent=5 // pred_region
      %s467 = ssub.s32 %s9, 2
      // Predicated region
      $region41: #{forward.6} parent=39 // pred_check
        %p468 = pneg %p145
      $region42: #{forward.6} parent=39 // pred_check_branch
        %470 = sbr.rel (%p468) target = $region44
      $region43: #{forward.6} parent=39 // pred_region
        %s471 = smul.u32 8, %s24
        %p472 = scmp.lt.s32.totalorder %s22, 0
        %s473 = scalar_select %p472, %s22, 0
        %p474 = scmp.lt.s32.totalorder %s471, 15
        %s475 = scalar_select %p474, %s471, 15
        %p476 = scmp.lt.s32.totalorder %s23, 0
        %s477 = scalar_select %p476, %s23, 0
        %s478 = sadd.s32 %s477, %s475
        %s479 = smul.addr %s473, 16
        %s480 = sadd.s32 %s478, %s479
        %s481 = smul.addr %s480, 8
        %s482 = scalar_lea.vmem %s3, %s481
      $region44: #{forward.6} parent=39 // pred_fallthru
        _
    $region40: #{forward.6} parent=5 // pred_fallthru
      _
  $region6: #{forward.6} parent=0 // loop_footer
    %s13 = sadd.s32 1, %s9
  $region7: #{forward.6} parent=0 // loop_footer_branch
    %8 = sbr.rel target = $region3
  $region8: #{forward.6} parent=0 // loop_exit
    _

// kernel: forward.11
$region0: #{forward.11}
  #allocation0 [shape = 'u32[]', space=smem, size = 0x4, offset = 0x4, fixed_abs, tag = 'smem constant byte address 0x4 - core index']
  #allocation1 [shape = 'u32[144,128]{1,0:T(1,128)}', space=vmem, size = 0x12000, scoped, tag = 'internal scratch']
  %s0 = inlined_call_operand.vmem [shape: f32[1,2,64,128], index: 0, kind: input, shape index: {}]
  %s1 = inlined_call_operand.vmem [shape: f32[1,1,128,128], index: 1, kind: input, shape index: {}]
  %s2 = inlined_call_operand.vmem [shape: f32[1,1,128], index: 2, kind: input, shape index: {}]
  %s3 = inlined_call_operand.vmem [shape: f32[1,128,128], index: 3, kind: output, shape index: {}]
  %s4 = sld [smem:[#allocation0]]
  $region45: #{forward.11} parent=0
    _
  %s6 = ssub.s32 1, %s4
  %s7 = scalar_select 0, %s6, %s4
  loop: start=0, step=1, limit=4
  $region2: #{forward.11} parent=0 // loop_pre_header
    _
  $region3: #{forward.11} parent=0 // loop_header
    %s9 = sphi 0, %s13
    %p10 = scmp.ge.s32.totalorder %s9, 4
    %s16 = sphi 0, %s35
    %s17 = sphi 0, %s31
    %s18 = sphi 0, %s27
    %s19 = sphi 0, %s16
    %s20 = sphi 0, %s17
    %s21 = sphi 0, %s18
    %s22 = sphi 0, %s19
    %s23 = sphi 0, %s20
    %s24 = sphi 0, %s21
    %s40 = sphi 0, %s42
    %s43 = sphi 0, %s40
    %s44 = sphi 0, %s43
    %s60 = sphi 0, %s44
    %s68 = sphi 0, %s70
    %s71 = sphi 0, %s68
    %s72 = sphi 0, %s71
    %s88 = sphi 0, %s72
    %s96 = sphi 0, %s98
    %s99 = sphi 0, %s96
    %s100 = sphi 0, %s99
    %s116 = sphi 0, %s100
    %s126 = sphi 0, %s128
    %s129 = sphi 0, %s126
    %s130 = sphi 0, %s129
    %s146 = sphi 0, %s130
  $region4: #{forward.11} parent=0 // loop_header_branch
    %12 = sbr.rel (%p10) target = $region8
  $region5: #{forward.11} parent=0 // loop_body
    %s14 = ssub.s32 %s9, 1
    %s15 = ssub.s32 %s9, 2
    %s25 = sadd.s32 1, %s18
    %p26 = scmp.ge.s32.totalorder %s25, 2
    %s27 = scalar_select %p26, 0, %s25
    %s28 = sadd.s32 1, %s17
    %s29 = scalar_select %p26, %s28, %s17
    %p30 = scmp.ge.s32.totalorder %s29, 1
    %s31 = scalar_select %p30, 0, %s29
    %s32 = sadd.s32 1, %s16
    %s33 = scalar_select %p30, %s32, %s16
    %p34 = scmp.ge.s32.totalorder %s33, 1
    %s35 = scalar_select %p34, 0, %s33
    %s36 = ssub.s32 %s16, %s35
    %s37 = ssub.s32 %s18, %s27
    %s38 = sor.u32 %s36, %s37
    %p39 = scmp.eq.s32.totalorder %s38, 0
    %s41 = sadd.s32 %s40, 1
    %s42 = scalar_select %p39, %s40, %s41
    %p45 = pneg %p39
    %p46 = scmp.eq.s32.totalorder %s9, 1
    %p47 = por %p45, %p46
    %p48 = scmp.ne.s32.totalorder %s40, %s43
    %p49 = scmp.eq.s32.totalorder %s9, 0
    %p50 = por %p48, %p49
    %p51 = scmp.ne.s32.totalorder %s40, %s43
    %p52 = scmp.eq.s32.totalorder %s14, 1
    %p53 = por %p51, %p52
    %p54 = scmp.ne.s32.totalorder %s43, %s44
    %p55 = scmp.eq.s32.totalorder %s14, 0
    %p56 = por %p54, %p55
    %p57 = scmp.ne.s32.totalorder %s43, %s44
    %p58 = scmp.eq.s32.totalorder %s15, 1
    %p59 = por %p57, %p58
    %p61 = scmp.ne.s32.totalorder %s44, %s60
    %p62 = scmp.eq.s32.totalorder %s15, 0
    %p63 = por %p61, %p62
    %s64 = ssub.s32 %s16, %s35
    %s65 = ssub.s32 %s17, %s31
    %s66 = sor.u32 %s64, %s65
    %p67 = scmp.eq.s32.totalorder %s66, 0
    %s69 = sadd.s32 %s68, 1
    %s70 = scalar_select %p67, %s68, %s69
    %p73 = pneg %p67
    %p74 = scmp.eq.s32.totalorder %s9, 1
    %p75 = por %p73, %p74
    %p76 = scmp.ne.s32.totalorder %s68, %s71
    %p77 = scmp.eq.s32.totalorder %s9, 0
    %p78 = por %p76, %p77
    %p79 = scmp.ne.s32.totalorder %s68, %s71
    %p80 = scmp.eq.s32.totalorder %s14, 1
    %p81 = por %p79, %p80
    %p82 = scmp.ne.s32.totalorder %s71, %s72
    %p83 = scmp.eq.s32.totalorder %s14, 0
    %p84 = por %p82, %p83
    %p85 = scmp.ne.s32.totalorder %s71, %s72
    %p86 = scmp.eq.s32.totalorder %s15, 1
    %p87 = por %p85, %p86
    %p89 = scmp.ne.s32.totalorder %s72, %s88
    %p90 = scmp.eq.s32.totalorder %s15, 0
    %p91 = por %p89, %p90
    %s92 = ssub.s32 %s16, %s35
    %s93 = ssub.s32 %s17, %s31
    %s94 = sor.u32 %s92, %s93
    %p95 = scmp.eq.s32.totalorder %s94, 0
    %s97 = sadd.s32 %s96, 1
    %s98 = scalar_select %p95, %s96, %s97
    %p101 = pneg %p95
    %p102 = scmp.eq.s32.totalorder %s9, 1
    %p103 = por %p101, %p102
    %p104 = scmp.ne.s32.totalorder %s96, %s99
    %p105 = scmp.eq.s32.totalorder %s9, 0
    %p106 = por %p104, %p105
    %p107 = scmp.ne.s32.totalorder %s96, %s99
    %p108 = scmp.eq.s32.totalorder %s14, 1
    %p109 = por %p107, %p108
    %p110 = scmp.ne.s32.totalorder %s99, %s100
    %p111 = scmp.eq.s32.totalorder %s14, 0
    %p112 = por %p110, %p111
    %p113 = scmp.ne.s32.totalorder %s99, %s100
    %p114 = scmp.eq.s32.totalorder %s15, 1
    %p115 = por %p113, %p114
    %p117 = scmp.ne.s32.totalorder %s100, %s116
    %p118 = scmp.eq.s32.totalorder %s15, 0
    %p119 = por %p117, %p118
    %s120 = ssub.s32 %s16, %s35
    %s121 = ssub.s32 %s18, %s27
    %s122 = sor.u32 %s120, %s121
    %s123 = ssub.s32 %s17, %s31
    %s124 = sor.u32 %s122, %s123
    %p125 = scmp.eq.s32.totalorder %s124, 0
    %s127 = sadd.s32 %s126, 1
    %s128 = scalar_select %p125, %s126, %s127
    %p131 = pneg %p125
    %p132 = scmp.eq.s32.totalorder %s9, 1
    %p133 = por %p131, %p132
    %p134 = scmp.ne.s32.totalorder %s126, %s129
    %p135 = scmp.eq.s32.totalorder %s9, 0
    %p136 = por %p134, %p135
    %p137 = scmp.ne.s32.totalorder %s126, %s129
    %p138 = scmp.eq.s32.totalorder %s14, 1
    %p139 = por %p137, %p138
    %p140 = scmp.ne.s32.totalorder %s129, %s130
    %p141 = scmp.eq.s32.totalorder %s14, 0
    %p142 = por %p140, %p141
    %p143 = scmp.ne.s32.totalorder %s129, %s130
    %p144 = scmp.eq.s32.totalorder %s15, 1
    %p145 = por %p143, %p144
    %p147 = scmp.ne.s32.totalorder %s130, %s146
    %p148 = scmp.eq.s32.totalorder %s15, 0
    %p149 = por %p147, %p148
    %p150 = scmp.le.s32.totalorder 1, %s9
    %p151 = scmp.lt.s32.totalorder %s9, 3
    %p152 = pnand %p150, %p151
    %p153 = pneg %p152
    // Predicated region
    $region9: #{forward.11} parent=5 // pred_check
      _
    $region10: #{forward.11} parent=5 // pred_check_branch
      %155 = sbr.rel (%p152) target = $region12
    $region11: #{forward.11} parent=5 // pred_region
      %s156 = ssub.s32 %s9, 1
      // Predicated region
      $region13: #{forward.11} parent=11 // pred_check
        %p157 = pneg %p84
      $region14: #{forward.11} parent=11 // pred_check_branch
        %159 = sbr.rel (%p157) target = $region16
      $region15: #{forward.11} parent=11 // pred_region
        %p160 = scmp.lt.s32.totalorder %s19, 0
        %s161 = scalar_select %p160, %s19, 0
        %p162 = scmp.lt.s32.totalorder %s20, 0
        %s163 = scalar_select %p162, %s20, 0
        %s164 = smul.addr %s161, 16
        %s165 = sadd.s32 %s163, %s164
        %s166 = smul.addr %s165, 8
        %s167 = scalar_lea.vmem %s1, %s166
      $region16: #{forward.11} parent=11 // pred_fallthru
        _
      // Predicated region
      $region17: #{forward.11} parent=11 // pred_check
        %p168 = pneg %p112
      $region18: #{forward.11} parent=11 // pred_check_branch
        %170 = sbr.rel (%p168) target = $region20
      $region19: #{forward.11} parent=11 // pred_region
        %p171 = scmp.lt.s32.totalorder %s19, 0
        %s172 = scalar_select %p171, %s19, 0
        %p173 = scmp.lt.s32.totalorder %s20, 0
        %s174 = scalar_select %p173, %s20, 0
        %s175 = sadd.s32 %s174, %s172
        %s176 = scalar_lea.vmem %s2, %s175
      $region20: #{forward.11} parent=11 // pred_fallthru
        _
    $region12: #{forward.11} parent=5 // pred_fallthru
      _
    %p177 = scmp.lt.s32.totalorder %s9, 2
    // Predicated region
    $region21: #{forward.11} parent=5 // pred_check
      %p178 = pneg %p177
    $region22: #{forward.11} parent=5 // pred_check_branch
      %180 = sbr.rel (%p178) target = $region24
    $region23: #{forward.11} parent=5 // pred_region
      // Predicated region
      $region25: #{forward.11} parent=23 // pred_check
        %p181 = pneg %p50
      $region26: #{forward.11} parent=23 // pred_check_branch
        %183 = sbr.rel (%p181) target = $region28
      $region27: #{forward.11} parent=23 // pred_region
        %p184 = scmp.lt.s32.totalorder %s16, 0
        %s185 = scalar_select %p184, %s16, 0
        %p186 = scmp.lt.s32.totalorder %s18, 1
        %s187 = scalar_select %p186, %s18, 1
        %s188 = smul.addr %s187, 8
        %s189 = smul.addr %s185, 16
        %s190 = sadd.s32 %s188, %s189
        %s191 = smul.addr %s190, 8
        %s192 = scalar_lea.vmem %s0, %s191
      $region28: #{forward.11} parent=23 // pred_fallthru
        _
    $region24: #{forward.11} parent=5 // pred_fallthru
      _
    %p193 = scmp.le.s32.totalorder 1, %s9
    %p194 = scmp.lt.s32.totalorder %s9, 3
    %p195 = pnand %p193, %p194
    %p196 = pneg %p195
    // Predicated region
    $region29: #{forward.11} parent=5 // pred_check
      _
    $region30: #{forward.11} parent=5 // pred_check_branch
      %198 = sbr.rel (%p195) target = $region32
    $region31: #{forward.11} parent=5 // pred_region
      %s199 = ssub.s32 %s9, 1
      %p200 = scmp.lt.s32.totalorder %s19, 0
      %s201 = scalar_select %p200, %s19, 0
      %p202 = scmp.lt.s32.totalorder %s21, 1
      %s203 = scalar_select %p202, %s21, 1
      %s204 = smul.addr %s203, 8
      %s205 = smul.addr %s201, 16
      %s206 = sadd.s32 %s204, %s205
      %s207 = smul.addr %s206, 8
      %s208 = scalar_lea.vmem %s0, %s207
      %p209 = pneg %p56
      %p210 = pneg %p53
      %p211 = scmp.lt.s32.totalorder %s19, 0
      %s212 = scalar_select %p211, %s19, 0
      %p213 = scmp.lt.s32.totalorder %s20, 0
      %s214 = scalar_select %p213, %s20, 0
      %s215 = smul.addr %s212, 16
      %s216 = sadd.s32 %s214, %s215
      %s217 = smul.addr %s216, 8
      %s218 = scalar_lea.vmem %s1, %s217
      %p219 = pneg %p84
      %p220 = pneg %p81
      %p221 = scmp.lt.s32.totalorder %s19, 0
      %s222 = scalar_select %p221, %s19, 0
      %p223 = scmp.lt.s32.totalorder %s20, 0
      %s224 = scalar_select %p223, %s20, 0
      %s225 = sadd.s32 %s224, %s222
      %s226 = scalar_lea.vmem %s2, %s225
      %p227 = pneg %p112
      %p228 = pneg %p109
      %p229 = pneg %p142
      %p230 = pneg %p139
      %s231 = smul.u32 8, %s21
      %p232 = scmp.lt.s32.totalorder %s19, 0
      %s233 = scalar_select %p232, %s19, 0
      %p234 = scmp.lt.s32.totalorder %s231, 15
      %s235 = scalar_select %p234, %s231, 15
      %p236 = scmp.lt.s32.totalorder %s20, 0
      %s237 = scalar_select %p236, %s20, 0
      %s238 = sadd.s32 %s237, %s235
      %s239 = smul.addr %s233, 16
      %s240 = sadd.s32 %s238, %s239
      %s241 = smul.addr %s240, 8
      %s242 = scalar_lea.vmem %s3, %s241
      %p243 = scmp.lt.s32.totalorder %s19, 0
      %s244 = scalar_select %p243, %s19, 0
      %p245 = scmp.lt.s32.totalorder %s21, 1
      %s246 = scalar_select %p245, %s21, 1
      %s247 = smul.addr %s246, 8
      %s248 = smul.addr %s244, 16
      %s249 = sadd.s32 %s247, %s248
      %s250 = smul.addr %s249, 8
      %s251 = scalar_lea.vmem %s0, %s250
      %p252 = scmp.lt.s32.totalorder %s19, 0
      %s253 = scalar_select %p252, %s19, 0
      %p254 = scmp.lt.s32.totalorder %s20, 0
      %s255 = scalar_select %p254, %s20, 0
      %s256 = smul.addr %s253, 16
      %s257 = sadd.s32 %s255, %s256
      %s258 = smul.addr %s257, 8
      %s259 = scalar_lea.vmem %s1, %s258
      %p260 = scmp.lt.s32.totalorder %s19, 0
      %s261 = scalar_select %p260, %s19, 0
      %p262 = scmp.lt.s32.totalorder %s20, 0
      %s263 = scalar_select %p262, %s20, 0
      %s264 = sadd.s32 %s263, %s261
      %s265 = scalar_lea.vmem %s2, %s264
      %s266 = smul.u32 8, %s21
      %p267 = scmp.lt.s32.totalorder %s19, 0
      %s268 = scalar_select %p267, %s19, 0
      %p269 = scmp.lt.s32.totalorder %s266, 15
      %s270 = scalar_select %p269, %s266, 15
      %p271 = scmp.lt.s32.totalorder %s20, 0
      %s272 = scalar_select %p271, %s20, 0
      %s273 = sadd.s32 %s272, %s270
      %s274 = smul.addr %s268, 16
      %s275 = sadd.s32 %s273, %s274
      %s276 = smul.addr %s275, 8
      %s277 = scalar_lea.vmem %s3, %s276
      %s278 = smul.u32 8, %s21
      %v279 = vld [vmem:[%s251] sm:$0xff]
      %v280 = vld [vmem:[%s251 + $0x8] sm:$0xff]
      %v281 = vld [vmem:[%s251 + $0x10] sm:$0xff]
      %v282 = vld [vmem:[%s251 + $0x18] sm:$0xff]
      %v283 = vld [vmem:[%s251 + $0x20] sm:$0xff]
      %v284 = vld [vmem:[%s251 + $0x28] sm:$0xff]
      %v285 = vld [vmem:[%s251 + $0x30] sm:$0xff]
      %v286 = vld [vmem:[%s251 + $0x38] sm:$0xff]
      %v287 = vld [vmem:[%s259] sm:$0xff]
      %v288 = vld [vmem:[%s259 + $0x8] sm:$0xff]
      %v289 = vld [vmem:[%s259 + $0x10] sm:$0xff]
      %v290 = vld [vmem:[%s259 + $0x18] sm:$0xff]
      %v291 = vld [vmem:[%s259 + $0x20] sm:$0xff]
      %v292 = vld [vmem:[%s259 + $0x28] sm:$0xff]
      %v293 = vld [vmem:[%s259 + $0x30] sm:$0xff]
      %v294 = vld [vmem:[%s259 + $0x38] sm:$0xff]
      %v295 = vld [vmem:[%s259 + $0x40] sm:$0xff]
      %v296 = vld [vmem:[%s259 + $0x48] sm:$0xff]
      %v297 = vld [vmem:[%s259 + $0x50] sm:$0xff]
      %v298 = vld [vmem:[%s259 + $0x58] sm:$0xff]
      %v299 = vld [vmem:[%s259 + $0x60] sm:$0xff]
      %v300 = vld [vmem:[%s259 + $0x68] sm:$0xff]
      %v301 = vld [vmem:[%s259 + $0x70] sm:$0xff]
      %v302 = vld [vmem:[%s259 + $0x78] sm:$0xff]
      %v303 = vld [vmem:[%s265] sm:$0x1]
      %v305 = vlaneseq
      %v306 = vshrl.u32 %v305, 7
      %v307 = vsub.s32 0, %v306
      %v308 = vrot.slane %v303, %v307
      %310 = vmatprep.subr.mxu0 0.0
      %311 = vmatpush1.msra.mxu0 %v287
      %312 = vmatprep.subr.mxu0 0.0
      %313 = vmatpush1.msra.mxu0 %v288
      %314 = vmatprep.subr.mxu0 0.0
      %315 = vmatpush1.msra.mxu0 %v289
      %316 = vmatprep.subr.mxu0 0.0
      %317 = vmatpush1.msra.mxu0 %v290
      %318 = vmatprep.subr.mxu0 0.0
      %319 = vmatpush1.msra.mxu0 %v291
      %320 = vmatprep.subr.mxu0 0.0
      %321 = vmatpush1.msra.mxu0 %v292
      %322 = vmatprep.subr.mxu0 0.0
      %323 = vmatpush1.msra.mxu0 %v293
      %324 = vmatprep.subr.mxu0 0.0
      %325 = vmatpush1.msra.mxu0 %v294
      %326 = vmatprep.subr.mxu0 0.0
      %327 = vmatpush1.msra.mxu0 %v295
      %328 = vmatprep.subr.mxu0 0.0
      %329 = vmatpush1.msra.mxu0 %v296
      %330 = vmatprep.subr.mxu0 0.0
      %331 = vmatpush1.msra.mxu0 %v297
      %332 = vmatprep.subr.mxu0 0.0
      %333 = vmatpush1.msra.mxu0 %v298
      %334 = vmatprep.subr.mxu0 0.0
      %335 = vmatpush1.msra.mxu0 %v299
      %336 = vmatprep.subr.mxu0 0.0
      %337 = vmatpush1.msra.mxu0 %v300
      %338 = vmatprep.subr.mxu0 0.0
      %339 = vmatpush1.msra.mxu0 %v301
      %340 = vmatprep.subr.mxu0 0.0
      %341 = vmatpush1.msra.mxu0 %v302
      %342 = vmatprep.subr.mxu0 0.0
      %343 = vmatpush1.msra.mxu0 0.0
      %344 = vmatprep.subr.mxu0 0.0
      %345 = vmatpush1.msra.mxu0 0.0
      %346 = vmatprep.subr.mxu0 0.0
      %347 = vmatpush1.msra.mxu0 0.0
      %348 = vmatprep.subr.mxu0 0.0
      %349 = vmatpush1.msra.mxu0 0.0
      %350 = vmatprep.subr.mxu0 0.0
      %351 = vmatpush1.msra.mxu0 0.0
      %352 = vmatprep.subr.mxu0 0.0
      %353 = vmatpush1.msra.mxu0 0.0
      %354 = vmatprep.subr.mxu0 0.0
      %355 = vmatpush1.msra.mxu0 0.0
      %356 = vmatprep.subr.mxu0 0.0
      %357 = vmatpush1.msra.mxu0 0.0
      %358 = vmatprep.subr.mxu0 0.0
      %359 = vmatpush1.msra.mxu0 0.0
      %360 = vmatprep.subr.mxu0 0.0
      %361 = vmatpush1.msra.mxu0 0.0
      %362 = vmatprep.subr.mxu0 0.0
      %363 = vmatpush1.msra.mxu0 0.0
      %364 = vmatprep.subr.mxu0 0.0
      %365 = vmatpush1.msra.mxu0 0.0
      %366 = vmatprep.subr.mxu0 0.0
      %367 = vmatpush1.msra.mxu0 0.0
      %368 = vmatprep.subr.mxu0 0.0
      %369 = vmatpush1.msra.mxu0 0.0
      %370 = vmatprep.subr.mxu0 0.0
      %371 = vmatpush1.msra.mxu0 0.0
      %372 = vmatprep.subr.mxu0 0.0
      %373 = vmatpush1.msra.mxu0 0.0
      %374 = vmatprep.mubr.f32.mxu0 0.0
      %375 = vmatmul.mubr.f32.gmra.mrb[0].mxu0 %v279
      %v376 = vpop.f32.mrb[0].mxu0
      %v377 = vadd.f32 %v308, %v376
      %v378 = vpop.f32.mrb[0].mxu0
      %379 = vmatprep.mubr.f32.mxu0 0.0
      %380 = vmatmul.mubr.f32.gmra.mrb[0].mxu0 %v280
      %v381 = vpop.f32.mrb[0].mxu0
      %v382 = vadd.f32 %v308, %v381
      %v383 = vpop.f32.mrb[0].mxu0
      %384 = vmatprep.mubr.f32.mxu0 0.0
      %385 = vmatmul.mubr.f32.gmra.mrb[0].mxu0 %v281
      %v386 = vpop.f32.mrb[0].mxu0
      %v387 = vadd.f32 %v308, %v386
      %v388 = vpop.f32.mrb[0].mxu0
      %389 = vmatprep.mubr.f32.mxu0 0.0
      %390 = vmatmul.mubr.f32.gmra.mrb[0].mxu0 %v282
      %v391 = vpop.f32.mrb[0].mxu0
      %v392 = vadd.f32 %v308, %v391
      %v393 = vpop.f32.mrb[0].mxu0
      %394 = vmatprep.mubr.f32.mxu0 0.0
      %395 = vmatmul.mubr.f32.gmra.mrb[0].mxu0 %v283
      %v396 = vpop.f32.mrb[0].mxu0
      %v397 = vadd.f32 %v308, %v396
      %v398 = vpop.f32.mrb[0].mxu0
      %399 = vmatprep.mubr.f32.mxu0 0.0
      %400 = vmatmul.mubr.f32.gmra.mrb[0].mxu0 %v284
      %v401 = vpop.f32.mrb[0].mxu0
      %v402 = vadd.f32 %v308, %v401
      %v403 = vpop.f32.mrb[0].mxu0
      %404 = vmatprep.mubr.f32.mxu0 0.0
      %405 = vmatmul.mubr.f32.gmra.mrb[0].mxu0 %v285
      %v406 = vpop.f32.mrb[0].mxu0
      %v407 = vadd.f32 %v308, %v406
      %v408 = vpop.f32.mrb[0].mxu0
      %409 = vmatprep.mubr.f32.mxu0 0.0
      %410 = vmatmul.mubr.f32.gmra.mrb[0].mxu0 %v286
      %v411 = vpop.f32.mrb[0].mxu0
      %v412 = vadd.f32 %v308, %v411
      %v413 = vpop.f32.mrb[0].mxu0
      %414 = vdwg.mxu0
      %415 = vst [vmem:[%s277] sm:$0xff] %v377
      %416 = vst [vmem:[%s277 + $0x8] sm:$0xff] %v382
      %417 = vst [vmem:[%s277 + $0x10] sm:$0xff] %v387
      %418 = vst [vmem:[%s277 + $0x18] sm:$0xff] %v392
      %419 = vst [vmem:[%s277 + $0x20] sm:$0xff] %v397
      %420 = vst [vmem:[%s277 + $0x28] sm:$0xff] %v402
      %421 = vst [vmem:[%s277 + $0x30] sm:$0xff] %v407
      %422 = vst [vmem:[%s277 + $0x38] sm:$0xff] %v412
      %s423 = smul.u32 8, %s21
      %p424 = scmp.lt.s32.totalorder %s19, 0
      %s425 = scalar_select %p424, %s19, 0
      %p426 = scmp.lt.s32.totalorder %s423, 15
      %s427 = scalar_select %p426, %s423, 15
      %p428 = scmp.lt.s32.totalorder %s20, 0
      %s429 = scalar_select %p428, %s20, 0
      %s430 = sadd.s32 %s429, %s427
      %s431 = smul.addr %s425, 16
      %s432 = sadd.s32 %s430, %s431
      %s433 = smul.addr %s432, 8
      %s434 = scalar_lea.vmem %s3, %s433
      // Predicated region
      $region33: #{forward.11} parent=31 // pred_check
        %p435 = pneg %p139
      $region34: #{forward.11} parent=31 // pred_check_branch
        %437 = sbr.rel (%p435) target = $region36
      $region35: #{forward.11} parent=31 // pred_region
        %s438 = smul.u32 8, %s21
      $region36: #{forward.11} parent=31 // pred_fallthru
        _
    $region32: #{forward.11} parent=5 // pred_fallthru
      _
    %p439 = scmp.le.s32.totalorder 2, %s9
    // Predicated region
    $region37: #{forward.11} parent=5 // pred_check
      %p440 = pneg %p439
    $region38: #{forward.11} parent=5 // pred_check_branch
      %442 = sbr.rel (%p440) target = $region40
    $region39: #{forward.11} parent=5 // pred_region
      %s443 = ssub.s32 %s9, 2
      // Predicated region
      $region41: #{forward.11} parent=39 // pred_check
        %p444 = pneg %p145
      $region42: #{forward.11} parent=39 // pred_check_branch
        %446 = sbr.rel (%p444) target = $region44
      $region43: #{forward.11} parent=39 // pred_region
        %s447 = smul.u32 8, %s24
        %p448 = scmp.lt.s32.totalorder %s22, 0
        %s449 = scalar_select %p448, %s22, 0
        %p450 = scmp.lt.s32.totalorder %s447, 15
        %s451 = scalar_select %p450, %s447, 15
        %p452 = scmp.lt.s32.totalorder %s23, 0
        %s453 = scalar_select %p452, %s23, 0
        %s454 = sadd.s32 %s453, %s451
        %s455 = smul.addr %s449, 16
        %s456 = sadd.s32 %s454, %s455
        %s457 = smul.addr %s456, 8
        %s458 = scalar_lea.vmem %s3, %s457
      $region44: #{forward.11} parent=39 // pred_fallthru
        _
    $region40: #{forward.11} parent=5 // pred_fallthru
      _
  $region6: #{forward.11} parent=0 // loop_footer
    %s13 = sadd.s32 1, %s9
  $region7: #{forward.11} parent=0 // loop_footer_branch
    %8 = sbr.rel target = $region3
  $region8: #{forward.11} parent=0 // loop_exit
    _

// kernel: forward.7
$region0: #{forward.7}
  #allocation0 [shape = 'u32[]', space=smem, size = 0x4, offset = 0x4, fixed_abs, tag = 'smem constant byte address 0x4 - core index']
  #allocation1 [shape = 'u32[144,128]{1,0:T(1,128)}', space=vmem, size = 0x12000, scoped, tag = 'internal scratch']
  %s0 = inlined_call_operand.vmem [shape: f32[1,2,74,16], index: 0, kind: input, shape index: {}]
  %s1 = inlined_call_operand.vmem [shape: f32[1,11,16,128], index: 1, kind: input, shape index: {}]
  %s2 = inlined_call_operand.vmem [shape: f32[1,1,128], index: 2, kind: input, shape index: {}]
  %s3 = inlined_call_operand.vmem [shape: f32[1,128,128], index: 3, kind: output, shape index: {}]
  %s4 = sld [smem:[#allocation0]]
  $region45: #{forward.7} parent=0
    _
  %s6 = ssub.s32 1, %s4
  %s7 = scalar_select 0, %s6, %s4
  loop: start=0, step=1, limit=4
  $region2: #{forward.7} parent=0 // loop_pre_header
    _
  $region3: #{forward.7} parent=0 // loop_header
    %s9 = sphi 0, %s13
    %p10 = scmp.ge.s32.totalorder %s9, 4
    %s16 = sphi 0, %s35
    %s17 = sphi 0, %s31
    %s18 = sphi 0, %s27
    %s19 = sphi 0, %s16
    %s20 = sphi 0, %s17
    %s21 = sphi 0, %s18
    %s22 = sphi 0, %s19
    %s23 = sphi 0, %s20
    %s24 = sphi 0, %s21
    %s40 = sphi 0, %s42
    %s43 = sphi 0, %s40
    %s44 = sphi 0, %s43
    %s60 = sphi 0, %s44
    %s68 = sphi 0, %s70
    %s71 = sphi 0, %s68
    %s72 = sphi 0, %s71
    %s88 = sphi 0, %s72
    %s96 = sphi 0, %s98
    %s99 = sphi 0, %s96
    %s100 = sphi 0, %s99
    %s116 = sphi 0, %s100
    %s126 = sphi 0, %s128
    %s129 = sphi 0, %s126
    %s130 = sphi 0, %s129
    %s146 = sphi 0, %s130
  $region4: #{forward.7} parent=0 // loop_header_branch
    %12 = sbr.rel (%p10) target = $region8
  $region5: #{forward.7} parent=0 // loop_body
    %s14 = ssub.s32 %s9, 1
    %s15 = ssub.s32 %s9, 2
    %s25 = sadd.s32 1, %s18
    %p26 = scmp.ge.s32.totalorder %s25, 2
    %s27 = scalar_select %p26, 0, %s25
    %s28 = sadd.s32 1, %s17
    %s29 = scalar_select %p26, %s28, %s17
    %p30 = scmp.ge.s32.totalorder %s29, 1
    %s31 = scalar_select %p30, 0, %s29
    %s32 = sadd.s32 1, %s16
    %s33 = scalar_select %p30, %s32, %s16
    %p34 = scmp.ge.s32.totalorder %s33, 1
    %s35 = scalar_select %p34, 0, %s33
    %s36 = ssub.s32 %s16, %s35
    %s37 = ssub.s32 %s18, %s27
    %s38 = sor.u32 %s36, %s37
    %p39 = scmp.eq.s32.totalorder %s38, 0
    %s41 = sadd.s32 %s40, 1
    %s42 = scalar_select %p39, %s40, %s41
    %p45 = pneg %p39
    %p46 = scmp.eq.s32.totalorder %s9, 1
    %p47 = por %p45, %p46
    %p48 = scmp.ne.s32.totalorder %s40, %s43
    %p49 = scmp.eq.s32.totalorder %s9, 0
    %p50 = por %p48, %p49
    %p51 = scmp.ne.s32.totalorder %s40, %s43
    %p52 = scmp.eq.s32.totalorder %s14, 1
    %p53 = por %p51, %p52
    %p54 = scmp.ne.s32.totalorder %s43, %s44
    %p55 = scmp.eq.s32.totalorder %s14, 0
    %p56 = por %p54, %p55
    %p57 = scmp.ne.s32.totalorder %s43, %s44
    %p58 = scmp.eq.s32.totalorder %s15, 1
    %p59 = por %p57, %p58
    %p61 = scmp.ne.s32.totalorder %s44, %s60
    %p62 = scmp.eq.s32.totalorder %s15, 0
    %p63 = por %p61, %p62
    %s64 = ssub.s32 %s16, %s35
    %s65 = ssub.s32 %s17, %s31
    %s66 = sor.u32 %s64, %s65
    %p67 = scmp.eq.s32.totalorder %s66, 0
    %s69 = sadd.s32 %s68, 1
    %s70 = scalar_select %p67, %s68, %s69
    %p73 = pneg %p67
    %p74 = scmp.eq.s32.totalorder %s9, 1
    %p75 = por %p73, %p74
    %p76 = scmp.ne.s32.totalorder %s68, %s71
    %p77 = scmp.eq.s32.totalorder %s9, 0
    %p78 = por %p76, %p77
    %p79 = scmp.ne.s32.totalorder %s68, %s71
    %p80 = scmp.eq.s32.totalorder %s14, 1
    %p81 = por %p79, %p80
    %p82 = scmp.ne.s32.totalorder %s71, %s72
    %p83 = scmp.eq.s32.totalorder %s14, 0
    %p84 = por %p82, %p83
    %p85 = scmp.ne.s32.totalorder %s71, %s72
    %p86 = scmp.eq.s32.totalorder %s15, 1
    %p87 = por %p85, %p86
    %p89 = scmp.ne.s32.totalorder %s72, %s88
    %p90 = scmp.eq.s32.totalorder %s15, 0
    %p91 = por %p89, %p90
    %s92 = ssub.s32 %s16, %s35
    %s93 = ssub.s32 %s17, %s31
    %s94 = sor.u32 %s92, %s93
    %p95 = scmp.eq.s32.totalorder %s94, 0
    %s97 = sadd.s32 %s96, 1
    %s98 = scalar_select %p95, %s96, %s97
    %p101 = pneg %p95
    %p102 = scmp.eq.s32.totalorder %s9, 1
    %p103 = por %p101, %p102
    %p104 = scmp.ne.s32.totalorder %s96, %s99
    %p105 = scmp.eq.s32.totalorder %s9, 0
    %p106 = por %p104, %p105
    %p107 = scmp.ne.s32.totalorder %s96, %s99
    %p108 = scmp.eq.s32.totalorder %s14, 1
    %p109 = por %p107, %p108
    %p110 = scmp.ne.s32.totalorder %s99, %s100
    %p111 = scmp.eq.s32.totalorder %s14, 0
    %p112 = por %p110, %p111
    %p113 = scmp.ne.s32.totalorder %s99, %s100
    %p114 = scmp.eq.s32.totalorder %s15, 1
    %p115 = por %p113, %p114
    %p117 = scmp.ne.s32.totalorder %s100, %s116
    %p118 = scmp.eq.s32.totalorder %s15, 0
    %p119 = por %p117, %p118
    %s120 = ssub.s32 %s16, %s35
    %s121 = ssub.s32 %s18, %s27
    %s122 = sor.u32 %s120, %s121
    %s123 = ssub.s32 %s17, %s31
    %s124 = sor.u32 %s122, %s123
    %p125 = scmp.eq.s32.totalorder %s124, 0
    %s127 = sadd.s32 %s126, 1
    %s128 = scalar_select %p125, %s126, %s127
    %p131 = pneg %p125
    %p132 = scmp.eq.s32.totalorder %s9, 1
    %p133 = por %p131, %p132
    %p134 = scmp.ne.s32.totalorder %s126, %s129
    %p135 = scmp.eq.s32.totalorder %s9, 0
    %p136 = por %p134, %p135
    %p137 = scmp.ne.s32.totalorder %s126, %s129
    %p138 = scmp.eq.s32.totalorder %s14, 1
    %p139 = por %p137, %p138
    %p140 = scmp.ne.s32.totalorder %s129, %s130
    %p141 = scmp.eq.s32.totalorder %s14, 0
    %p142 = por %p140, %p141
    %p143 = scmp.ne.s32.totalorder %s129, %s130
    %p144 = scmp.eq.s32.totalorder %s15, 1
    %p145 = por %p143, %p144
    %p147 = scmp.ne.s32.totalorder %s130, %s146
    %p148 = scmp.eq.s32.totalorder %s15, 0
    %p149 = por %p147, %p148
    %p150 = scmp.le.s32.totalorder 1, %s9
    %p151 = scmp.lt.s32.totalorder %s9, 3
    %p152 = pnand %p150, %p151
    %p153 = pneg %p152
    // Predicated region
    $region9: #{forward.7} parent=5 // pred_check
      _
    $region10: #{forward.7} parent=5 // pred_check_branch
      %155 = sbr.rel (%p152) target = $region12
    $region11: #{forward.7} parent=5 // pred_region
      %s156 = ssub.s32 %s9, 1
      // Predicated region
      $region13: #{forward.7} parent=11 // pred_check
        %p157 = pneg %p84
      $region14: #{forward.7} parent=11 // pred_check_branch
        %159 = sbr.rel (%p157) target = $region16
      $region15: #{forward.7} parent=11 // pred_region
        %p160 = scmp.lt.s32.totalorder %s19, 0
        %s161 = scalar_select %p160, %s19, 0
        %p162 = scmp.lt.s32.totalorder %s20, 0
        %s163 = scalar_select %p162, %s20, 0
        %s164 = smul.addr %s161, 22
        %s165 = sadd.s32 %s163, %s164
        %s166 = smul.addr %s165, 8
        %s167 = scalar_lea.vmem %s1, %s166
      $region16: #{forward.7} parent=11 // pred_fallthru
        _
      // Predicated region
      $region17: #{forward.7} parent=11 // pred_check
        %p168 = pneg %p112
      $region18: #{forward.7} parent=11 // pred_check_branch
        %170 = sbr.rel (%p168) target = $region20
      $region19: #{forward.7} parent=11 // pred_region
        %p171 = scmp.lt.s32.totalorder %s19, 0
        %s172 = scalar_select %p171, %s19, 0
        %p173 = scmp.lt.s32.totalorder %s20, 0
        %s174 = scalar_select %p173, %s20, 0
        %s175 = sadd.s32 %s174, %s172
        %s176 = scalar_lea.vmem %s2, %s175
      $region20: #{forward.7} parent=11 // pred_fallthru
        _
    $region12: #{forward.7} parent=5 // pred_fallthru
      _
    %p177 = scmp.lt.s32.totalorder %s9, 2
    // Predicated region
    $region21: #{forward.7} parent=5 // pred_check
      %p178 = pneg %p177
    $region22: #{forward.7} parent=5 // pred_check_branch
      %180 = sbr.rel (%p178) target = $region24
    $region23: #{forward.7} parent=5 // pred_region
      // Predicated region
      $region25: #{forward.7} parent=23 // pred_check
        %p181 = pneg %p50
      $region26: #{forward.7} parent=23 // pred_check_branch
        %183 = sbr.rel (%p181) target = $region28
      $region27: #{forward.7} parent=23 // pred_region
        %p184 = scmp.lt.s32.totalorder %s16, 0
        %s185 = scalar_select %p184, %s16, 0
        %p186 = scmp.lt.s32.totalorder %s18, 1
        %s187 = scalar_select %p186, %s18, 1
        %s188 = smul.addr %s187, 10
        %s189 = smul.addr %s185, 20
        %s190 = sadd.s32 %s188, %s189
        %s191 = smul.addr %s190, 8
        %s192 = scalar_lea.vmem %s0, %s191
      $region28: #{forward.7} parent=23 // pred_fallthru
        _
    $region24: #{forward.7} parent=5 // pred_fallthru
      _
    %p193 = scmp.le.s32.totalorder 1, %s9
    %p194 = scmp.lt.s32.totalorder %s9, 3
    %p195 = pnand %p193, %p194
    %p196 = pneg %p195
    // Predicated region
    $region29: #{forward.7} parent=5 // pred_check
      _
    $region30: #{forward.7} parent=5 // pred_check_branch
      %198 = sbr.rel (%p195) target = $region32
    $region31: #{forward.7} parent=5 // pred_region
      %s199 = ssub.s32 %s9, 1
      %p200 = scmp.lt.s32.totalorder %s19, 0
      %s201 = scalar_select %p200, %s19, 0
      %p202 = scmp.lt.s32.totalorder %s21, 1
      %s203 = scalar_select %p202, %s21, 1
      %s204 = smul.addr %s203, 10
      %s205 = smul.addr %s201, 20
      %s206 = sadd.s32 %s204, %s205
      %s207 = smul.addr %s206, 8
      %s208 = scalar_lea.vmem %s0, %s207
      %p209 = pneg %p56
      %p210 = pneg %p53
      %p211 = scmp.lt.s32.totalorder %s19, 0
      %s212 = scalar_select %p211, %s19, 0
      %p213 = scmp.lt.s32.totalorder %s20, 0
      %s214 = scalar_select %p213, %s20, 0
      %s215 = smul.addr %s212, 22
      %s216 = sadd.s32 %s214, %s215
      %s217 = smul.addr %s216, 8
      %s218 = scalar_lea.vmem %s1, %s217
      %p219 = pneg %p84
      %p220 = pneg %p81
      %p221 = scmp.lt.s32.totalorder %s19, 0
      %s222 = scalar_select %p221, %s19, 0
      %p223 = scmp.lt.s32.totalorder %s20, 0
      %s224 = scalar_select %p223, %s20, 0
      %s225 = sadd.s32 %s224, %s222
      %s226 = scalar_lea.vmem %s2, %s225
      %p227 = pneg %p112
      %p228 = pneg %p109
      %p229 = pneg %p142
      %p230 = pneg %p139
      %s231 = smul.u32 8, %s21
      %p232 = scmp.lt.s32.totalorder %s19, 0
      %s233 = scalar_select %p232, %s19, 0
      %p234 = scmp.lt.s32.totalorder %s231, 15
      %s235 = scalar_select %p234, %s231, 15
      %p236 = scmp.lt.s32.totalorder %s20, 0
      %s237 = scalar_select %p236, %s20, 0
      %s238 = sadd.s32 %s237, %s235
      %s239 = smul.addr %s233, 16
      %s240 = sadd.s32 %s238, %s239
      %s241 = smul.addr %s240, 8
      %s242 = scalar_lea.vmem %s3, %s241
      %p243 = scmp.lt.s32.totalorder %s19, 0
      %s244 = scalar_select %p243, %s19, 0
      %p245 = scmp.lt.s32.totalorder %s21, 1
      %s246 = scalar_select %p245, %s21, 1
      %s247 = smul.addr %s246, 10
      %s248 = smul.addr %s244, 20
      %s249 = sadd.s32 %s247, %s248
      %s250 = smul.addr %s249, 8
      %s251 = scalar_lea.vmem %s0, %s250
      %p252 = scmp.lt.s32.totalorder %s19, 0
      %s253 = scalar_select %p252, %s19, 0
      %p254 = scmp.lt.s32.totalorder %s20, 0
      %s255 = scalar_select %p254, %s20, 0
      %s256 = smul.addr %s253, 22
      %s257 = sadd.s32 %s255, %s256
      %s258 = smul.addr %s257, 8
      %s259 = scalar_lea.vmem %s1, %s258
      %p260 = scmp.lt.s32.totalorder %s19, 0
      %s261 = scalar_select %p260, %s19, 0
      %p262 = scmp.lt.s32.totalorder %s20, 0
      %s263 = scalar_select %p262, %s20, 0
      %s264 = sadd.s32 %s263, %s261
      %s265 = scalar_lea.vmem %s2, %s264
      %s266 = smul.u32 8, %s21
      %p267 = scmp.lt.s32.totalorder %s19, 0
      %s268 = scalar_select %p267, %s19, 0
      %p269 = scmp.lt.s32.totalorder %s266, 15
      %s270 = scalar_select %p269, %s266, 15
      %p271 = scmp.lt.s32.totalorder %s20, 0
      %s272 = scalar_select %p271, %s20, 0
      %s273 = sadd.s32 %s272, %s270
      %s274 = smul.addr %s268, 16
      %s275 = sadd.s32 %s273, %s274
      %s276 = smul.addr %s275, 8
      %s277 = scalar_lea.vmem %s3, %s276
      %s278 = smul.u32 8, %s21
      %v279 = vld [vmem:[%s251] sm:$0xff]
      %v280 = vld [vmem:[%s251 + $0x8] sm:$0xff]
      %v281 = vld [vmem:[%s251 + $0x10] sm:$0xff]
      %v282 = vld [vmem:[%s251 + $0x18] sm:$0xff]
      %v283 = vld [vmem:[%s251 + $0x20] sm:$0xff]
      %v284 = vld [vmem:[%s251 + $0x28] sm:$0xff]
      %v285 = vld [vmem:[%s251 + $0x30] sm:$0xff]
      %v286 = vld [vmem:[%s251 + $0x38] sm:$0xff]
      %v287 = vld [vmem:[%s259] sm:$0xff]
      %v288 = vld [vmem:[%s259 + $0x8] sm:$0xff]
      %v289 = vld [vmem:[%s251 + $0x1] sm:$0xff]
      %v290 = vld [vmem:[%s251 + $0x9] sm:$0xff]
      %v291 = vld [vmem:[%s251 + $0x11] sm:$0xff]
      %v292 = vld [vmem:[%s251 + $0x19] sm:$0xff]
      %v293 = vld [vmem:[%s251 + $0x21] sm:$0xff]
      %v294 = vld [vmem:[%s251 + $0x29] sm:$0xff]
      %v295 = vld [vmem:[%s251 + $0x31] sm:$0xff]
      %v296 = vld [vmem:[%s251 + $0x39] sm:$0xff]
      %s297 = scalar_lea.vmem %s259, 16
      %v298 = vld [vmem:[%s297] sm:$0xff]
      %v299 = vld [vmem:[%s297 + $0x8] sm:$0xff]
      %vm300 = vcmask 130048
      %v302 = vsel %vm300, %v289, 0
      %v305 = vsel %vm300, %v290, 0
      %v308 = vsel %vm300, %v291, 0
      %v311 = vsel %vm300, %v292, 0
      %v314 = vsel %vm300, %v293, 0
      %v317 = vsel %vm300, %v294, 0
      %v320 = vsel %vm300, %v295, 0
      %v323 = vsel %vm300, %v296, 0
      %325 = vmatprep.subr.mxu0 0.0
      %326 = vmatpush1.msra.mxu0 %v298
      %327 = vmatprep.subr.mxu0 0.0
      %328 = vmatpush1.msra.mxu0 %v299
      %329 = vmatprep.subr.mxu0 0.0
      %330 = vmatpush1.msra.mxu0 0.0
      %331 = vmatprep.subr.mxu0 0.0
      %332 = vmatpush1.msra.mxu0 0.0
      %333 = vmatprep.subr.mxu0 0.0
      %334 = vmatpush1.msra.mxu0 0.0
      %335 = vmatprep.subr.mxu0 0.0
      %336 = vmatpush1.msra.mxu0 0.0
      %337 = vmatprep.subr.mxu0 0.0
      %338 = vmatpush1.msra.mxu0 0.0
      %339 = vmatprep.subr.mxu0 0.0
      %340 = vmatpush1.msra.mxu0 0.0
      %341 = vmatprep.subr.mxu0 0.0
      %342 = vmatpush1.msra.mxu0 0.0
      %343 = vmatprep.subr.mxu0 0.0
      %344 = vmatpush1.msra.mxu0 0.0
      %345 = vmatprep.subr.mxu0 0.0
      %346 = vmatpush1.msra.mxu0 0.0
      %347 = vmatprep.subr.mxu0 0.0
      %348 = vmatpush1.msra.mxu0 0.0
      %349 = vmatprep.subr.mxu0 0.0
      %350 = vmatpush1.msra.mxu0 0.0
      %351 = vmatprep.subr.mxu0 0.0
      %352 = vmatpush1.msra.mxu0 0.0
      %353 = vmatprep.subr.mxu0 0.0
      %354 = vmatpush1.msra.mxu0 0.0
      %355 = vmatprep.subr.mxu0 0.0
      %356 = vmatpush1.msra.mxu0 0.0
      %357 = vmatprep.subr.mxu0 0.0
      %358 = vmatpush1.msra.mxu0 0.0
      %359 = vmatprep.subr.mxu0 0.0
      %360 = vmatpush1.msra.mxu0 0.0
      %361 = vmatprep.subr.mxu0 0.0
      %362 = vmatpush1.msra.mxu0 0.0
      %363 = vmatprep.subr.mxu0 0.0
      %364 = vmatpush1.msra.mxu0 0.0
      %365 = vmatprep.subr.mxu0 0.0
      %366 = vmatpush1.msra.mxu0 0.0
      %367 = vmatprep.subr.mxu0 0.0
      %368 = vmatpush1.msra.mxu0 0.0
      %369 = vmatprep.subr.mxu0 0.0
      %370 = vmatpush1.msra.mxu0 0.0
      %371 = vmatprep.subr.mxu0 0.0
      %372 = vmatpush1.msra.mxu0 0.0
      %373 = vmatprep.subr.mxu0 0.0
      %374 = vmatpush1.msra.mxu0 0.0
      %375 = vmatprep.subr.mxu0 0.0
      %376 = vmatpush1.msra.mxu0 0.0
      %377 = vmatprep.subr.mxu0 0.0
      %378 = vmatpush1.msra.mxu0 0.0
      %379 = vmatprep.subr.mxu0 0.0
      %380 = vmatpush1.msra.mxu0 0.0
      %381 = vmatprep.subr.mxu0 0.0
      %382 = vmatpush1.msra.mxu0 0.0
      %383 = vmatprep.subr.mxu0 0.0
      %384 = vmatpush1.msra.mxu0 0.0
      %385 = vmatprep.subr.mxu0 0.0
      %386 = vmatpush1.msra.mxu0 0.0
      %387 = vmatprep.subr.mxu0 0.0
      %388 = vmatpush1.msra.mxu0 0.0
      %389 = vmatprep.mubr.f32.mxu0 0.0
      %390 = vmatmul.mubr.f32.gmra.mrb[0].mxu0 %v302
      %v391 = vpop.f32.mrb[0].mxu0
      %v392 = vadd.f32 0.0, %v391
      %v393 = vpop.f32.mrb[0].mxu0
      %394 = vmatprep.mubr.f32.mxu0 0.0
      %395 = vmatmul.mubr.f32.gmra.mrb[0].mxu0 %v305
      %v396 = vpop.f32.mrb[0].mxu0
      %v397 = vadd.f32 0.0, %v396
      %v398 = vpop.f32.mrb[0].mxu0
      %399 = vmatprep.mubr.f32.mxu0 0.0
      %400 = vmatmul.mubr.f32.gmra.mrb[0].mxu0 %v308
      %v401 = vpop.f32.mrb[0].mxu0
      %v402 = vadd.f32 0.0, %v401
      %v403 = vpop.f32.mrb[0].mxu0
      %404 = vmatprep.mubr.f32.mxu0 0.0
      %405 = vmatmul.mubr.f32.gmra.mrb[0].mxu0 %v311
      %v406 = vpop.f32.mrb[0].mxu0
      %v407 = vadd.f32 0.0, %v406
      %v408 = vpop.f32.mrb[0].mxu0
      %409 = vmatprep.mubr.f32.mxu0 0.0
      %410 = vmatmul.mubr.f32.gmra.mrb[0].mxu0 %v314
      %v411 = vpop.f32.mrb[0].mxu0
      %v412 = vadd.f32 0.0, %v411
      %v413 = vpop.f32.mrb[0].mxu0
      %414 = vmatprep.mubr.f32.mxu0 0.0
      %415 = vmatmul.mubr.f32.gmra.mrb[0].mxu0 %v317
      %v416 = vpop.f32.mrb[0].mxu0
      %v417 = vadd.f32 0.0, %v416
      %v418 = vpop.f32.mrb[0].mxu0
      %419 = vmatprep.mubr.f32.mxu0 0.0
      %420 = vmatmul.mubr.f32.gmra.mrb[0].mxu0 %v320
      %v421 = vpop.f32.mrb[0].mxu0
      %v422 = vadd.f32 0.0, %v421
      %v423 = vpop.f32.mrb[0].mxu0
      %424 = vmatprep.mubr.f32.mxu0 0.0
      %425 = vmatmul.mubr.f32.gmra.mrb[0].mxu0 %v323
      %v426 = vpop.f32.mrb[0].mxu0
      %v427 = vadd.f32 0.0, %v426
      %v428 = vpop.f32.mrb[0].mxu0
      %429 = vdwg.mxu0
      %v431 = vsel %vm300, %v279, 0
      %v434 = vsel %vm300, %v280, 0
      %v437 = vsel %vm300, %v281, 0
      %v440 = vsel %vm300, %v282, 0
      %v443 = vsel %vm300, %v283, 0
      %v446 = vsel %vm300, %v284, 0
      %v449 = vsel %vm300, %v285, 0
      %v452 = vsel %vm300, %v286, 0
      %454 = vmatprep.subr.mxu0 0.0
      %455 = vmatpush1.msra.mxu0 %v287
      %456 = vmatprep.subr.mxu0 0.0
      %457 = vmatpush1.msra.mxu0 %v288
      %458 = vmatprep.subr.mxu0 0.0
      %459 = vmatpush1.msra.mxu0 0.0
      %460 = vmatprep.subr.mxu0 0.0
      %461 = vmatpush1.msra.mxu0 0.0
      %462 = vmatprep.subr.mxu0 0.0
      %463 = vmatpush1.msra.mxu0 0.0
      %464 = vmatprep.subr.mxu0 0.0
      %465 = vmatpush1.msra.mxu0 0.0
      %466 = vmatprep.subr.mxu0 0.0
      %467 = vmatpush1.msra.mxu0 0.0
      %468 = vmatprep.subr.mxu0 0.0
      %469 = vmatpush1.msra.mxu0 0.0
      %470 = vmatprep.subr.mxu0 0.0
      %471 = vmatpush1.msra.mxu0 0.0
      %472 = vmatprep.subr.mxu0 0.0
      %473 = vmatpush1.msra.mxu0 0.0
      %474 = vmatprep.subr.mxu0 0.0
      %475 = vmatpush1.msra.mxu0 0.0
      %476 = vmatprep.subr.mxu0 0.0
      %477 = vmatpush1.msra.mxu0 0.0
      %478 = vmatprep.subr.mxu0 0.0
      %479 = vmatpush1.msra.mxu0 0.0
      %480 = vmatprep.subr.mxu0 0.0
      %481 = vmatpush1.msra.mxu0 0.0
      %482 = vmatprep.subr.mxu0 0.0
      %483 = vmatpush1.msra.mxu0 0.0
      %484 = vmatprep.subr.mxu0 0.0
      %485 = vmatpush1.msra.mxu0 0.0
      %486 = vmatprep.subr.mxu0 0.0
      %487 = vmatpush1.msra.mxu0 0.0
      %488 = vmatprep.subr.mxu0 0.0
      %489 = vmatpush1.msra.mxu0 0.0
      %490 = vmatprep.subr.mxu0 0.0
      %491 = vmatpush1.msra.mxu0 0.0
      %492 = vmatprep.subr.mxu0 0.0
      %493 = vmatpush1.msra.mxu0 0.0
      %494 = vmatprep.subr.mxu0 0.0
      %495 = vmatpush1.msra.mxu0 0.0
      %496 = vmatprep.subr.mxu0 0.0
      %497 = vmatpush1.msra.mxu0 0.0
      %498 = vmatprep.subr.mxu0 0.0
      %499 = vmatpush1.msra.mxu0 0.0
      %500 = vmatprep.subr.mxu0 0.0
      %501 = vmatpush1.msra.mxu0 0.0
      %502 = vmatprep.subr.mxu0 0.0
      %503 = vmatpush1.msra.mxu0 0.0
      %504 = vmatprep.subr.mxu0 0.0
      %505 = vmatpush1.msra.mxu0 0.0
      %506 = vmatprep.subr.mxu0 0.0
      %507 = vmatpush1.msra.mxu0 0.0
      %508 = vmatprep.subr.mxu0 0.0
      %509 = vmatpush1.msra.mxu0 0.0
      %510 = vmatprep.subr.mxu0 0.0
      %511 = vmatpush1.msra.mxu0 0.0
      %512 = vmatprep.subr.mxu0 0.0
      %513 = vmatpush1.msra.mxu0 0.0
      %514 = vmatprep.subr.mxu0 0.0
      %515 = vmatpush1.msra.mxu0 0.0
      %516 = vmatprep.subr.mxu0 0.0
      %517 = vmatpush1.msra.mxu0 0.0
      %518 = vmatprep.mubr.f32.mxu0 0.0
      %519 = vmatmul.mubr.f32.gmra.mrb[0].mxu0 %v431
      %v520 = vpop.f32.mrb[0].mxu0
      %v521 = vadd.f32 %v392, %v520
      %v522 = vpop.f32.mrb[0].mxu0
      %523 = vmatprep.mubr.f32.mxu0 0.0
      %524 = vmatmul.mubr.f32.gmra.mrb[0].mxu0 %v434
      %v525 = vpop.f32.mrb[0].mxu0
      %v526 = vadd.f32 %v397, %v525
      %v527 = vpop.f32.mrb[0].mxu0
      %528 = vmatprep.mubr.f32.mxu0 0.0
      %529 = vmatmul.mubr.f32.gmra.mrb[0].mxu0 %v437
      %v530 = vpop.f32.mrb[0].mxu0
      %v531 = vadd.f32 %v402, %v530
      %v532 = vpop.f32.mrb[0].mxu0
      %533 = vmatprep.mubr.f32.mxu0 0.0
      %534 = vmatmul.mubr.f32.gmra.mrb[0].mxu0 %v440
      %v535 = vpop.f32.mrb[0].mxu0
      %v536 = vadd.f32 %v407, %v535
      %v537 = vpop.f32.mrb[0].mxu0
      %538 = vmatprep.mubr.f32.mxu0 0.0
      %539 = vmatmul.mubr.f32.gmra.mrb[0].mxu0 %v443
      %v540 = vpop.f32.mrb[0].mxu0
      %v541 = vadd.f32 %v412, %v540
      %v542 = vpop.f32.mrb[0].mxu0
      %543 = vmatprep.mubr.f32.mxu0 0.0
      %544 = vmatmul.mubr.f32.gmra.mrb[0].mxu0 %v446
      %v545 = vpop.f32.mrb[0].mxu0
      %v546 = vadd.f32 %v417, %v545
      %v547 = vpop.f32.mrb[0].mxu0
      %548 = vmatprep.mubr.f32.mxu0 0.0
      %549 = vmatmul.mubr.f32.gmra.mrb[0].mxu0 %v449
      %v550 = vpop.f32.mrb[0].mxu0
      %v551 = vadd.f32 %v422, %v550
      %v552 = vpop.f32.mrb[0].mxu0
      %553 = vmatprep.mubr.f32.mxu0 0.0
      %554 = vmatmul.mubr.f32.gmra.mrb[0].mxu0 %v452
      %v555 = vpop.f32.mrb[0].mxu0
      %v556 = vadd.f32 %v427, %v555
      %v557 = vpop.f32.mrb[0].mxu0
      %558 = vdwg.mxu0
      %v559 = vld [vmem:[%s251 + $0x2] sm:$0xff]
      %v560 = vld [vmem:[%s251 + $0xa] sm:$0xff]
      %v561 = vld [vmem:[%s251 + $0x12] sm:$0xff]
      %v562 = vld [vmem:[%s251 + $0x1a] sm:$0xff]
      %v563 = vld [vmem:[%s251 + $0x22] sm:$0xff]
      %v564 = vld [vmem:[%s251 + $0x2a] sm:$0xff]
      %v565 = vld [vmem:[%s251 + $0x32] sm:$0xff]
      %v566 = vld [vmem:[%s251 + $0x3a] sm:$0xff]
      %s567 = scalar_lea.vmem %s259, 32
      %v568 = vld [vmem:[%s567] sm:$0xff]
      %v569 = vld [vmem:[%s567 + $0x8] sm:$0xff]
      %v571 = vsel %vm300, %v559, 0
      %v574 = vsel %vm300, %v560, 0
      %v577 = vsel %vm300, %v561, 0
      %v580 = vsel %vm300, %v562, 0
      %v583 = vsel %vm300, %v563, 0
      %v586 = vsel %vm300, %v564, 0
      %v589 = vsel %vm300, %v565, 0
      %v592 = vsel %vm300, %v566, 0
      %594 = vmatprep.subr.mxu0 0.0
      %595 = vmatpush1.msra.mxu0 %v568
      %596 = vmatprep.subr.mxu0 0.0
      %597 = vmatpush1.msra.mxu0 %v569
      %598 = vmatprep.subr.mxu0 0.0
      %599 = vmatpush1.msra.mxu0 0.0
      %600 = vmatprep.subr.mxu0 0.0
      %601 = vmatpush1.msra.mxu0 0.0
      %602 = vmatprep.subr.mxu0 0.0
      %603 = vmatpush1.msra.mxu0 0.0
      %604 = vmatprep.subr.mxu0 0.0
      %605 = vmatpush1.msra.mxu0 0.0
      %606 = vmatprep.subr.mxu0 0.0
      %607 = vmatpush1.msra.mxu0 0.0
      %608 = vmatprep.subr.mxu0 0.0
      %609 = vmatpush1.msra.mxu0 0.0
      %610 = vmatprep.subr.mxu0 0.0
      %611 = vmatpush1.msra.mxu0 0.0
      %612 = vmatprep.subr.mxu0 0.0
      %613 = vmatpush1.msra.mxu0 0.0
      %614 = vmatprep.subr.mxu0 0.0
      %615 = vmatpush1.msra.mxu0 0.0
      %616 = vmatprep.subr.mxu0 0.0
      %617 = vmatpush1.msra.mxu0 0.0
      %618 = vmatprep.subr.mxu0 0.0
      %619 = vmatpush1.msra.mxu0 0.0
      %620 = vmatprep.subr.mxu0 0.0
      %621 = vmatpush1.msra.mxu0 0.0
      %622 = vmatprep.subr.mxu0 0.0
      %623 = vmatpush1.msra.mxu0 0.0
      %624 = vmatprep.subr.mxu0 0.0
      %625 = vmatpush1.msra.mxu0 0.0
      %626 = vmatprep.subr.mxu0 0.0
      %627 = vmatpush1.msra.mxu0 0.0
      %628 = vmatprep.subr.mxu0 0.0
      %629 = vmatpush1.msra.mxu0 0.0
      %630 = vmatprep.subr.mxu0 0.0
      %631 = vmatpush1.msra.mxu0 0.0
      %632 = vmatprep.subr.mxu0 0.0
      %633 = vmatpush1.msra.mxu0 0.0
      %634 = vmatprep.subr.mxu0 0.0
      %635 = vmatpush1.msra.mxu0 0.0
      %636 = vmatprep.subr.mxu0 0.0
      %637 = vmatpush1.msra.mxu0 0.0
      %638 = vmatprep.subr.mxu0 0.0
      %639 = vmatpush1.msra.mxu0 0.0
      %640 = vmatprep.subr.mxu0 0.0
      %641 = vmatpush1.msra.mxu0 0.0
      %642 = vmatprep.subr.mxu0 0.0
      %643 = vmatpush1.msra.mxu0 0.0
      %644 = vmatprep.subr.mxu0 0.0
      %645 = vmatpush1.msra.mxu0 0.0
      %646 = vmatprep.subr.mxu0 0.0
      %647 = vmatpush1.msra.mxu0 0.0
      %648 = vmatprep.subr.mxu0 0.0
      %649 = vmatpush1.msra.mxu0 0.0
      %650 = vmatprep.subr.mxu0 0.0
      %651 = vmatpush1.msra.mxu0 0.0
      %652 = vmatprep.subr.mxu0 0.0
      %653 = vmatpush1.msra.mxu0 0.0
      %654 = vmatprep.subr.mxu0 0.0
      %655 = vmatpush1.msra.mxu0 0.0
      %656 = vmatprep.subr.mxu0 0.0
      %657 = vmatpush1.msra.mxu0 0.0
      %658 = vmatprep.mubr.f32.mxu0 0.0
      %659 = vmatmul.mubr.f32.gmra.mrb[0].mxu0 %v571
      %v660 = vpop.f32.mrb[0].mxu0
      %v661 = vadd.f32 0.0, %v660
      %v662 = vpop.f32.mrb[0].mxu0
      %663 = vmatprep.mubr.f32.mxu0 0.0
      %664 = vmatmul.mubr.f32.gmra.mrb[0].mxu0 %v574
      %v665 = vpop.f32.mrb[0].mxu0
      %v666 = vadd.f32 0.0, %v665
      %v667 = vpop.f32.mrb[0].mxu0
      %668 = vmatprep.mubr.f32.mxu0 0.0
      %669 = vmatmul.mubr.f32.gmra.mrb[0].mxu0 %v577
      %v670 = vpop.f32.mrb[0].mxu0
      %v671 = vadd.f32 0.0, %v670
      %v672 = vpop.f32.mrb[0].mxu0
      %673 = vmatprep.mubr.f32.mxu0 0.0
      %674 = vmatmul.mubr.f32.gmra.mrb[0].mxu0 %v580
      %v675 = vpop.f32.mrb[0].mxu0
      %v676 = vadd.f32 0.0, %v675
      %v677 = vpop.f32.mrb[0].mxu0
      %678 = vmatprep.mubr.f32.mxu0 0.0
      %679 = vmatmul.mubr.f32.gmra.mrb[0].mxu0 %v583
      %v680 = vpop.f32.mrb[0].mxu0
      %v681 = vadd.f32 0.0, %v680
      %v682 = vpop.f32.mrb[0].mxu0
      %683 = vmatprep.mubr.f32.mxu0 0.0
      %684 = vmatmul.mubr.f32.gmra.mrb[0].mxu0 %v586
      %v685 = vpop.f32.mrb[0].mxu0
      %v686 = vadd.f32 0.0, %v685
      %v687 = vpop.f32.mrb[0].mxu0
      %688 = vmatprep.mubr.f32.mxu0 0.0
      %689 = vmatmul.mubr.f32.gmra.mrb[0].mxu0 %v589
      %v690 = vpop.f32.mrb[0].mxu0
      %v691 = vadd.f32 0.0, %v690
      %v692 = vpop.f32.mrb[0].mxu0
      %693 = vmatprep.mubr.f32.mxu0 0.0
      %694 = vmatmul.mubr.f32.gmra.mrb[0].mxu0 %v592
      %v695 = vpop.f32.mrb[0].mxu0
      %v696 = vadd.f32 0.0, %v695
      %v697 = vpop.f32.mrb[0].mxu0
      %698 = vdwg.mxu0
      %v699 = vadd.f32 %v521, %v661
      %v700 = vadd.f32 %v526, %v666
      %v701 = vadd.f32 %v531, %v671
      %v702 = vadd.f32 %v536, %v676
      %v703 = vadd.f32 %v541, %v681
      %v704 = vadd.f32 %v546, %v686
      %v705 = vadd.f32 %v551, %v691
      %v706 = vadd.f32 %v556, %v696
      %v707 = vld [vmem:[%s251 + $0x3] sm:$0xff]
      %v708 = vld [vmem:[%s251 + $0xb] sm:$0xff]
      %v709 = vld [vmem:[%s251 + $0x13] sm:$0xff]
      %v710 = vld [vmem:[%s251 + $0x1b] sm:$0xff]
      %v711 = vld [vmem:[%s251 + $0x23] sm:$0xff]
      %v712 = vld [vmem:[%s251 + $0x2b] sm:$0xff]
      %v713 = vld [vmem:[%s251 + $0x33] sm:$0xff]
      %v714 = vld [vmem:[%s251 + $0x3b] sm:$0xff]
      %s715 = scalar_lea.vmem %s259, 48
      %v716 = vld [vmem:[%s715] sm:$0xff]
      %v717 = vld [vmem:[%s715 + $0x8] sm:$0xff]
      %v719 = vsel %vm300, %v707, 0
      %v722 = vsel %vm300, %v708, 0
      %v725 = vsel %vm300, %v709, 0
      %v728 = vsel %vm300, %v710, 0
      %v731 = vsel %vm300, %v711, 0
      %v734 = vsel %vm300, %v712, 0
      %v737 = vsel %vm300, %v713, 0
      %v740 = vsel %vm300, %v714, 0
      %742 = vmatprep.subr.mxu0 0.0
      %743 = vmatpush1.msra.mxu0 %v716
      %744 = vmatprep.subr.mxu0 0.0
      %745 = vmatpush1.msra.mxu0 %v717
      %746 = vmatprep.subr.mxu0 0.0
      %747 = vmatpush1.msra.mxu0 0.0
      %748 = vmatprep.subr.mxu0 0.0
      %749 = vmatpush1.msra.mxu0 0.0
      %750 = vmatprep.subr.mxu0 0.0
      %751 = vmatpush1.msra.mxu0 0.0
      %752 = vmatprep.subr.mxu0 0.0
      %753 = vmatpush1.msra.mxu0 0.0
      %754 = vmatprep.subr.mxu0 0.0
      %755 = vmatpush1.msra.mxu0 0.0
      %756 = vmatprep.subr.mxu0 0.0
      %757 = vmatpush1.msra.mxu0 0.0
      %758 = vmatprep.subr.mxu0 0.0
      %759 = vmatpush1.msra.mxu0 0.0
      %760 = vmatprep.subr.mxu0 0.0
      %761 = vmatpush1.msra.mxu0 0.0
      %762 = vmatprep.subr.mxu0 0.0
      %763 = vmatpush1.msra.mxu0 0.0
      %764 = vmatprep.subr.mxu0 0.0
      %765 = vmatpush1.msra.mxu0 0.0
      %766 = vmatprep.subr.mxu0 0.0
      %767 = vmatpush1.msra.mxu0 0.0
      %768 = vmatprep.subr.mxu0 0.0
      %769 = vmatpush1.msra.mxu0 0.0
      %770 = vmatprep.subr.mxu0 0.0
      %771 = vmatpush1.msra.mxu0 0.0
      %772 = vmatprep.subr.mxu0 0.0
      %773 = vmatpush1.msra.mxu0 0.0
      %774 = vmatprep.subr.mxu0 0.0
      %775 = vmatpush1.msra.mxu0 0.0
      %776 = vmatprep.subr.mxu0 0.0
      %777 = vmatpush1.msra.mxu0 0.0
      %778 = vmatprep.subr.mxu0 0.0
      %779 = vmatpush1.msra.mxu0 0.0
      %780 = vmatprep.subr.mxu0 0.0
      %781 = vmatpush1.msra.mxu0 0.0
      %782 = vmatprep.subr.mxu0 0.0
      %783 = vmatpush1.msra.mxu0 0.0
      %784 = vmatprep.subr.mxu0 0.0
      %785 = vmatpush1.msra.mxu0 0.0
      %786 = vmatprep.subr.mxu0 0.0
      %787 = vmatpush1.msra.mxu0 0.0
      %788 = vmatprep.subr.mxu0 0.0
      %789 = vmatpush1.msra.mxu0 0.0
      %790 = vmatprep.subr.mxu0 0.0
      %791 = vmatpush1.msra.mxu0 0.0
      %792 = vmatprep.subr.mxu0 0.0
      %793 = vmatpush1.msra.mxu0 0.0
      %794 = vmatprep.subr.mxu0 0.0
      %795 = vmatpush1.msra.mxu0 0.0
      %796 = vmatprep.subr.mxu0 0.0
      %797 = vmatpush1.msra.mxu0 0.0
      %798 = vmatprep.subr.mxu0 0.0
      %799 = vmatpush1.msra.mxu0 0.0
      %800 = vmatprep.subr.mxu0 0.0
      %801 = vmatpush1.msra.mxu0 0.0
      %802 = vmatprep.subr.mxu0 0.0
      %803 = vmatpush1.msra.mxu0 0.0
      %804 = vmatprep.subr.mxu0 0.0
      %805 = vmatpush1.msra.mxu0 0.0
      %806 = vmatprep.mubr.f32.mxu0 0.0
      %807 = vmatmul.mubr.f32.gmra.mrb[0].mxu0 %v719
      %v808 = vpop.f32.mrb[0].mxu0
      %v809 = vadd.f32 0.0, %v808
      %v810 = vpop.f32.mrb[0].mxu0
      %811 = vmatprep.mubr.f32.mxu0 0.0
      %812 = vmatmul.mubr.f32.gmra.mrb[0].mxu0 %v722
      %v813 = vpop.f32.mrb[0].mxu0
      %v814 = vadd.f32 0.0, %v813
      %v815 = vpop.f32.mrb[0].mxu0
      %816 = vmatprep.mubr.f32.mxu0 0.0
      %817 = vmatmul.mubr.f32.gmra.mrb[0].mxu0 %v725
      %v818 = vpop.f32.mrb[0].mxu0
      %v819 = vadd.f32 0.0, %v818
      %v820 = vpop.f32.mrb[0].mxu0
      %821 = vmatprep.mubr.f32.mxu0 0.0
      %822 = vmatmul.mubr.f32.gmra.mrb[0].mxu0 %v728
      %v823 = vpop.f32.mrb[0].mxu0
      %v824 = vadd.f32 0.0, %v823
      %v825 = vpop.f32.mrb[0].mxu0
      %826 = vmatprep.mubr.f32.mxu0 0.0
      %827 = vmatmul.mubr.f32.gmra.mrb[0].mxu0 %v731
      %v828 = vpop.f32.mrb[0].mxu0
      %v829 = vadd.f32 0.0, %v828
      %v830 = vpop.f32.mrb[0].mxu0
      %831 = vmatprep.mubr.f32.mxu0 0.0
      %832 = vmatmul.mubr.f32.gmra.mrb[0].mxu0 %v734
      %v833 = vpop.f32.mrb[0].mxu0
      %v834 = vadd.f32 0.0, %v833
      %v835 = vpop.f32.mrb[0].mxu0
      %836 = vmatprep.mubr.f32.mxu0 0.0
      %837 = vmatmul.mubr.f32.gmra.mrb[0].mxu0 %v737
      %v838 = vpop.f32.mrb[0].mxu0
      %v839 = vadd.f32 0.0, %v838
      %v840 = vpop.f32.mrb[0].mxu0
      %841 = vmatprep.mubr.f32.mxu0 0.0
      %842 = vmatmul.mubr.f32.gmra.mrb[0].mxu0 %v740
      %v843 = vpop.f32.mrb[0].mxu0
      %v844 = vadd.f32 0.0, %v843
      %v845 = vpop.f32.mrb[0].mxu0
      %846 = vdwg.mxu0
      %v847 = vadd.f32 %v699, %v809
      %v848 = vadd.f32 %v700, %v814
      %v849 = vadd.f32 %v701, %v819
      %v850 = vadd.f32 %v702, %v824
      %v851 = vadd.f32 %v703, %v829
      %v852 = vadd.f32 %v704, %v834
      %v853 = vadd.f32 %v705, %v839
      %v854 = vadd.f32 %v706, %v844
      %v855 = vld [vmem:[%s251 + $0x4] sm:$0xff]
      %v856 = vld [vmem:[%s251 + $0xc] sm:$0xff]
      %v857 = vld [vmem:[%s251 + $0x14] sm:$0xff]
      %v858 = vld [vmem:[%s251 + $0x1c] sm:$0xff]
      %v859 = vld [vmem:[%s251 + $0x24] sm:$0xff]
      %v860 = vld [vmem:[%s251 + $0x2c] sm:$0xff]
      %v861 = vld [vmem:[%s251 + $0x34] sm:$0xff]
      %v862 = vld [vmem:[%s251 + $0x3c] sm:$0xff]
      %s863 = scalar_lea.vmem %s259, 64
      %v864 = vld [vmem:[%s863] sm:$0xff]
      %v865 = vld [vmem:[%s863 + $0x8] sm:$0xff]
      %v867 = vsel %vm300, %v855, 0
      %v870 = vsel %vm300, %v856, 0
      %v873 = vsel %vm300, %v857, 0
      %v876 = vsel %vm300, %v858, 0
      %v879 = vsel %vm300, %v859, 0
      %v882 = vsel %vm300, %v860, 0
      %v885 = vsel %vm300, %v861, 0
      %v888 = vsel %vm300, %v862, 0
      %890 = vmatprep.subr.mxu0 0.0
      %891 = vmatpush1.msra.mxu0 %v864
      %892 = vmatprep.subr.mxu0 0.0
      %893 = vmatpush1.msra.mxu0 %v865
      %894 = vmatprep.subr.mxu0 0.0
      %895 = vmatpush1.msra.mxu0 0.0
      %896 = vmatprep.subr.mxu0 0.0
      %897 = vmatpush1.msra.mxu0 0.0
      %898 = vmatprep.subr.mxu0 0.0
      %899 = vmatpush1.msra.mxu0 0.0
      %900 = vmatprep.subr.mxu0 0.0
      %901 = vmatpush1.msra.mxu0 0.0
      %902 = vmatprep.subr.mxu0 0.0
      %903 = vmatpush1.msra.mxu0 0.0
      %904 = vmatprep.subr.mxu0 0.0
      %905 = vmatpush1.msra.mxu0 0.0
      %906 = vmatprep.subr.mxu0 0.0
      %907 = vmatpush1.msra.mxu0 0.0
      %908 = vmatprep.subr.mxu0 0.0
      %909 = vmatpush1.msra.mxu0 0.0
      %910 = vmatprep.subr.mxu0 0.0
      %911 = vmatpush1.msra.mxu0 0.0
      %912 = vmatprep.subr.mxu0 0.0
      %913 = vmatpush1.msra.mxu0 0.0
      %914 = vmatprep.subr.mxu0 0.0
      %915 = vmatpush1.msra.mxu0 0.0
      %916 = vmatprep.subr.mxu0 0.0
      %917 = vmatpush1.msra.mxu0 0.0
      %918 = vmatprep.subr.mxu0 0.0
      %919 = vmatpush1.msra.mxu0 0.0
      %920 = vmatprep.subr.mxu0 0.0
      %921 = vmatpush1.msra.mxu0 0.0
      %922 = vmatprep.subr.mxu0 0.0
      %923 = vmatpush1.msra.mxu0 0.0
      %924 = vmatprep.subr.mxu0 0.0
      %925 = vmatpush1.msra.mxu0 0.0
      %926 = vmatprep.subr.mxu0 0.0
      %927 = vmatpush1.msra.mxu0 0.0
      %928 = vmatprep.subr.mxu0 0.0
      %929 = vmatpush1.msra.mxu0 0.0
      %930 = vmatprep.subr.mxu0 0.0
      %931 = vmatpush1.msra.mxu0 0.0
      %932 = vmatprep.subr.mxu0 0.0
      %933 = vmatpush1.msra.mxu0 0.0
      %934 = vmatprep.subr.mxu0 0.0
      %935 = vmatpush1.msra.mxu0 0.0
      %936 = vmatprep.subr.mxu0 0.0
      %937 = vmatpush1.msra.mxu0 0.0
      %938 = vmatprep.subr.mxu0 0.0
      %939 = vmatpush1.msra.mxu0 0.0
      %940 = vmatprep.subr.mxu0 0.0
      %941 = vmatpush1.msra.mxu0 0.0
      %942 = vmatprep.subr.mxu0 0.0
      %943 = vmatpush1.msra.mxu0 0.0
      %944 = vmatprep.subr.mxu0 0.0
      %945 = vmatpush1.msra.mxu0 0.0
      %946 = vmatprep.subr.mxu0 0.0
      %947 = vmatpush1.msra.mxu0 0.0
      %948 = vmatprep.subr.mxu0 0.0
      %949 = vmatpush1.msra.mxu0 0.0
      %950 = vmatprep.subr.mxu0 0.0
      %951 = vmatpush1.msra.mxu0 0.0
      %952 = vmatprep.subr.mxu0 0.0
      %953 = vmatpush1.msra.mxu0 0.0
      %954 = vmatprep.mubr.f32.mxu0 0.0
      %955 = vmatmul.mubr.f32.gmra.mrb[0].mxu0 %v867
      %v956 = vpop.f32.mrb[0].mxu0
      %v957 = vadd.f32 0.0, %v956
      %v958 = vpop.f32.mrb[0].mxu0
      %959 = vmatprep.mubr.f32.mxu0 0.0
      %960 = vmatmul.mubr.f32.gmra.mrb[0].mxu0 %v870
      %v961 = vpop.f32.mrb[0].mxu0
      %v962 = vadd.f32 0.0, %v961
      %v963 = vpop.f32.mrb[0].mxu0
      %964 = vmatprep.mubr.f32.mxu0 0.0
      %965 = vmatmul.mubr.f32.gmra.mrb[0].mxu0 %v873
      %v966 = vpop.f32.mrb[0].mxu0
      %v967 = vadd.f32 0.0, %v966
      %v968 = vpop.f32.mrb[0].mxu0
      %969 = vmatprep.mubr.f32.mxu0 0.0
      %970 = vmatmul.mubr.f32.gmra.mrb[0].mxu0 %v876
      %v971 = vpop.f32.mrb[0].mxu0
      %v972 = vadd.f32 0.0, %v971
      %v973 = vpop.f32.mrb[0].mxu0
      %974 = vmatprep.mubr.f32.mxu0 0.0
      %975 = vmatmul.mubr.f32.gmra.mrb[0].mxu0 %v879
      %v976 = vpop.f32.mrb[0].mxu0
      %v977 = vadd.f32 0.0, %v976
      %v978 = vpop.f32.mrb[0].mxu0
      %979 = vmatprep.mubr.f32.mxu0 0.0
      %980 = vmatmul.mubr.f32.gmra.mrb[0].mxu0 %v882
      %v981 = vpop.f32.mrb[0].mxu0
      %v982 = vadd.f32 0.0, %v981
      %v983 = vpop.f32.mrb[0].mxu0
      %984 = vmatprep.mubr.f32.mxu0 0.0
      %985 = vmatmul.mubr.f32.gmra.mrb[0].mxu0 %v885
      %v986 = vpop.f32.mrb[0].mxu0
      %v987 = vadd.f32 0.0, %v986
      %v988 = vpop.f32.mrb[0].mxu0
      %989 = vmatprep.mubr.f32.mxu0 0.0
      %990 = vmatmul.mubr.f32.gmra.mrb[0].mxu0 %v888
      %v991 = vpop.f32.mrb[0].mxu0
      %v992 = vadd.f32 0.0, %v991
      %v993 = vpop.f32.mrb[0].mxu0
      %994 = vdwg.mxu0
      %v995 = vadd.f32 %v847, %v957
      %v996 = vadd.f32 %v848, %v962
      %v997 = vadd.f32 %v849, %v967
      %v998 = vadd.f32 %v850, %v972
      %v999 = vadd.f32 %v851, %v977
      %v1000 = vadd.f32 %v852, %v982
      %v1001 = vadd.f32 %v853, %v987
      %v1002 = vadd.f32 %v854, %v992
      %v1003 = vld [vmem:[%s251 + $0x5] sm:$0xff]
      %v1004 = vld [vmem:[%s251 + $0xd] sm:$0xff]
      %v1005 = vld [vmem:[%s251 + $0x15] sm:$0xff]
      %v1006 = vld [vmem:[%s251 + $0x1d] sm:$0xff]
      %v1007 = vld [vmem:[%s251 + $0x25] sm:$0xff]
      %v1008 = vld [vmem:[%s251 + $0x2d] sm:$0xff]
      %v1009 = vld [vmem:[%s251 + $0x35] sm:$0xff]
      %v1010 = vld [vmem:[%s251 + $0x3d] sm:$0xff]
      %s1011 = scalar_lea.vmem %s259, 80
      %v1012 = vld [vmem:[%s1011] sm:$0xff]
      %v1013 = vld [vmem:[%s1011 + $0x8] sm:$0xff]
      %v1015 = vsel %vm300, %v1003, 0
      %v1018 = vsel %vm300, %v1004, 0
      %v1021 = vsel %vm300, %v1005, 0
      %v1024 = vsel %vm300, %v1006, 0
      %v1027 = vsel %vm300, %v1007, 0
      %v1030 = vsel %vm300, %v1008, 0
      %v1033 = vsel %vm300, %v1009, 0
      %v1036 = vsel %vm300, %v1010, 0
      %1038 = vmatprep.subr.mxu0 0.0
      %1039 = vmatpush1.msra.mxu0 %v1012
      %1040 = vmatprep.subr.mxu0 0.0
      %1041 = vmatpush1.msra.mxu0 %v1013
      %1042 = vmatprep.subr.mxu0 0.0
      %1043 = vmatpush1.msra.mxu0 0.0
      %1044 = vmatprep.subr.mxu0 0.0
      %1045 = vmatpush1.msra.mxu0 0.0
      %1046 = vmatprep.subr.mxu0 0.0
      %1047 = vmatpush1.msra.mxu0 0.0
      %1048 = vmatprep.subr.mxu0 0.0
      %1049 = vmatpush1.msra.mxu0 0.0
      %1050 = vmatprep.subr.mxu0 0.0
      %1051 = vmatpush1.msra.mxu0 0.0
      %1052 = vmatprep.subr.mxu0 0.0
      %1053 = vmatpush1.msra.mxu0 0.0
      %1054 = vmatprep.subr.mxu0 0.0
      %1055 = vmatpush1.msra.mxu0 0.0
      %1056 = vmatprep.subr.mxu0 0.0
      %1057 = vmatpush1.msra.mxu0 0.0
      %1058 = vmatprep.subr.mxu0 0.0
      %1059 = vmatpush1.msra.mxu0 0.0
      %1060 = vmatprep.subr.mxu0 0.0
      %1061 = vmatpush1.msra.mxu0 0.0
      %1062 = vmatprep.subr.mxu0 0.0
      %1063 = vmatpush1.msra.mxu0 0.0
      %1064 = vmatprep.subr.mxu0 0.0
      %1065 = vmatpush1.msra.mxu0 0.0
      %1066 = vmatprep.subr.mxu0 0.0
      %1067 = vmatpush1.msra.mxu0 0.0
      %1068 = vmatprep.subr.mxu0 0.0
      %1069 = vmatpush1.msra.mxu0 0.0
      %1070 = vmatprep.subr.mxu0 0.0
      %1071 = vmatpush1.msra.mxu0 0.0
      %1072 = vmatprep.subr.mxu0 0.0
      %1073 = vmatpush1.msra.mxu0 0.0
      %1074 = vmatprep.subr.mxu0 0.0
      %1075 = vmatpush1.msra.mxu0 0.0
      %1076 = vmatprep.subr.mxu0 0.0
      %1077 = vmatpush1.msra.mxu0 0.0
      %1078 = vmatprep.subr.mxu0 0.0
      %1079 = vmatpush1.msra.mxu0 0.0
      %1080 = vmatprep.subr.mxu0 0.0
      %1081 = vmatpush1.msra.mxu0 0.0
      %1082 = vmatprep.subr.mxu0 0.0
      %1083 = vmatpush1.msra.mxu0 0.0
      %1084 = vmatprep.subr.mxu0 0.0
      %1085 = vmatpush1.msra.mxu0 0.0
      %1086 = vmatprep.subr.mxu0 0.0
      %1087 = vmatpush1.msra.mxu0 0.0
      %1088 = vmatprep.subr.mxu0 0.0
      %1089 = vmatpush1.msra.mxu0 0.0
      %1090 = vmatprep.subr.mxu0 0.0
      %1091 = vmatpush1.msra.mxu0 0.0
      %1092 = vmatprep.subr.mxu0 0.0
      %1093 = vmatpush1.msra.mxu0 0.0
      %1094 = vmatprep.subr.mxu0 0.0
      %1095 = vmatpush1.msra.mxu0 0.0
      %1096 = vmatprep.subr.mxu0 0.0
      %1097 = vmatpush1.msra.mxu0 0.0
      %1098 = vmatprep.subr.mxu0 0.0
      %1099 = vmatpush1.msra.mxu0 0.0
      %1100 = vmatprep.subr.mxu0 0.0
      %1101 = vmatpush1.msra.mxu0 0.0
      %1102 = vmatprep.mubr.f32.mxu0 0.0
      %1103 = vmatmul.mubr.f32.gmra.mrb[0].mxu0 %v1015
      %v1104 = vpop.f32.mrb[0].mxu0
      %v1105 = vadd.f32 0.0, %v1104
      %v1106 = vpop.f32.mrb[0].mxu0
      %1107 = vmatprep.mubr.f32.mxu0 0.0
      %1108 = vmatmul.mubr.f32.gmra.mrb[0].mxu0 %v1018
      %v1109 = vpop.f32.mrb[0].mxu0
      %v1110 = vadd.f32 0.0, %v1109
      %v1111 = vpop.f32.mrb[0].mxu0
      %1112 = vmatprep.mubr.f32.mxu0 0.0
      %1113 = vmatmul.mubr.f32.gmra.mrb[0].mxu0 %v1021
      %v1114 = vpop.f32.mrb[0].mxu0
      %v1115 = vadd.f32 0.0, %v1114
      %v1116 = vpop.f32.mrb[0].mxu0
      %1117 = vmatprep.mubr.f32.mxu0 0.0
      %1118 = vmatmul.mubr.f32.gmra.mrb[0].mxu0 %v1024
      %v1119 = vpop.f32.mrb[0].mxu0
      %v1120 = vadd.f32 0.0, %v1119
      %v1121 = vpop.f32.mrb[0].mxu0
      %1122 = vmatprep.mubr.f32.mxu0 0.0
      %1123 = vmatmul.mubr.f32.gmra.mrb[0].mxu0 %v1027
      %v1124 = vpop.f32.mrb[0].mxu0
      %v1125 = vadd.f32 0.0, %v1124
      %v1126 = vpop.f32.mrb[0].mxu0
      %1127 = vmatprep.mubr.f32.mxu0 0.0
      %1128 = vmatmul.mubr.f32.gmra.mrb[0].mxu0 %v1030
      %v1129 = vpop.f32.mrb[0].mxu0
      %v1130 = vadd.f32 0.0, %v1129
      %v1131 = vpop.f32.mrb[0].mxu0
      %1132 = vmatprep.mubr.f32.mxu0 0.0
      %1133 = vmatmul.mubr.f32.gmra.mrb[0].mxu0 %v1033
      %v1134 = vpop.f32.mrb[0].mxu0
      %v1135 = vadd.f32 0.0, %v1134
      %v1136 = vpop.f32.mrb[0].mxu0
      %1137 = vmatprep.mubr.f32.mxu0 0.0
      %1138 = vmatmul.mubr.f32.gmra.mrb[0].mxu0 %v1036
      %v1139 = vpop.f32.mrb[0].mxu0
      %v1140 = vadd.f32 0.0, %v1139
      %v1141 = vpop.f32.mrb[0].mxu0
      %1142 = vdwg.mxu0
      %v1143 = vadd.f32 %v995, %v1105
      %v1144 = vadd.f32 %v996, %v1110
      %v1145 = vadd.f32 %v997, %v1115
      %v1146 = vadd.f32 %v998, %v1120
      %v1147 = vadd.f32 %v999, %v1125
      %v1148 = vadd.f32 %v1000, %v1130
      %v1149 = vadd.f32 %v1001, %v1135
      %v1150 = vadd.f32 %v1002, %v1140
      %v1151 = vld [vmem:[%s251 + $0x6] sm:$0xff]
      %v1152 = vld [vmem:[%s251 + $0xe] sm:$0xff]
      %v1153 = vld [vmem:[%s251 + $0x16] sm:$0xff]
      %v1154 = vld [vmem:[%s251 + $0x1e] sm:$0xff]
      %v1155 = vld [vmem:[%s251 + $0x26] sm:$0xff]
      %v1156 = vld [vmem:[%s251 + $0x2e] sm:$0xff]
      %v1157 = vld [vmem:[%s251 + $0x36] sm:$0xff]
      %v1158 = vld [vmem:[%s251 + $0x3e] sm:$0xff]
      %s1159 = scalar_lea.vmem %s259, 96
      %v1160 = vld [vmem:[%s1159] sm:$0xff]
      %v1161 = vld [vmem:[%s1159 + $0x8] sm:$0xff]
      %v1163 = vsel %vm300, %v1151, 0
      %v1166 = vsel %vm300, %v1152, 0
      %v1169 = vsel %vm300, %v1153, 0
      %v1172 = vsel %vm300, %v1154, 0
      %v1175 = vsel %vm300, %v1155, 0
      %v1178 = vsel %vm300, %v1156, 0
      %v1181 = vsel %vm300, %v1157, 0
      %v1184 = vsel %vm300, %v1158, 0
      %1186 = vmatprep.subr.mxu0 0.0
      %1187 = vmatpush1.msra.mxu0 %v1160
      %1188 = vmatprep.subr.mxu0 0.0
      %1189 = vmatpush1.msra.mxu0 %v1161
      %1190 = vmatprep.subr.mxu0 0.0
      %1191 = vmatpush1.msra.mxu0 0.0
      %1192 = vmatprep.subr.mxu0 0.0
      %1193 = vmatpush1.msra.mxu0 0.0
      %1194 = vmatprep.subr.mxu0 0.0
      %1195 = vmatpush1.msra.mxu0 0.0
      %1196 = vmatprep.subr.mxu0 0.0
      %1197 = vmatpush1.msra.mxu0 0.0
      %1198 = vmatprep.subr.mxu0 0.0
      %1199 = vmatpush1.msra.mxu0 0.0
      %1200 = vmatprep.subr.mxu0 0.0
      %1201 = vmatpush1.msra.mxu0 0.0
      %1202 = vmatprep.subr.mxu0 0.0
      %1203 = vmatpush1.msra.mxu0 0.0
      %1204 = vmatprep.subr.mxu0 0.0
      %1205 = vmatpush1.msra.mxu0 0.0
      %1206 = vmatprep.subr.mxu0 0.0
      %1207 = vmatpush1.msra.mxu0 0.0
      %1208 = vmatprep.subr.mxu0 0.0
      %1209 = vmatpush1.msra.mxu0 0.0
      %1210 = vmatprep.subr.mxu0 0.0
      %1211 = vmatpush1.msra.mxu0 0.0
      %1212 = vmatprep.subr.mxu0 0.0
      %1213 = vmatpush1.msra.mxu0 0.0
      %1214 = vmatprep.subr.mxu0 0.0
      %1215 = vmatpush1.msra.mxu0 0.0
      %1216 = vmatprep.subr.mxu0 0.0
      %1217 = vmatpush1.msra.mxu0 0.0
      %1218 = vmatprep.subr.mxu0 0.0
      %1219 = vmatpush1.msra.mxu0 0.0
      %1220 = vmatprep.subr.mxu0 0.0
      %1221 = vmatpush1.msra.mxu0 0.0
      %1222 = vmatprep.subr.mxu0 0.0
      %1223 = vmatpush1.msra.mxu0 0.0
      %1224 = vmatprep.subr.mxu0 0.0
      %1225 = vmatpush1.msra.mxu0 0.0
      %1226 = vmatprep.subr.mxu0 0.0
      %1227 = vmatpush1.msra.mxu0 0.0
      %1228 = vmatprep.subr.mxu0 0.0
      %1229 = vmatpush1.msra.mxu0 0.0
      %1230 = vmatprep.subr.mxu0 0.0
      %1231 = vmatpush1.msra.mxu0 0.0
      %1232 = vmatprep.subr.mxu0 0.0
      %1233 = vmatpush1.msra.mxu0 0.0
      %1234 = vmatprep.subr.mxu0 0.0
      %1235 = vmatpush1.msra.mxu0 0.0
      %1236 = vmatprep.subr.mxu0 0.0
      %1237 = vmatpush1.msra.mxu0 0.0
      %1238 = vmatprep.subr.mxu0 0.0
      %1239 = vmatpush1.msra.mxu0 0.0
      %1240 = vmatprep.subr.mxu0 0.0
      %1241 = vmatpush1.msra.mxu0 0.0
      %1242 = vmatprep.subr.mxu0 0.0
      %1243 = vmatpush1.msra.mxu0 0.0
      %1244 = vmatprep.subr.mxu0 0.0
      %1245 = vmatpush1.msra.mxu0 0.0
      %1246 = vmatprep.subr.mxu0 0.0
      %1247 = vmatpush1.msra.mxu0 0.0
      %1248 = vmatprep.subr.mxu0 0.0
      %1249 = vmatpush1.msra.mxu0 0.0
      %1250 = vmatprep.mubr.f32.mxu0 0.0
      %1251 = vmatmul.mubr.f32.gmra.mrb[0].mxu0 %v1163
      %v1252 = vpop.f32.mrb[0].mxu0
      %v1253 = vadd.f32 0.0, %v1252
      %v1254 = vpop.f32.mrb[0].mxu0
      %1255 = vmatprep.mubr.f32.mxu0 0.0
      %1256 = vmatmul.mubr.f32.gmra.mrb[0].mxu0 %v1166
      %v1257 = vpop.f32.mrb[0].mxu0
      %v1258 = vadd.f32 0.0, %v1257
      %v1259 = vpop.f32.mrb[0].mxu0
      %1260 = vmatprep.mubr.f32.mxu0 0.0
      %1261 = vmatmul.mubr.f32.gmra.mrb[0].mxu0 %v1169
      %v1262 = vpop.f32.mrb[0].mxu0
      %v1263 = vadd.f32 0.0, %v1262
      %v1264 = vpop.f32.mrb[0].mxu0
      %1265 = vmatprep.mubr.f32.mxu0 0.0
      %1266 = vmatmul.mubr.f32.gmra.mrb[0].mxu0 %v1172
      %v1267 = vpop.f32.mrb[0].mxu0
      %v1268 = vadd.f32 0.0, %v1267
      %v1269 = vpop.f32.mrb[0].mxu0
      %1270 = vmatprep.mubr.f32.mxu0 0.0
      %1271 = vmatmul.mubr.f32.gmra.mrb[0].mxu0 %v1175
      %v1272 = vpop.f32.mrb[0].mxu0
      %v1273 = vadd.f32 0.0, %v1272
      %v1274 = vpop.f32.mrb[0].mxu0
      %1275 = vmatprep.mubr.f32.mxu0 0.0
      %1276 = vmatmul.mubr.f32.gmra.mrb[0].mxu0 %v1178
      %v1277 = vpop.f32.mrb[0].mxu0
      %v1278 = vadd.f32 0.0, %v1277
      %v1279 = vpop.f32.mrb[0].mxu0
      %1280 = vmatprep.mubr.f32.mxu0 0.0
      %1281 = vmatmul.mubr.f32.gmra.mrb[0].mxu0 %v1181
      %v1282 = vpop.f32.mrb[0].mxu0
      %v1283 = vadd.f32 0.0, %v1282
      %v1284 = vpop.f32.mrb[0].mxu0
      %1285 = vmatprep.mubr.f32.mxu0 0.0
      %1286 = vmatmul.mubr.f32.gmra.mrb[0].mxu0 %v1184
      %v1287 = vpop.f32.mrb[0].mxu0
      %v1288 = vadd.f32 0.0, %v1287
      %v1289 = vpop.f32.mrb[0].mxu0
      %1290 = vdwg.mxu0
      %v1291 = vadd.f32 %v1143, %v1253
      %v1292 = vadd.f32 %v1144, %v1258
      %v1293 = vadd.f32 %v1145, %v1263
      %v1294 = vadd.f32 %v1146, %v1268
      %v1295 = vadd.f32 %v1147, %v1273
      %v1296 = vadd.f32 %v1148, %v1278
      %v1297 = vadd.f32 %v1149, %v1283
      %v1298 = vadd.f32 %v1150, %v1288
      %v1299 = vld [vmem:[%s251 + $0x7] sm:$0xff]
      %v1300 = vld [vmem:[%s251 + $0xf] sm:$0xff]
      %v1301 = vld [vmem:[%s251 + $0x17] sm:$0xff]
      %v1302 = vld [vmem:[%s251 + $0x1f] sm:$0xff]
      %v1303 = vld [vmem:[%s251 + $0x27] sm:$0xff]
      %v1304 = vld [vmem:[%s251 + $0x2f] sm:$0xff]
      %v1305 = vld [vmem:[%s251 + $0x37] sm:$0xff]
      %v1306 = vld [vmem:[%s251 + $0x3f] sm:$0xff]
      %s1307 = scalar_lea.vmem %s259, 112
      %v1308 = vld [vmem:[%s1307] sm:$0xff]
      %v1309 = vld [vmem:[%s1307 + $0x8] sm:$0xff]
      %v1311 = vsel %vm300, %v1299, 0
      %v1314 = vsel %vm300, %v1300, 0
      %v1317 = vsel %vm300, %v1301, 0
      %v1320 = vsel %vm300, %v1302, 0
      %v1323 = vsel %vm300, %v1303, 0
      %v1326 = vsel %vm300, %v1304, 0
      %v1329 = vsel %vm300, %v1305, 0
      %v1332 = vsel %vm300, %v1306, 0
      %1334 = vmatprep.subr.mxu0 0.0
      %1335 = vmatpush1.msra.mxu0 %v1308
      %1336 = vmatprep.subr.mxu0 0.0
      %1337 = vmatpush1.msra.mxu0 %v1309
      %1338 = vmatprep.subr.mxu0 0.0
      %1339 = vmatpush1.msra.mxu0 0.0
      %1340 = vmatprep.subr.mxu0 0.0
      %1341 = vmatpush1.msra.mxu0 0.0
      %1342 = vmatprep.subr.mxu0 0.0
      %1343 = vmatpush1.msra.mxu0 0.0
      %1344 = vmatprep.subr.mxu0 0.0
      %1345 = vmatpush1.msra.mxu0 0.0
      %1346 = vmatprep.subr.mxu0 0.0
      %1347 = vmatpush1.msra.mxu0 0.0
      %1348 = vmatprep.subr.mxu0 0.0
      %1349 = vmatpush1.msra.mxu0 0.0
      %1350 = vmatprep.subr.mxu0 0.0
      %1351 = vmatpush1.msra.mxu0 0.0
      %1352 = vmatprep.subr.mxu0 0.0
      %1353 = vmatpush1.msra.mxu0 0.0
      %1354 = vmatprep.subr.mxu0 0.0
      %1355 = vmatpush1.msra.mxu0 0.0
      %1356 = vmatprep.subr.mxu0 0.0
      %1357 = vmatpush1.msra.mxu0 0.0
      %1358 = vmatprep.subr.mxu0 0.0
      %1359 = vmatpush1.msra.mxu0 0.0
      %1360 = vmatprep.subr.mxu0 0.0
      %1361 = vmatpush1.msra.mxu0 0.0
      %1362 = vmatprep.subr.mxu0 0.0
      %1363 = vmatpush1.msra.mxu0 0.0
      %1364 = vmatprep.subr.mxu0 0.0
      %1365 = vmatpush1.msra.mxu0 0.0
      %1366 = vmatprep.subr.mxu0 0.0
      %1367 = vmatpush1.msra.mxu0 0.0
      %1368 = vmatprep.subr.mxu0 0.0
      %1369 = vmatpush1.msra.mxu0 0.0
      %1370 = vmatprep.subr.mxu0 0.0
      %1371 = vmatpush1.msra.mxu0 0.0
      %1372 = vmatprep.subr.mxu0 0.0
      %1373 = vmatpush1.msra.mxu0 0.0
      %1374 = vmatprep.subr.mxu0 0.0
      %1375 = vmatpush1.msra.mxu0 0.0
      %1376 = vmatprep.subr.mxu0 0.0
      %1377 = vmatpush1.msra.mxu0 0.0
      %1378 = vmatprep.subr.mxu0 0.0
      %1379 = vmatpush1.msra.mxu0 0.0
      %1380 = vmatprep.subr.mxu0 0.0
      %1381 = vmatpush1.msra.mxu0 0.0
      %1382 = vmatprep.subr.mxu0 0.0
      %1383 = vmatpush1.msra.mxu0 0.0
      %1384 = vmatprep.subr.mxu0 0.0
      %1385 = vmatpush1.msra.mxu0 0.0
      %1386 = vmatprep.subr.mxu0 0.0
      %1387 = vmatpush1.msra.mxu0 0.0
      %1388 = vmatprep.subr.mxu0 0.0
      %1389 = vmatpush1.msra.mxu0 0.0
      %1390 = vmatprep.subr.mxu0 0.0
      %1391 = vmatpush1.msra.mxu0 0.0
      %1392 = vmatprep.subr.mxu0 0.0
      %1393 = vmatpush1.msra.mxu0 0.0
      %1394 = vmatprep.subr.mxu0 0.0
      %1395 = vmatpush1.msra.mxu0 0.0
      %1396 = vmatprep.subr.mxu0 0.0
      %1397 = vmatpush1.msra.mxu0 0.0
      %1398 = vmatprep.mubr.f32.mxu0 0.0
      %1399 = vmatmul.mubr.f32.gmra.mrb[0].mxu0 %v1311
      %v1400 = vpop.f32.mrb[0].mxu0
      %v1401 = vadd.f32 0.0, %v1400
      %v1402 = vpop.f32.mrb[0].mxu0
      %1403 = vmatprep.mubr.f32.mxu0 0.0
      %1404 = vmatmul.mubr.f32.gmra.mrb[0].mxu0 %v1314
      %v1405 = vpop.f32.mrb[0].mxu0
      %v1406 = vadd.f32 0.0, %v1405
      %v1407 = vpop.f32.mrb[0].mxu0
      %1408 = vmatprep.mubr.f32.mxu0 0.0
      %1409 = vmatmul.mubr.f32.gmra.mrb[0].mxu0 %v1317
      %v1410 = vpop.f32.mrb[0].mxu0
      %v1411 = vadd.f32 0.0, %v1410
      %v1412 = vpop.f32.mrb[0].mxu0
      %1413 = vmatprep.mubr.f32.mxu0 0.0
      %1414 = vmatmul.mubr.f32.gmra.mrb[0].mxu0 %v1320
      %v1415 = vpop.f32.mrb[0].mxu0
      %v1416 = vadd.f32 0.0, %v1415
      %v1417 = vpop.f32.mrb[0].mxu0
      %1418 = vmatprep.mubr.f32.mxu0 0.0
      %1419 = vmatmul.mubr.f32.gmra.mrb[0].mxu0 %v1323
      %v1420 = vpop.f32.mrb[0].mxu0
      %v1421 = vadd.f32 0.0, %v1420
      %v1422 = vpop.f32.mrb[0].mxu0
      %1423 = vmatprep.mubr.f32.mxu0 0.0
      %1424 = vmatmul.mubr.f32.gmra.mrb[0].mxu0 %v1326
      %v1425 = vpop.f32.mrb[0].mxu0
      %v1426 = vadd.f32 0.0, %v1425
      %v1427 = vpop.f32.mrb[0].mxu0
      %1428 = vmatprep.mubr.f32.mxu0 0.0
      %1429 = vmatmul.mubr.f32.gmra.mrb[0].mxu0 %v1329
      %v1430 = vpop.f32.mrb[0].mxu0
      %v1431 = vadd.f32 0.0, %v1430
      %v1432 = vpop.f32.mrb[0].mxu0
      %1433 = vmatprep.mubr.f32.mxu0 0.0
      %1434 = vmatmul.mubr.f32.gmra.mrb[0].mxu0 %v1332
      %v1435 = vpop.f32.mrb[0].mxu0
      %v1436 = vadd.f32 0.0, %v1435
      %v1437 = vpop.f32.mrb[0].mxu0
      %1438 = vdwg.mxu0
      %v1439 = vadd.f32 %v1291, %v1401
      %v1440 = vadd.f32 %v1292, %v1406
      %v1441 = vadd.f32 %v1293, %v1411
      %v1442 = vadd.f32 %v1294, %v1416
      %v1443 = vadd.f32 %v1295, %v1421
      %v1444 = vadd.f32 %v1296, %v1426
      %v1445 = vadd.f32 %v1297, %v1431
      %v1446 = vadd.f32 %v1298, %v1436
      %v1447 = vld [vmem:[%s251 + $0x8] sm:$0xff]
      %v1448 = vld [vmem:[%s251 + $0x10] sm:$0xff]
      %v1449 = vld [vmem:[%s251 + $0x18] sm:$0xff]
      %v1450 = vld [vmem:[%s251 + $0x20] sm:$0xff]
      %v1451 = vld [vmem:[%s251 + $0x28] sm:$0xff]
      %v1452 = vld [vmem:[%s251 + $0x30] sm:$0xff]
      %v1453 = vld [vmem:[%s251 + $0x38] sm:$0xff]
      %v1454 = vld [vmem:[%s251 + $0x40] sm:$0xff]
      %s1455 = scalar_lea.vmem %s259, 128
      %v1456 = vld [vmem:[%s1455] sm:$0xff]
      %v1457 = vld [vmem:[%s1455 + $0x8] sm:$0xff]
      %v1459 = vsel %vm300, %v1447, 0
      %v1462 = vsel %vm300, %v1448, 0
      %v1465 = vsel %vm300, %v1449, 0
      %v1468 = vsel %vm300, %v1450, 0
      %v1471 = vsel %vm300, %v1451, 0
      %v1474 = vsel %vm300, %v1452, 0
      %v1477 = vsel %vm300, %v1453, 0
      %v1480 = vsel %vm300, %v1454, 0
      %1482 = vmatprep.subr.mxu0 0.0
      %1483 = vmatpush1.msra.mxu0 %v1456
      %1484 = vmatprep.subr.mxu0 0.0
      %1485 = vmatpush1.msra.mxu0 %v1457
      %1486 = vmatprep.subr.mxu0 0.0
      %1487 = vmatpush1.msra.mxu0 0.0
      %1488 = vmatprep.subr.mxu0 0.0
      %1489 = vmatpush1.msra.mxu0 0.0
      %1490 = vmatprep.subr.mxu0 0.0
      %1491 = vmatpush1.msra.mxu0 0.0
      %1492 = vmatprep.subr.mxu0 0.0
      %1493 = vmatpush1.msra.mxu0 0.0
      %1494 = vmatprep.subr.mxu0 0.0
      %1495 = vmatpush1.msra.mxu0 0.0
      %1496 = vmatprep.subr.mxu0 0.0
      %1497 = vmatpush1.msra.mxu0 0.0
      %1498 = vmatprep.subr.mxu0 0.0
      %1499 = vmatpush1.msra.mxu0 0.0
      %1500 = vmatprep.subr.mxu0 0.0
      %1501 = vmatpush1.msra.mxu0 0.0
      %1502 = vmatprep.subr.mxu0 0.0
      %1503 = vmatpush1.msra.mxu0 0.0
      %1504 = vmatprep.subr.mxu0 0.0
      %1505 = vmatpush1.msra.mxu0 0.0
      %1506 = vmatprep.subr.mxu0 0.0
      %1507 = vmatpush1.msra.mxu0 0.0
      %1508 = vmatprep.subr.mxu0 0.0
      %1509 = vmatpush1.msra.mxu0 0.0
      %1510 = vmatprep.subr.mxu0 0.0
      %1511 = vmatpush1.msra.mxu0 0.0
      %1512 = vmatprep.subr.mxu0 0.0
      %1513 = vmatpush1.msra.mxu0 0.0
      %1514 = vmatprep.subr.mxu0 0.0
      %1515 = vmatpush1.msra.mxu0 0.0
      %1516 = vmatprep.subr.mxu0 0.0
      %1517 = vmatpush1.msra.mxu0 0.0
      %1518 = vmatprep.subr.mxu0 0.0
      %1519 = vmatpush1.msra.mxu0 0.0
      %1520 = vmatprep.subr.mxu0 0.0
      %1521 = vmatpush1.msra.mxu0 0.0
      %1522 = vmatprep.subr.mxu0 0.0
      %1523 = vmatpush1.msra.mxu0 0.0
      %1524 = vmatprep.subr.mxu0 0.0
      %1525 = vmatpush1.msra.mxu0 0.0
      %1526 = vmatprep.subr.mxu0 0.0
      %1527 = vmatpush1.msra.mxu0 0.0
      %1528 = vmatprep.subr.mxu0 0.0
      %1529 = vmatpush1.msra.mxu0 0.0
      %1530 = vmatprep.subr.mxu0 0.0
      %1531 = vmatpush1.msra.mxu0 0.0
      %1532 = vmatprep.subr.mxu0 0.0
      %1533 = vmatpush1.msra.mxu0 0.0
      %1534 = vmatprep.subr.mxu0 0.0
      %1535 = vmatpush1.msra.mxu0 0.0
      %1536 = vmatprep.subr.mxu0 0.0
      %1537 = vmatpush1.msra.mxu0 0.0
      %1538 = vmatprep.subr.mxu0 0.0
      %1539 = vmatpush1.msra.mxu0 0.0
      %1540 = vmatprep.subr.mxu0 0.0
      %1541 = vmatpush1.msra.mxu0 0.0
      %1542 = vmatprep.subr.mxu0 0.0
      %1543 = vmatpush1.msra.mxu0 0.0
      %1544 = vmatprep.subr.mxu0 0.0
      %1545 = vmatpush1.msra.mxu0 0.0
      %1546 = vmatprep.mubr.f32.mxu0 0.0
      %1547 = vmatmul.mubr.f32.gmra.mrb[0].mxu0 %v1459
      %v1548 = vpop.f32.mrb[0].mxu0
      %v1549 = vadd.f32 0.0, %v1548
      %v1550 = vpop.f32.mrb[0].mxu0
      %1551 = vmatprep.mubr.f32.mxu0 0.0
      %1552 = vmatmul.mubr.f32.gmra.mrb[0].mxu0 %v1462
      %v1553 = vpop.f32.mrb[0].mxu0
      %v1554 = vadd.f32 0.0, %v1553
      %v1555 = vpop.f32.mrb[0].mxu0
      %1556 = vmatprep.mubr.f32.mxu0 0.0
      %1557 = vmatmul.mubr.f32.gmra.mrb[0].mxu0 %v1465
      %v1558 = vpop.f32.mrb[0].mxu0
      %v1559 = vadd.f32 0.0, %v1558
      %v1560 = vpop.f32.mrb[0].mxu0
      %1561 = vmatprep.mubr.f32.mxu0 0.0
      %1562 = vmatmul.mubr.f32.gmra.mrb[0].mxu0 %v1468
      %v1563 = vpop.f32.mrb[0].mxu0
      %v1564 = vadd.f32 0.0, %v1563
      %v1565 = vpop.f32.mrb[0].mxu0
      %1566 = vmatprep.mubr.f32.mxu0 0.0
      %1567 = vmatmul.mubr.f32.gmra.mrb[0].mxu0 %v1471
      %v1568 = vpop.f32.mrb[0].mxu0
      %v1569 = vadd.f32 0.0, %v1568
      %v1570 = vpop.f32.mrb[0].mxu0
      %1571 = vmatprep.mubr.f32.mxu0 0.0
      %1572 = vmatmul.mubr.f32.gmra.mrb[0].mxu0 %v1474
      %v1573 = vpop.f32.mrb[0].mxu0
      %v1574 = vadd.f32 0.0, %v1573
      %v1575 = vpop.f32.mrb[0].mxu0
      %1576 = vmatprep.mubr.f32.mxu0 0.0
      %1577 = vmatmul.mubr.f32.gmra.mrb[0].mxu0 %v1477
      %v1578 = vpop.f32.mrb[0].mxu0
      %v1579 = vadd.f32 0.0, %v1578
      %v1580 = vpop.f32.mrb[0].mxu0
      %1581 = vmatprep.mubr.f32.mxu0 0.0
      %1582 = vmatmul.mubr.f32.gmra.mrb[0].mxu0 %v1480
      %v1583 = vpop.f32.mrb[0].mxu0
      %v1584 = vadd.f32 0.0, %v1583
      %v1585 = vpop.f32.mrb[0].mxu0
      %1586 = vdwg.mxu0
      %v1587 = vadd.f32 %v1439, %v1549
      %v1588 = vadd.f32 %v1440, %v1554
      %v1589 = vadd.f32 %v1441, %v1559
      %v1590 = vadd.f32 %v1442, %v1564
      %v1591 = vadd.f32 %v1443, %v1569
      %v1592 = vadd.f32 %v1444, %v1574
      %v1593 = vadd.f32 %v1445, %v1579
      %v1594 = vadd.f32 %v1446, %v1584
      %v1595 = vld [vmem:[%s251 + $0x9] sm:$0xff]
      %v1596 = vld [vmem:[%s251 + $0x11] sm:$0xff]
      %v1597 = vld [vmem:[%s251 + $0x19] sm:$0xff]
      %v1598 = vld [vmem:[%s251 + $0x21] sm:$0xff]
      %v1599 = vld [vmem:[%s251 + $0x29] sm:$0xff]
      %v1600 = vld [vmem:[%s251 + $0x31] sm:$0xff]
      %v1601 = vld [vmem:[%s251 + $0x39] sm:$0xff]
      %v1602 = vld [vmem:[%s251 + $0x41] sm:$0xff]
      %s1603 = scalar_lea.vmem %s259, 144
      %v1604 = vld [vmem:[%s1603] sm:$0xff]
      %v1605 = vld [vmem:[%s1603 + $0x8] sm:$0xff]
      %v1607 = vsel %vm300, %v1595, 0
      %v1610 = vsel %vm300, %v1596, 0
      %v1613 = vsel %vm300, %v1597, 0
      %v1616 = vsel %vm300, %v1598, 0
      %v1619 = vsel %vm300, %v1599, 0
      %v1622 = vsel %vm300, %v1600, 0
      %v1625 = vsel %vm300, %v1601, 0
      %v1628 = vsel %vm300, %v1602, 0
      %1630 = vmatprep.subr.mxu0 0.0
      %1631 = vmatpush1.msra.mxu0 %v1604
      %1632 = vmatprep.subr.mxu0 0.0
      %1633 = vmatpush1.msra.mxu0 %v1605
      %1634 = vmatprep.subr.mxu0 0.0
      %1635 = vmatpush1.msra.mxu0 0.0
      %1636 = vmatprep.subr.mxu0 0.0
      %1637 = vmatpush1.msra.mxu0 0.0
      %1638 = vmatprep.subr.mxu0 0.0
      %1639 = vmatpush1.msra.mxu0 0.0
      %1640 = vmatprep.subr.mxu0 0.0
      %1641 = vmatpush1.msra.mxu0 0.0
      %1642 = vmatprep.subr.mxu0 0.0
      %1643 = vmatpush1.msra.mxu0 0.0
      %1644 = vmatprep.subr.mxu0 0.0
      %1645 = vmatpush1.msra.mxu0 0.0
      %1646 = vmatprep.subr.mxu0 0.0
      %1647 = vmatpush1.msra.mxu0 0.0
      %1648 = vmatprep.subr.mxu0 0.0
      %1649 = vmatpush1.msra.mxu0 0.0
      %1650 = vmatprep.subr.mxu0 0.0
      %1651 = vmatpush1.msra.mxu0 0.0
      %1652 = vmatprep.subr.mxu0 0.0
      %1653 = vmatpush1.msra.mxu0 0.0
      %1654 = vmatprep.subr.mxu0 0.0
      %1655 = vmatpush1.msra.mxu0 0.0
      %1656 = vmatprep.subr.mxu0 0.0
      %1657 = vmatpush1.msra.mxu0 0.0
      %1658 = vmatprep.subr.mxu0 0.0
      %1659 = vmatpush1.msra.mxu0 0.0
      %1660 = vmatprep.subr.mxu0 0.0
      %1661 = vmatpush1.msra.mxu0 0.0
      %1662 = vmatprep.subr.mxu0 0.0
      %1663 = vmatpush1.msra.mxu0 0.0
      %1664 = vmatprep.subr.mxu0 0.0
      %1665 = vmatpush1.msra.mxu0 0.0
      %1666 = vmatprep.subr.mxu0 0.0
      %1667 = vmatpush1.msra.mxu0 0.0
      %1668 = vmatprep.subr.mxu0 0.0
      %1669 = vmatpush1.msra.mxu0 0.0
      %1670 = vmatprep.subr.mxu0 0.0
      %1671 = vmatpush1.msra.mxu0 0.0
      %1672 = vmatprep.subr.mxu0 0.0
      %1673 = vmatpush1.msra.mxu0 0.0
      %1674 = vmatprep.subr.mxu0 0.0
      %1675 = vmatpush1.msra.mxu0 0.0
      %1676 = vmatprep.subr.mxu0 0.0
      %1677 = vmatpush1.msra.mxu0 0.0
      %1678 = vmatprep.subr.mxu0 0.0
      %1679 = vmatpush1.msra.mxu0 0.0
      %1680 = vmatprep.subr.mxu0 0.0
      %1681 = vmatpush1.msra.mxu0 0.0
      %1682 = vmatprep.subr.mxu0 0.0
      %1683 = vmatpush1.msra.mxu0 0.0
      %1684 = vmatprep.subr.mxu0 0.0
      %1685 = vmatpush1.msra.mxu0 0.0
      %1686 = vmatprep.subr.mxu0 0.0
      %1687 = vmatpush1.msra.mxu0 0.0
      %1688 = vmatprep.subr.mxu0 0.0
      %1689 = vmatpush1.msra.mxu0 0.0
      %1690 = vmatprep.subr.mxu0 0.0
      %1691 = vmatpush1.msra.mxu0 0.0
      %1692 = vmatprep.subr.mxu0 0.0
      %1693 = vmatpush1.msra.mxu0 0.0
      %1694 = vmatprep.mubr.f32.mxu0 0.0
      %1695 = vmatmul.mubr.f32.gmra.mrb[0].mxu0 %v1607
      %v1696 = vpop.f32.mrb[0].mxu0
      %v1697 = vadd.f32 0.0, %v1696
      %v1698 = vpop.f32.mrb[0].mxu0
      %1699 = vmatprep.mubr.f32.mxu0 0.0
      %1700 = vmatmul.mubr.f32.gmra.mrb[0].mxu0 %v1610
      %v1701 = vpop.f32.mrb[0].mxu0
      %v1702 = vadd.f32 0.0, %v1701
      %v1703 = vpop.f32.mrb[0].mxu0
      %1704 = vmatprep.mubr.f32.mxu0 0.0
      %1705 = vmatmul.mubr.f32.gmra.mrb[0].mxu0 %v1613
      %v1706 = vpop.f32.mrb[0].mxu0
      %v1707 = vadd.f32 0.0, %v1706
      %v1708 = vpop.f32.mrb[0].mxu0
      %1709 = vmatprep.mubr.f32.mxu0 0.0
      %1710 = vmatmul.mubr.f32.gmra.mrb[0].mxu0 %v1616
      %v1711 = vpop.f32.mrb[0].mxu0
      %v1712 = vadd.f32 0.0, %v1711
      %v1713 = vpop.f32.mrb[0].mxu0
      %1714 = vmatprep.mubr.f32.mxu0 0.0
      %1715 = vmatmul.mubr.f32.gmra.mrb[0].mxu0 %v1619
      %v1716 = vpop.f32.mrb[0].mxu0
      %v1717 = vadd.f32 0.0, %v1716
      %v1718 = vpop.f32.mrb[0].mxu0
      %1719 = vmatprep.mubr.f32.mxu0 0.0
      %1720 = vmatmul.mubr.f32.gmra.mrb[0].mxu0 %v1622
      %v1721 = vpop.f32.mrb[0].mxu0
      %v1722 = vadd.f32 0.0, %v1721
      %v1723 = vpop.f32.mrb[0].mxu0
      %1724 = vmatprep.mubr.f32.mxu0 0.0
      %1725 = vmatmul.mubr.f32.gmra.mrb[0].mxu0 %v1625
      %v1726 = vpop.f32.mrb[0].mxu0
      %v1727 = vadd.f32 0.0, %v1726
      %v1728 = vpop.f32.mrb[0].mxu0
      %1729 = vmatprep.mubr.f32.mxu0 0.0
      %1730 = vmatmul.mubr.f32.gmra.mrb[0].mxu0 %v1628
      %v1731 = vpop.f32.mrb[0].mxu0
      %v1732 = vadd.f32 0.0, %v1731
      %v1733 = vpop.f32.mrb[0].mxu0
      %1734 = vdwg.mxu0
      %v1735 = vadd.f32 %v1587, %v1697
      %v1736 = vadd.f32 %v1588, %v1702
      %v1737 = vadd.f32 %v1589, %v1707
      %v1738 = vadd.f32 %v1590, %v1712
      %v1739 = vadd.f32 %v1591, %v1717
      %v1740 = vadd.f32 %v1592, %v1722
      %v1741 = vadd.f32 %v1593, %v1727
      %v1742 = vadd.f32 %v1594, %v1732
      %v1743 = vld [vmem:[%s251 + $0xa] sm:$0xff]
      %v1744 = vld [vmem:[%s251 + $0x12] sm:$0xff]
      %v1745 = vld [vmem:[%s251 + $0x1a] sm:$0xff]
      %v1746 = vld [vmem:[%s251 + $0x22] sm:$0xff]
      %v1747 = vld [vmem:[%s251 + $0x2a] sm:$0xff]
      %v1748 = vld [vmem:[%s251 + $0x32] sm:$0xff]
      %v1749 = vld [vmem:[%s251 + $0x3a] sm:$0xff]
      %v1750 = vld [vmem:[%s251 + $0x42] sm:$0xff]
      %s1751 = scalar_lea.vmem %s259, 160
      %v1752 = vld [vmem:[%s1751] sm:$0xff]
      %v1753 = vld [vmem:[%s1751 + $0x8] sm:$0xff]
      %v1755 = vsel %vm300, %v1743, 0
      %v1758 = vsel %vm300, %v1744, 0
      %v1761 = vsel %vm300, %v1745, 0
      %v1764 = vsel %vm300, %v1746, 0
      %v1767 = vsel %vm300, %v1747, 0
      %v1770 = vsel %vm300, %v1748, 0
      %v1773 = vsel %vm300, %v1749, 0
      %v1776 = vsel %vm300, %v1750, 0
      %1778 = vmatprep.subr.mxu0 0.0
      %1779 = vmatpush1.msra.mxu0 %v1752
      %1780 = vmatprep.subr.mxu0 0.0
      %1781 = vmatpush1.msra.mxu0 %v1753
      %1782 = vmatprep.subr.mxu0 0.0
      %1783 = vmatpush1.msra.mxu0 0.0
      %1784 = vmatprep.subr.mxu0 0.0
      %1785 = vmatpush1.msra.mxu0 0.0
      %1786 = vmatprep.subr.mxu0 0.0
      %1787 = vmatpush1.msra.mxu0 0.0
      %1788 = vmatprep.subr.mxu0 0.0
      %1789 = vmatpush1.msra.mxu0 0.0
      %1790 = vmatprep.subr.mxu0 0.0
      %1791 = vmatpush1.msra.mxu0 0.0
      %1792 = vmatprep.subr.mxu0 0.0
      %1793 = vmatpush1.msra.mxu0 0.0
      %1794 = vmatprep.subr.mxu0 0.0
      %1795 = vmatpush1.msra.mxu0 0.0
      %1796 = vmatprep.subr.mxu0 0.0
      %1797 = vmatpush1.msra.mxu0 0.0
      %1798 = vmatprep.subr.mxu0 0.0
      %1799 = vmatpush1.msra.mxu0 0.0
      %1800 = vmatprep.subr.mxu0 0.0
      %1801 = vmatpush1.msra.mxu0 0.0
      %1802 = vmatprep.subr.mxu0 0.0
      %1803 = vmatpush1.msra.mxu0 0.0
      %1804 = vmatprep.subr.mxu0 0.0
      %1805 = vmatpush1.msra.mxu0 0.0
      %1806 = vmatprep.subr.mxu0 0.0
      %1807 = vmatpush1.msra.mxu0 0.0
      %1808 = vmatprep.subr.mxu0 0.0
      %1809 = vmatpush1.msra.mxu0 0.0
      %1810 = vmatprep.subr.mxu0 0.0
      %1811 = vmatpush1.msra.mxu0 0.0
      %1812 = vmatprep.subr.mxu0 0.0
      %1813 = vmatpush1.msra.mxu0 0.0
      %1814 = vmatprep.subr.mxu0 0.0
      %1815 = vmatpush1.msra.mxu0 0.0
      %1816 = vmatprep.subr.mxu0 0.0
      %1817 = vmatpush1.msra.mxu0 0.0
      %1818 = vmatprep.subr.mxu0 0.0
      %1819 = vmatpush1.msra.mxu0 0.0
      %1820 = vmatprep.subr.mxu0 0.0
      %1821 = vmatpush1.msra.mxu0 0.0
      %1822 = vmatprep.subr.mxu0 0.0
      %1823 = vmatpush1.msra.mxu0 0.0
      %1824 = vmatprep.subr.mxu0 0.0
      %1825 = vmatpush1.msra.mxu0 0.0
      %1826 = vmatprep.subr.mxu0 0.0
      %1827 = vmatpush1.msra.mxu0 0.0
      %1828 = vmatprep.subr.mxu0 0.0
      %1829 = vmatpush1.msra.mxu0 0.0
      %1830 = vmatprep.subr.mxu0 0.0
      %1831 = vmatpush1.msra.mxu0 0.0
      %1832 = vmatprep.subr.mxu0 0.0
      %1833 = vmatpush1.msra.mxu0 0.0
      %1834 = vmatprep.subr.mxu0 0.0
      %1835 = vmatpush1.msra.mxu0 0.0
      %1836 = vmatprep.subr.mxu0 0.0
      %1837 = vmatpush1.msra.mxu0 0.0
      %1838 = vmatprep.subr.mxu0 0.0
      %1839 = vmatpush1.msra.mxu0 0.0
      %1840 = vmatprep.subr.mxu0 0.0
      %1841 = vmatpush1.msra.mxu0 0.0
      %1842 = vmatprep.mubr.f32.mxu0 0.0
      %1843 = vmatmul.mubr.f32.gmra.mrb[0].mxu0 %v1755
      %v1844 = vpop.f32.mrb[0].mxu0
      %v1845 = vadd.f32 0.0, %v1844
      %v1846 = vpop.f32.mrb[0].mxu0
      %1847 = vmatprep.mubr.f32.mxu0 0.0
      %1848 = vmatmul.mubr.f32.gmra.mrb[0].mxu0 %v1758
      %v1849 = vpop.f32.mrb[0].mxu0
      %v1850 = vadd.f32 0.0, %v1849
      %v1851 = vpop.f32.mrb[0].mxu0
      %1852 = vmatprep.mubr.f32.mxu0 0.0
      %1853 = vmatmul.mubr.f32.gmra.mrb[0].mxu0 %v1761
      %v1854 = vpop.f32.mrb[0].mxu0
      %v1855 = vadd.f32 0.0, %v1854
      %v1856 = vpop.f32.mrb[0].mxu0
      %1857 = vmatprep.mubr.f32.mxu0 0.0
      %1858 = vmatmul.mubr.f32.gmra.mrb[0].mxu0 %v1764
      %v1859 = vpop.f32.mrb[0].mxu0
      %v1860 = vadd.f32 0.0, %v1859
      %v1861 = vpop.f32.mrb[0].mxu0
      %1862 = vmatprep.mubr.f32.mxu0 0.0
      %1863 = vmatmul.mubr.f32.gmra.mrb[0].mxu0 %v1767
      %v1864 = vpop.f32.mrb[0].mxu0
      %v1865 = vadd.f32 0.0, %v1864
      %v1866 = vpop.f32.mrb[0].mxu0
      %1867 = vmatprep.mubr.f32.mxu0 0.0
      %1868 = vmatmul.mubr.f32.gmra.mrb[0].mxu0 %v1770
      %v1869 = vpop.f32.mrb[0].mxu0
      %v1870 = vadd.f32 0.0, %v1869
      %v1871 = vpop.f32.mrb[0].mxu0
      %1872 = vmatprep.mubr.f32.mxu0 0.0
      %1873 = vmatmul.mubr.f32.gmra.mrb[0].mxu0 %v1773
      %v1874 = vpop.f32.mrb[0].mxu0
      %v1875 = vadd.f32 0.0, %v1874
      %v1876 = vpop.f32.mrb[0].mxu0
      %1877 = vmatprep.mubr.f32.mxu0 0.0
      %1878 = vmatmul.mubr.f32.gmra.mrb[0].mxu0 %v1776
      %v1879 = vpop.f32.mrb[0].mxu0
      %v1880 = vadd.f32 0.0, %v1879
      %v1881 = vpop.f32.mrb[0].mxu0
      %1882 = vdwg.mxu0
      %v1883 = vadd.f32 %v1735, %v1845
      %v1884 = vadd.f32 %v1736, %v1850
      %v1885 = vadd.f32 %v1737, %v1855
      %v1886 = vadd.f32 %v1738, %v1860
      %v1887 = vadd.f32 %v1739, %v1865
      %v1888 = vadd.f32 %v1740, %v1870
      %v1889 = vadd.f32 %v1741, %v1875
      %v1890 = vadd.f32 %v1742, %v1880
      %v1891 = vld [vmem:[%s265] sm:$0x1]
      %v1893 = vlaneseq
      %v1894 = vshrl.u32 %v1893, 7
      %v1895 = vsub.s32 0, %v1894
      %v1896 = vrot.slane %v1891, %v1895
      %v1898 = vadd.f32 %v1883, %v1896
      %v1899 = vadd.f32 %v1884, %v1896
      %v1900 = vadd.f32 %v1885, %v1896
      %v1901 = vadd.f32 %v1886, %v1896
      %v1902 = vadd.f32 %v1887, %v1896
      %v1903 = vadd.f32 %v1888, %v1896
      %v1904 = vadd.f32 %v1889, %v1896
      %v1905 = vadd.f32 %v1890, %v1896
      %vm1906 = vcmp.ge.f32.partialorder %v1898, 0.0
      %vm1907 = vcmp.ge.f32.partialorder %v1899, 0.0
      %vm1908 = vcmp.ge.f32.partialorder %v1900, 0.0
      %vm1909 = vcmp.ge.f32.partialorder %v1901, 0.0
      %vm1910 = vcmp.ge.f32.partialorder %v1902, 0.0
      %vm1911 = vcmp.ge.f32.partialorder %v1903, 0.0
      %vm1912 = vcmp.ge.f32.partialorder %v1904, 0.0
      %vm1913 = vcmp.ge.f32.partialorder %v1905, 0.0
      %v1914 = vmul.f32 %v1898, 0.2
      %v1915 = vmul.f32 %v1899, 0.2
      %v1916 = vmul.f32 %v1900, 0.2
      %v1917 = vmul.f32 %v1901, 0.2
      %v1918 = vmul.f32 %v1902, 0.2
      %v1919 = vmul.f32 %v1903, 0.2
      %v1920 = vmul.f32 %v1904, 0.2
      %v1921 = vmul.f32 %v1905, 0.2
      %v1922 = vsel %vm1906, %v1898, %v1914
      %v1923 = vsel %vm1907, %v1899, %v1915
      %v1924 = vsel %vm1908, %v1900, %v1916
      %v1925 = vsel %vm1909, %v1901, %v1917
      %v1926 = vsel %vm1910, %v1902, %v1918
      %v1927 = vsel %vm1911, %v1903, %v1919
      %v1928 = vsel %vm1912, %v1904, %v1920
      %v1929 = vsel %vm1913, %v1905, %v1921
      %1930 = vst [vmem:[%s277] sm:$0xff] %v1922
      %1931 = vst [vmem:[%s277 + $0x8] sm:$0xff] %v1923
      %1932 = vst [vmem:[%s277 + $0x10] sm:$0xff] %v1924
      %1933 = vst [vmem:[%s277 + $0x18] sm:$0xff] %v1925
      %1934 = vst [vmem:[%s277 + $0x20] sm:$0xff] %v1926
      %1935 = vst [vmem:[%s277 + $0x28] sm:$0xff] %v1927
      %1936 = vst [vmem:[%s277 + $0x30] sm:$0xff] %v1928
      %1937 = vst [vmem:[%s277 + $0x38] sm:$0xff] %v1929
      %s1938 = smul.u32 8, %s21
      %p1939 = scmp.lt.s32.totalorder %s19, 0
      %s1940 = scalar_select %p1939, %s19, 0
      %p1941 = scmp.lt.s32.totalorder %s1938, 15
      %s1942 = scalar_select %p1941, %s1938, 15
      %p1943 = scmp.lt.s32.totalorder %s20, 0
      %s1944 = scalar_select %p1943, %s20, 0
      %s1945 = sadd.s32 %s1944, %s1942
      %s1946 = smul.addr %s1940, 16
      %s1947 = sadd.s32 %s1945, %s1946
      %s1948 = smul.addr %s1947, 8
      %s1949 = scalar_lea.vmem %s3, %s1948
      // Predicated region
      $region33: #{forward.7} parent=31 // pred_check
        %p1950 = pneg %p139
      $region34: #{forward.7} parent=31 // pred_check_branch
        %1952 = sbr.rel (%p1950) target = $region36
      $region35: #{forward.7} parent=31 // pred_region
        %s1953 = smul.u32 8, %s21
      $region36: #{forward.7} parent=31 // pred_fallthru
        _
    $region32: #{forward.7} parent=5 // pred_fallthru
      _
    %p1954 = scmp.le.s32.totalorder 2, %s9
    // Predicated region
    $region37: #{forward.7} parent=5 // pred_check
      %p1955 = pneg %p1954
    $region38: #{forward.7} parent=5 // pred_check_branch
      %1957 = sbr.rel (%p1955) target = $region40
    $region39: #{forward.7} parent=5 // pred_region
      %s1958 = ssub.s32 %s9, 2
      // Predicated region
      $region41: #{forward.7} parent=39 // pred_check
        %p1959 = pneg %p145
      $region42: #{forward.7} parent=39 // pred_check_branch
        %1961 = sbr.rel (%p1959) target = $region44
      $region43: #{forward.7} parent=39 // pred_region
        %s1962 = smul.u32 8, %s24
        %p1963 = scmp.lt.s32.totalorder %s22, 0
        %s1964 = scalar_select %p1963, %s22, 0
        %p1965 = scmp.lt.s32.totalorder %s1962, 15
        %s1966 = scalar_select %p1965, %s1962, 15
        %p1967 = scmp.lt.s32.totalorder %s23, 0
        %s1968 = scalar_select %p1967, %s23, 0
        %s1969 = sadd.s32 %s1968, %s1966
        %s1970 = smul.addr %s1964, 16
        %s1971 = sadd.s32 %s1969, %s1970
        %s1972 = smul.addr %s1971, 8
        %s1973 = scalar_lea.vmem %s3, %s1972
      $region44: #{forward.7} parent=39 // pred_fallthru
        _
    $region40: #{forward.7} parent=5 // pred_fallthru
      _
  $region6: #{forward.7} parent=0 // loop_footer
    %s13 = sadd.s32 1, %s9
  $region7: #{forward.7} parent=0 // loop_footer_branch
    %8 = sbr.rel target = $region3
  $region8: #{forward.7} parent=0 // loop_exit
    _

</llo_original>
